<compile_context>
chip_gen: v7x
topology: tpu7x:2x2x1
jax: 0.10.0
libtpu: 0.0.40
codegen_flags: <defaults>
</compile_context>

<pallas_src>
import functools

import jax
import jax.numpy as jnp
from jax.experimental import pallas as pl
from jax.experimental.pallas import tpu as pltpu


def _round_up(x, m):
    return ((x + m - 1) // m) * m


_TIME_CHUNK = 16   # timesteps per recurrence grid step (bounds VMEM residency)


# --------------------------------------------------------------------------
# Pallas kernels
# --------------------------------------------------------------------------
def gru_input_proj_kernel(x_ref, w_ref, b_ref, g_ref):
    """Fused input projection:  g = x @ [W_r | W_z | W_n] + [b_r | b_z | b_n].

    x_ref: (tile_m, D)    rows = flattened (time, batch)
    w_ref: (D, 3*Hp)      gate-fused, lane-padded input weights
    b_ref: (1, 3*Hp)      b_r = b_ih_r+b_hh_r, b_z = b_ih_z+b_hh_z, b_n = b_ih_n
    g_ref: (tile_m, 3*Hp) lane-dense gate pre-activations
    """
    g_ref[...] = (jnp.dot(x_ref[...], w_ref[...],
                          preferred_element_type=jnp.float32) + b_ref[...])


def gru_recurrence_kernel(g_ref, whh_ref, bhn_ref, out_ref, h_ref, *,
                          t_total, tc, unroll):
    """One time-chunk of a NON-final GRU layer.

    g_ref  : (Tc, B, 3*Hp)  precomputed input-side gate pre-activations
    whh_ref: (Hp, 3*Hp)     gate-fused hidden weights
    bhn_ref: (1, Hp)        n-gate hidden bias (must stay inside r * (...))
    out_ref: (Tc, B, Hp)    hidden-state sequence chunk (feeds next layer)
    h_ref  : VMEM (B, Hp)   hidden state carried across grid (chunk) steps
    """
    chunk = pl.program_id(0)

    @pl.when(chunk == 0)
    def _():
        h_ref[...] = jnp.zeros_like(h_ref)

    hp = h_ref.shape[-1]
    whh = whh_ref[...]          # loop-invariant loads hoisted out of the loop
    bhn = bhn_ref[...]

    def step(t, h):
        g = g_ref[t]                                           # (B, 3*Hp)
        gh = jnp.dot(h, whh, preferred_element_type=jnp.float32)
        r = jax.nn.sigmoid(g[:, 0:hp] + gh[:, 0:hp])
        z = jax.nn.sigmoid(g[:, hp:2 * hp] + gh[:, hp:2 * hp])
        n = jnp.tanh(g[:, 2 * hp:] + r * (gh[:, 2 * hp:] + bhn))
        h_new = (1.0 - z) * n + z * h
        if t_total % tc != 0:                                  # static check
            h_new = jnp.where(chunk * tc + t < t_total, h_new, h)
        out_ref[t] = h_new
        return h_new

    h_ref[...] = jax.lax.fori_loop(0, tc, step, h_ref[...], unroll=unroll)


def gru_last_fused_kernel(g_ref, whh_ref, bhn_ref, wfc_ref, bfc_ref, out_ref,
                          h_ref, *, t_total, tc, unroll):
    """Final GRU layer fused with the FC head; only h_T is materialized and
    out = h_T @ W_fc + b_fc is written on the last chunk."""
    chunk = pl.program_id(0)

    @pl.when(chunk == 0)
    def _():
        h_ref[...] = jnp.zeros_like(h_ref)

    hp = h_ref.shape[-1]
    whh = whh_ref[...]
    bhn = bhn_ref[...]

    def step(t, h):
        g = g_ref[t]
        gh = jnp.dot(h, whh, preferred_element_type=jnp.float32)
        r = jax.nn.sigmoid(g[:, 0:hp] + gh[:, 0:hp])
        z = jax.nn.sigmoid(g[:, hp:2 * hp] + gh[:, hp:2 * hp])
        n = jnp.tanh(g[:, 2 * hp:] + r * (gh[:, 2 * hp:] + bhn))
        h_new = (1.0 - z) * n + z * h
        if t_total % tc != 0:
            h_new = jnp.where(chunk * tc + t < t_total, h_new, h)
        return h_new

    h_ref[...] = jax.lax.fori_loop(0, tc, step, h_ref[...], unroll=unroll)

    @pl.when(chunk == pl.num_programs(0) - 1)
    def _():
        out_ref[...] = (jnp.dot(h_ref[...], wfc_ref[...],
                                preferred_element_type=jnp.float32)
                        + bfc_ref[...])


# --------------------------------------------------------------------------
# Wrappers
# --------------------------------------------------------------------------
def gru_input_projection(x_tm, w_fused, b_fused):
    """x_tm: (T, B, D). Returns the fused gate slab (T, B, 3*Hp)."""
    T, B, D = x_tm.shape
    H3 = w_fused.shape[1]
    M = T * B
    x_flat = x_tm.reshape(M, D)

    tile_m = 512 if M >= 512 else M       # M is always a multiple of 8
    M_pad = _round_up(M, tile_m)
    if M_pad != M:
        x_flat = jnp.pad(x_flat, ((0, M_pad - M), (0, 0)))

    g = pl.pallas_call(
        gru_input_proj_kernel,
        out_shape=jax.ShapeDtypeStruct((M_pad, H3), jnp.float32),
        grid=(M_pad // tile_m,),
        in_specs=[
            pl.BlockSpec((tile_m, D), lambda i: (i, 0)),
            pl.BlockSpec((D, H3), lambda i: (0, 0)),
            pl.BlockSpec((1, H3), lambda i: (0, 0)),
        ],
        out_specs=pl.BlockSpec((tile_m, H3), lambda i: (i, 0)),
        compiler_params=pltpu.CompilerParams(
            dimension_semantics=("parallel",)),   # shards over TCs on v7x
    )(x_flat, w_fused, b_fused)
    if M_pad != M:
        g = g[:M]
    return g.reshape(T, B, H3)


def _time_chunks(T):
    tc = min(T, _TIME_CHUNK)
    return tc, _round_up(T, tc)


def gru_recurrence(g, w_hh, b_hh_n):
    """Non-final layer: returns the full (T, B, Hp) hidden-state sequence."""
    T, B, H3 = g.shape
    Hp = H3 // 3
    tc, t_pad = _time_chunks(T)
    if t_pad != T:
        g = jnp.pad(g, ((0, t_pad - T), (0, 0), (0, 0)))
    kernel = functools.partial(gru_recurrence_kernel, t_total=T, tc=tc,
                               unroll=min(tc, 8))
    out = pl.pallas_call(
        kernel,
        out_shape=jax.ShapeDtypeStruct((t_pad, B, Hp), jnp.float32),
        grid=(t_pad // tc,),
        in_specs=[
            pl.BlockSpec((tc, B, H3), lambda c: (c, 0, 0)),
            pl.BlockSpec((Hp, H3), lambda c: (0, 0)),
            pl.BlockSpec((1, Hp), lambda c: (0, 0)),
        ],
        out_specs=pl.BlockSpec((tc, B, Hp), lambda c: (c, 0, 0)),
        scratch_shapes=[pltpu.VMEM((B, Hp), jnp.float32)],
        compiler_params=pltpu.CompilerParams(
            dimension_semantics=("arbitrary",)),   # h carried across chunks
    )(g, w_hh, b_hh_n)
    if t_pad != T:
        out = out[:T]
    return out


def gru_last_fused(g, w_hh, b_hh_n, w_fc, b_fc):
    """Final layer + FC head: returns (B, O)."""
    T, B, H3 = g.shape
    Hp = H3 // 3
    O = w_fc.shape[1]
    tc, t_pad = _time_chunks(T)
    if t_pad != T:
        g = jnp.pad(g, ((0, t_pad - T), (0, 0), (0, 0)))
    kernel = functools.partial(gru_last_fused_kernel, t_total=T, tc=tc,
                               unroll=min(tc, 8))
    return pl.pallas_call(
        kernel,
        out_shape=jax.ShapeDtypeStruct((B, O), jnp.float32),
        grid=(t_pad // tc,),
        in_specs=[
            pl.BlockSpec((tc, B, H3), lambda c: (c, 0, 0)),
            pl.BlockSpec((Hp, H3), lambda c: (0, 0)),
            pl.BlockSpec((1, Hp), lambda c: (0, 0)),
            pl.BlockSpec((Hp, O), lambda c: (0, 0)),
            pl.BlockSpec((1, O), lambda c: (0, 0)),
        ],
        out_specs=pl.BlockSpec((B, O), lambda c: (0, 0)),
        scratch_shapes=[pltpu.VMEM((B, Hp), jnp.float32)],
        compiler_params=pltpu.CompilerParams(
            dimension_semantics=("arbitrary",)),
    )(g, w_hh, b_hh_n, w_fc, b_fc)


# --------------------------------------------------------------------------
# Parameter packing (gate-fuse + lane-pad H -> Hp).  Padded lanes of the
# hidden state stay exactly zero through the recurrence, so this is exact.
# --------------------------------------------------------------------------
def _pad_lanes(a, hp):
    return jnp.pad(a, ((0, 0), (0, hp - a.shape[1])))


def _pack_layer(p, d_in_pad, hp):
    w_ih = jnp.concatenate([_pad_lanes(p["w_ih_r"], hp),
                            _pad_lanes(p["w_ih_z"], hp),
                            _pad_lanes(p["w_ih_n"], hp)], axis=1)
    w_ih = jnp.pad(w_ih, ((0, d_in_pad - w_ih.shape[0]), (0, 0)))
    b = jnp.concatenate([_pad_lanes(p["b_ih_r"] + p["b_hh_r"], hp),
                         _pad_lanes(p["b_ih_z"] + p["b_hh_z"], hp),
                         _pad_lanes(p["b_ih_n"], hp)], axis=1)
    w_hh = jnp.concatenate([_pad_lanes(p["w_hh_r"], hp),
                            _pad_lanes(p["w_hh_z"], hp),
                            _pad_lanes(p["w_hh_n"], hp)], axis=1)
    w_hh = jnp.pad(w_hh, ((0, hp - w_hh.shape[0]), (0, 0)))
    b_hh_n = _pad_lanes(p["b_hh_n"], hp)
    return w_ih, b, w_hh, b_hh_n


@functools.partial(jax.jit, static_argnames=("num_layers",))
def gru_model_forward(x_btd, params, num_layers):
    """x_btd: (B, T, D) batch_first input (matches the PyTorch module)."""
    B, T, D = x_btd.shape
    H = params["gru"][0]["w_hh_r"].shape[0]
    H_pad = _round_up(H, 128)               # full lane width -> unmasked stores
    B_pad = _round_up(B, 8)                 # fill all 8 sublanes of (B, Hp)

    x_tm = jnp.transpose(x_btd, (1, 0, 2))  # time-major (T, B, D)
    if B_pad != B:
        x_tm = jnp.pad(x_tm, ((0, 0), (0, B_pad - B), (0, 0)))

    h_seq = x_tm
    out = None
    for layer in range(num_layers):
        p = params["gru"][layer]
        d_in_pad = D if layer == 0 else H_pad
        w_ih, b_fused, w_hh, b_hh_n = _pack_layer(p, d_in_pad, H, )[:4] \
            if False else _pack_layer(p, d_in_pad, H_pad)
        g = gru_input_projection(h_seq, w_ih, b_fused)
        if layer < num_layers - 1:
            h_seq = gru_recurrence(g, w_hh, b_hh_n)
            # inter-layer GRU dropout: identity in eval mode
        else:
            w_fc = jnp.pad(params["fc"]["w_t"], ((0, H_pad - H), (0, 0)))
            out = gru_last_fused(g, w_hh, b_hh_n, w_fc, params["fc"]["b"])
            # self.dropout(out): identity in eval mode
    return out[:B]


# --------------------------------------------------------------------------
# Deterministic parameter init (gate-split layout; ranges follow nn.GRU/Linear)
# --------------------------------------------------------------------------
def init_params(key, input_dim, hidden_dim, num_layers, output_dim):
    params = {"gru": []}
    k_gru = 1.0 / jnp.sqrt(hidden_dim)

    def u(k, shape):
        return jax.random.uniform(k, shape, jnp.float32, -k_gru, k_gru)

    for layer in range(num_layers):
        d_in = input_dim if layer == 0 else hidden_dim
        keys = jax.random.split(key, 13)
        key = keys[0]
        params["gru"].append({
            "w_ih_r": u(keys[1], (d_in, hidden_dim)),
            "w_ih_z": u(keys[2], (d_in, hidden_dim)),
            "w_ih_n": u(keys[3], (d_in, hidden_dim)),
            "w_hh_r": u(keys[4], (hidden_dim, hidden_dim)),
            "w_hh_z": u(keys[5], (hidden_dim, hidden_dim)),
            "w_hh_n": u(keys[6], (hidden_dim, hidden_dim)),
            "b_ih_r": u(keys[7], (1, hidden_dim)),
            "b_ih_z": u(keys[8], (1, hidden_dim)),
            "b_ih_n": u(keys[9], (1, hidden_dim)),
            "b_hh_r": u(keys[10], (1, hidden_dim)),
            "b_hh_z": u(keys[11], (1, hidden_dim)),
            "b_hh_n": u(keys[12], (1, hidden_dim)),
        })
    key, k1, k2 = jax.random.split(key, 3)
    k_fc = 1.0 / jnp.sqrt(hidden_dim)
    params["fc"] = {
        "w_t": jax.random.uniform(k1, (hidden_dim, output_dim), jnp.float32,
                                  -k_fc, k_fc),
        "b": jax.random.uniform(k2, (1, output_dim), jnp.float32, -k_fc, k_fc),
    }
    return params


# --------------------------------------------------------------------------
# Pure-JAX reference (for a correctness sanity check)
# --------------------------------------------------------------------------
def gru_model_reference(x_btd, params, num_layers):
    h_seq = jnp.transpose(x_btd, (1, 0, 2))  # (T, B, D)
    T, B = h_seq.shape[0], h_seq.shape[1]
    for layer in range(num_layers):
        p = params["gru"][layer]
        H = p["w_hh_r"].shape[0]
        h = jnp.zeros((B, H), jnp.float32)
        outs = []
        for t in range(T):
            x_t = h_seq[t]
            r = jax.nn.sigmoid(x_t @ p["w_ih_r"] + p["b_ih_r"]
                               + h @ p["w_hh_r"] + p["b_hh_r"])
            z = jax.nn.sigmoid(x_t @ p["w_ih_z"] + p["b_ih_z"]
                               + h @ p["w_hh_z"] + p["b_hh_z"])
            n = jnp.tanh(x_t @ p["w_ih_n"] + p["b_ih_n"]
                         + r * (h @ p["w_hh_n"] + p["b_hh_n"]))
            h = (1.0 - z) * n + z * h
            outs.append(h)
        h_seq = jnp.stack(outs, axis=0)
    return h_seq[-1] @ params["fc"]["w_t"] + params["fc"]["b"]


# --------------------------------------------------------------------------
if __name__ == "__main__":
    batch, seq, input_dim = 2, 8, 16
    hidden_dim, num_layers, output_dim = 32, 3, 4

    key = jax.random.PRNGKey(0)
    key, kx = jax.random.split(key)
    x = jax.random.normal(kx, (batch, seq, input_dim), jnp.float32)

    params = init_params(key, input_dim, hidden_dim, num_layers, output_dim)

    y = gru_model_forward(x, params, num_layers)
    y = jax.block_until_ready(y)

    y_ref = gru_model_reference(x, params, num_layers)
    assert y.shape == (batch, output_dim)
    assert jnp.allclose(y, y_ref, rtol=1e-5, atol=1e-5), "mismatch vs reference"

    print("KERNEL_OK")
</pallas_src>

<mosaic_0001>
module attributes {stable_mosaic.version = 11 : i64} {
  func.func @gru_input_proj_kernel(%arg0: i32, %arg1: memref<64x16xf32, #tpu.memory_space<vmem>>, %arg2: memref<16x384xf32, #tpu.memory_space<vmem>>, %arg3: memref<1x384xf32, #tpu.memory_space<vmem>>, %arg4: memref<64x384xf32, #tpu.memory_space<vmem>>) attributes {dimension_semantics = [#tpu.dimension_semantics<parallel>], iteration_bounds = array<i64: 1>, scalar_prefetch = 0 : i64, scratch_operands = 0 : i64, tpu.core_type = #tpu.core_type<tc>, window_params = [{transform_indices = @transform_0, window_bounds = array<i64: 64, 16>}, {pipeline_mode = #tpu.pipeline_mode<synchronous>, transform_indices = @transform_1, window_bounds = array<i64: 16, 384>}, {pipeline_mode = #tpu.pipeline_mode<synchronous>, transform_indices = @transform_2, window_bounds = array<i64: 1, 384>}, {transform_indices = @transform_3, window_bounds = array<i64: 64, 384>}]} {
    %c0 = arith.constant 0 : index
    %c0_0 = arith.constant 0 : index
    %0 = vector.load %arg1[%c0, %c0_0] : memref<64x16xf32, #tpu.memory_space<vmem>>, vector<64x16xf32>
    %c0_1 = arith.constant 0 : index
    %c0_2 = arith.constant 0 : index
    %1 = vector.load %arg2[%c0_1, %c0_2] : memref<16x384xf32, #tpu.memory_space<vmem>>, vector<16x384xf32>
    %cst = arith.constant dense<0.000000e+00> : vector<64x384xf32>
    %2 = tpu.matmul %0, %1, %cst {dimension_numbers = #tpu.dot_dimension_numbers<[1], [0], [0], [1], [0, 0, 1, 1], [], []>} : vector<64x16xf32>, vector<16x384xf32>, vector<64x384xf32> -> vector<64x384xf32>
    %c0_3 = arith.constant 0 : index
    %c0_4 = arith.constant 0 : index
    %3 = vector.load %arg3[%c0_3, %c0_4] : memref<1x384xf32, #tpu.memory_space<vmem>>, vector<1x384xf32>
    %4 = vector.broadcast %3 : vector<1x384xf32> to vector<64x384xf32>
    %5 = arith.addf %2, %4 : vector<64x384xf32>
    %c0_5 = arith.constant 0 : index
    %c0_6 = arith.constant 0 : index
    %6 = vector.load %arg4[%c0_5, %c0_6] : memref<64x384xf32, #tpu.memory_space<vmem>>, vector<64x384xf32>
    tpu.vector_store %arg4[%c0_5, %c0_6], %5 {strides = array<i32>} : memref<64x384xf32, #tpu.memory_space<vmem>>, vector<64x384xf32>,
    return
  }
  func.func @transform_0(%arg0: i32) -> (i32, i32) {
    %c0_i32 = arith.constant 0 : i32
    %c0_i32_0 = arith.constant 0 : i32
    return %arg0, %c0_i32 : i32, i32
  }
  func.func @transform_1(%arg0: i32) -> (i32, i32) {
    %c0_i32 = arith.constant 0 : i32
    %c0_i32_0 = arith.constant 0 : i32
    %c0_i32_1 = arith.constant 0 : i32
    return %c0_i32, %c0_i32_0 : i32, i32
  }
  func.func @transform_2(%arg0: i32) -> (i32, i32) {
    %c0_i32 = arith.constant 0 : i32
    %c0_i32_0 = arith.constant 0 : i32
    %c0_i32_1 = arith.constant 0 : i32
    return %c0_i32, %c0_i32_0 : i32, i32
  }
  func.func @transform_3(%arg0: i32) -> (i32, i32) {
    %c0_i32 = arith.constant 0 : i32
    %c0_i32_0 = arith.constant 0 : i32
    return %arg0, %c0_i32 : i32, i32
  }
}

module attributes {stable_mosaic.version = 11 : i64} {
  func.func @gru_input_proj_kernel(%arg0: i32, %arg1: memref<64x128xf32, #tpu.memory_space<vmem>>, %arg2: memref<128x384xf32, #tpu.memory_space<vmem>>, %arg3: memref<1x384xf32, #tpu.memory_space<vmem>>, %arg4: memref<64x384xf32, #tpu.memory_space<vmem>>) attributes {dimension_semantics = [#tpu.dimension_semantics<parallel>], iteration_bounds = array<i64: 1>, scalar_prefetch = 0 : i64, scratch_operands = 0 : i64, tpu.core_type = #tpu.core_type<tc>, window_params = [{transform_indices = @transform_0, window_bounds = array<i64: 64, 128>}, {pipeline_mode = #tpu.pipeline_mode<synchronous>, transform_indices = @transform_1, window_bounds = array<i64: 128, 384>}, {pipeline_mode = #tpu.pipeline_mode<synchronous>, transform_indices = @transform_2, window_bounds = array<i64: 1, 384>}, {transform_indices = @transform_3, window_bounds = array<i64: 64, 384>}]} {
    %c0 = arith.constant 0 : index
    %c0_0 = arith.constant 0 : index
    %0 = vector.load %arg1[%c0, %c0_0] : memref<64x128xf32, #tpu.memory_space<vmem>>, vector<64x128xf32>
    %c0_1 = arith.constant 0 : index
    %c0_2 = arith.constant 0 : index
    %1 = vector.load %arg2[%c0_1, %c0_2] : memref<128x384xf32, #tpu.memory_space<vmem>>, vector<128x384xf32>
    %cst = arith.constant dense<0.000000e+00> : vector<64x384xf32>
    %2 = tpu.matmul %0, %1, %cst {dimension_numbers = #tpu.dot_dimension_numbers<[1], [0], [0], [1], [0, 0, 1, 1], [], []>} : vector<64x128xf32>, vector<128x384xf32>, vector<64x384xf32> -> vector<64x384xf32>
    %c0_3 = arith.constant 0 : index
    %c0_4 = arith.constant 0 : index
    %3 = vector.load %arg3[%c0_3, %c0_4] : memref<1x384xf32, #tpu.memory_space<vmem>>, vector<1x384xf32>
    %4 = vector.broadcast %3 : vector<1x384xf32> to vector<64x384xf32>
    %5 = arith.addf %2, %4 : vector<64x384xf32>
    %c0_5 = arith.constant 0 : index
    %c0_6 = arith.constant 0 : index
    %6 = vector.load %arg4[%c0_5, %c0_6] : memref<64x384xf32, #tpu.memory_space<vmem>>, vector<64x384xf32>
    tpu.vector_store %arg4[%c0_5, %c0_6], %5 {strides = array<i32>} : memref<64x384xf32, #tpu.memory_space<vmem>>, vector<64x384xf32>,
    return
  }
  func.func @transform_0(%arg0: i32) -> (i32, i32) {
    %c0_i32 = arith.constant 0 : i32
    %c0_i32_0 = arith.constant 0 : i32
    return %arg0, %c0_i32 : i32, i32
  }
  func.func @transform_1(%arg0: i32) -> (i32, i32) {
    %c0_i32 = arith.constant 0 : i32
    %c0_i32_0 = arith.constant 0 : i32
    %c0_i32_1 = arith.constant 0 : i32
    return %c0_i32, %c0_i32_0 : i32, i32
  }
  func.func @transform_2(%arg0: i32) -> (i32, i32) {
    %c0_i32 = arith.constant 0 : i32
    %c0_i32_0 = arith.constant 0 : i32
    %c0_i32_1 = arith.constant 0 : i32
    return %c0_i32, %c0_i32_0 : i32, i32
  }
  func.func @transform_3(%arg0: i32) -> (i32, i32) {
    %c0_i32 = arith.constant 0 : i32
    %c0_i32_0 = arith.constant 0 : i32
    return %arg0, %c0_i32 : i32, i32
  }
}

module attributes {stable_mosaic.version = 11 : i64} {
  func.func @gru_recurrence_kernel(%arg0: i32, %arg1: memref<8x8x384xf32, #tpu.memory_space<vmem>>, %arg2: memref<128x384xf32, #tpu.memory_space<vmem>>, %arg3: memref<1x128xf32, #tpu.memory_space<vmem>>, %arg4: memref<8x8x128xf32, #tpu.memory_space<vmem>>, %arg5: memref<8x128xf32, #tpu.memory_space<vmem>>) attributes {dimension_semantics = [#tpu.dimension_semantics<arbitrary>], iteration_bounds = array<i64: 1>, scalar_prefetch = 0 : i64, scratch_operands = 1 : i64, tpu.core_type = #tpu.core_type<tc>, window_params = [{transform_indices = @transform_0, window_bounds = array<i64: 8, 8, 384>}, {pipeline_mode = #tpu.pipeline_mode<synchronous>, transform_indices = @transform_1, window_bounds = array<i64: 128, 384>}, {pipeline_mode = #tpu.pipeline_mode<synchronous>, transform_indices = @transform_2, window_bounds = array<i64: 1, 128>}, {transform_indices = @transform_3, window_bounds = array<i64: 8, 8, 128>}]} {
    %c0_i32 = arith.constant 0 : i32
    %0 = arith.cmpi eq, %arg0, %c0_i32 : i32
    %1 = arith.extui %0 : i1 to i32
    %c0_i32_0 = arith.constant 0 : i32
    %2 = arith.cmpi ne, %1, %c0_i32_0 : i32
    scf.if %2 {
      %cst_72 = arith.constant 0.000000e+00 : f32
      %295 = vector.broadcast %cst_72 : f32 to vector<8x128xf32>
      %c0_73 = arith.constant 0 : index
      %c0_74 = arith.constant 0 : index
      %296 = vector.load %arg5[%c0_73, %c0_74] : memref<8x128xf32, #tpu.memory_space<vmem>>, vector<8x128xf32>
      tpu.vector_store %arg5[%c0_73, %c0_74], %295 {strides = array<i32>} : memref<8x128xf32, #tpu.memory_space<vmem>>, vector<8x128xf32>,
    } else {
    }
    %c0 = arith.constant 0 : index
    %c0_1 = arith.constant 0 : index
    %3 = vector.load %arg2[%c0, %c0_1] : memref<128x384xf32, #tpu.memory_space<vmem>>, vector<128x384xf32>
    %c0_2 = arith.constant 0 : index
    %c0_3 = arith.constant 0 : index
    %4 = vector.load %arg3[%c0_2, %c0_3] : memref<1x128xf32, #tpu.memory_space<vmem>>, vector<1x128xf32>
    %c0_4 = arith.constant 0 : index
    %c0_5 = arith.constant 0 : index
    %5 = vector.load %arg5[%c0_4, %c0_5] : memref<8x128xf32, #tpu.memory_space<vmem>>, vector<8x128xf32>
    %c0_i32_6 = arith.constant 0 : i32
    %6 = arith.index_cast %c0_i32_6 : i32 to index
    %c0_7 = arith.constant 0 : index
    %c0_8 = arith.constant 0 : index
    %7 = vector.load %arg1[%6, %c0_7, %c0_8] : memref<8x8x384xf32, #tpu.memory_space<vmem>>, vector<1x8x384xf32>
    %8 = vector.shape_cast %7 : vector<1x8x384xf32> to vector<8x384xf32>
    %cst = arith.constant dense<0.000000e+00> : vector<8x384xf32>
    %9 = tpu.matmul %5, %3, %cst {dimension_numbers = #tpu.dot_dimension_numbers<[1], [0], [0], [1], [0, 0, 1, 1], [], []>} : vector<8x128xf32>, vector<128x384xf32>, vector<8x384xf32> -> vector<8x384xf32>
    %10 = vector.extract_strided_slice %8 {offsets = [0, 0], sizes = [8, 128], strides = [1, 1]} : vector<8x384xf32> to vector<8x128xf32>
    %11 = vector.extract_strided_slice %9 {offsets = [0, 0], sizes = [8, 128], strides = [1, 1]} : vector<8x384xf32> to vector<8x128xf32>
    %12 = arith.addf %10, %11 : vector<8x128xf32>
    %13 = arith.negf %12 : vector<8x128xf32>
    %14 = math.exp %13 : vector<8x128xf32>
    %cst_9 = arith.constant 1.000000e+00 : f32
    %15 = vector.broadcast %cst_9 : f32 to vector<8x128xf32>
    %16 = arith.addf %15, %14 : vector<8x128xf32>
    %17 = arith.divf %15, %16 : vector<8x128xf32>
    %18 = vector.extract_strided_slice %8 {offsets = [0, 128], sizes = [8, 128], strides = [1, 1]} : vector<8x384xf32> to vector<8x128xf32>
    %19 = vector.extract_strided_slice %9 {offsets = [0, 128], sizes = [8, 128], strides = [1, 1]} : vector<8x384xf32> to vector<8x128xf32>
    %20 = arith.addf %18, %19 : vector<8x128xf32>
    %21 = arith.negf %20 : vector<8x128xf32>
    %22 = math.exp %21 : vector<8x128xf32>
    %cst_10 = arith.constant 1.000000e+00 : f32
    %23 = vector.broadcast %cst_10 : f32 to vector<8x128xf32>
    %24 = arith.addf %23, %22 : vector<8x128xf32>
    %25 = arith.divf %23, %24 : vector<8x128xf32>
    %26 = vector.extract_strided_slice %8 {offsets = [0, 256], sizes = [8, 128], strides = [1, 1]} : vector<8x384xf32> to vector<8x128xf32>
    %27 = vector.extract_strided_slice %9 {offsets = [0, 256], sizes = [8, 128], strides = [1, 1]} : vector<8x384xf32> to vector<8x128xf32>
    %28 = vector.broadcast %4 : vector<1x128xf32> to vector<8x128xf32>
    %29 = arith.addf %27, %28 : vector<8x128xf32>
    %30 = arith.mulf %17, %29 : vector<8x128xf32>
    %31 = arith.addf %26, %30 : vector<8x128xf32>
    %32 = math.tanh %31 : vector<8x128xf32>
    %cst_11 = arith.constant 1.000000e+00 : f32
    %33 = vector.broadcast %cst_11 : f32 to vector<8x128xf32>
    %34 = arith.subf %33, %25 : vector<8x128xf32>
    %35 = arith.mulf %34, %32 : vector<8x128xf32>
    %36 = arith.mulf %25, %5 : vector<8x128xf32>
    %37 = arith.addf %35, %36 : vector<8x128xf32>
    %38 = arith.index_cast %c0_i32_6 : i32 to index
    %c0_12 = arith.constant 0 : index
    %c0_13 = arith.constant 0 : index
    %39 = vector.load %arg4[%38, %c0_12, %c0_13] : memref<8x8x128xf32, #tpu.memory_space<vmem>>, vector<1x8x128xf32>
    %40 = vector.shape_cast %39 : vector<1x8x128xf32> to vector<8x128xf32>
    %41 = vector.shape_cast %37 : vector<8x128xf32> to vector<1x8x128xf32>
    tpu.vector_store %arg4[%38, %c0_12, %c0_13], %41 {strides = array<i32>} : memref<8x8x128xf32, #tpu.memory_space<vmem>>, vector<1x8x128xf32>,
    %c1_i32 = arith.constant 1 : i32
    %42 = arith.index_cast %c1_i32 : i32 to index
    %c0_14 = arith.constant 0 : index
    %c0_15 = arith.constant 0 : index
    %43 = vector.load %arg1[%42, %c0_14, %c0_15] : memref<8x8x384xf32, #tpu.memory_space<vmem>>, vector<1x8x384xf32>
    %44 = vector.shape_cast %43 : vector<1x8x384xf32> to vector<8x384xf32>
    %cst_16 = arith.constant dense<0.000000e+00> : vector<8x384xf32>
    %45 = tpu.matmul %37, %3, %cst_16 {dimension_numbers = #tpu.dot_dimension_numbers<[1], [0], [0], [1], [0, 0, 1, 1], [], []>} : vector<8x128xf32>, vector<128x384xf32>, vector<8x384xf32> -> vector<8x384xf32>
    %46 = vector.extract_strided_slice %44 {offsets = [0, 0], sizes = [8, 128], strides = [1, 1]} : vector<8x384xf32> to vector<8x128xf32>
    %47 = vector.extract_strided_slice %45 {offsets = [0, 0], sizes = [8, 128], strides = [1, 1]} : vector<8x384xf32> to vector<8x128xf32>
    %48 = arith.addf %46, %47 : vector<8x128xf32>
    %49 = arith.negf %48 : vector<8x128xf32>
    %50 = math.exp %49 : vector<8x128xf32>
    %cst_17 = arith.constant 1.000000e+00 : f32
    %51 = vector.broadcast %cst_17 : f32 to vector<8x128xf32>
    %52 = arith.addf %51, %50 : vector<8x128xf32>
    %53 = arith.divf %51, %52 : vector<8x128xf32>
    %54 = vector.extract_strided_slice %44 {offsets = [0, 128], sizes = [8, 128], strides = [1, 1]} : vector<8x384xf32> to vector<8x128xf32>
    %55 = vector.extract_strided_slice %45 {offsets = [0, 128], sizes = [8, 128], strides = [1, 1]} : vector<8x384xf32> to vector<8x128xf32>
    %56 = arith.addf %54, %55 : vector<8x128xf32>
    %57 = arith.negf %56 : vector<8x128xf32>
    %58 = math.exp %57 : vector<8x128xf32>
    %cst_18 = arith.constant 1.000000e+00 : f32
    %59 = vector.broadcast %cst_18 : f32 to vector<8x128xf32>
    %60 = arith.addf %59, %58 : vector<8x128xf32>
    %61 = arith.divf %59, %60 : vector<8x128xf32>
    %62 = vector.extract_strided_slice %44 {offsets = [0, 256], sizes = [8, 128], strides = [1, 1]} : vector<8x384xf32> to vector<8x128xf32>
    %63 = vector.extract_strided_slice %45 {offsets = [0, 256], sizes = [8, 128], strides = [1, 1]} : vector<8x384xf32> to vector<8x128xf32>
    %64 = vector.broadcast %4 : vector<1x128xf32> to vector<8x128xf32>
    %65 = arith.addf %63, %64 : vector<8x128xf32>
    %66 = arith.mulf %53, %65 : vector<8x128xf32>
    %67 = arith.addf %62, %66 : vector<8x128xf32>
    %68 = math.tanh %67 : vector<8x128xf32>
    %cst_19 = arith.constant 1.000000e+00 : f32
    %69 = vector.broadcast %cst_19 : f32 to vector<8x128xf32>
    %70 = arith.subf %69, %61 : vector<8x128xf32>
    %71 = arith.mulf %70, %68 : vector<8x128xf32>
    %72 = arith.mulf %61, %37 : vector<8x128xf32>
    %73 = arith.addf %71, %72 : vector<8x128xf32>
    %74 = arith.index_cast %c1_i32 : i32 to index
    %c0_20 = arith.constant 0 : index
    %c0_21 = arith.constant 0 : index
    %75 = vector.load %arg4[%74, %c0_20, %c0_21] : memref<8x8x128xf32, #tpu.memory_space<vmem>>, vector<1x8x128xf32>
    %76 = vector.shape_cast %75 : vector<1x8x128xf32> to vector<8x128xf32>
    %77 = vector.shape_cast %73 : vector<8x128xf32> to vector<1x8x128xf32>
    tpu.vector_store %arg4[%74, %c0_20, %c0_21], %77 {strides = array<i32>} : memref<8x8x128xf32, #tpu.memory_space<vmem>>, vector<1x8x128xf32>,
    %c2_i32 = arith.constant 2 : i32
    %78 = arith.index_cast %c2_i32 : i32 to index
    %c0_22 = arith.constant 0 : index
    %c0_23 = arith.constant 0 : index
    %79 = vector.load %arg1[%78, %c0_22, %c0_23] : memref<8x8x384xf32, #tpu.memory_space<vmem>>, vector<1x8x384xf32>
    %80 = vector.shape_cast %79 : vector<1x8x384xf32> to vector<8x384xf32>
    %cst_24 = arith.constant dense<0.000000e+00> : vector<8x384xf32>
    %81 = tpu.matmul %73, %3, %cst_24 {dimension_numbers = #tpu.dot_dimension_numbers<[1], [0], [0], [1], [0, 0, 1, 1], [], []>} : vector<8x128xf32>, vector<128x384xf32>, vector<8x384xf32> -> vector<8x384xf32>
    %82 = vector.extract_strided_slice %80 {offsets = [0, 0], sizes = [8, 128], strides = [1, 1]} : vector<8x384xf32> to vector<8x128xf32>
    %83 = vector.extract_strided_slice %81 {offsets = [0, 0], sizes = [8, 128], strides = [1, 1]} : vector<8x384xf32> to vector<8x128xf32>
    %84 = arith.addf %82, %83 : vector<8x128xf32>
    %85 = arith.negf %84 : vector<8x128xf32>
    %86 = math.exp %85 : vector<8x128xf32>
    %cst_25 = arith.constant 1.000000e+00 : f32
    %87 = vector.broadcast %cst_25 : f32 to vector<8x128xf32>
    %88 = arith.addf %87, %86 : vector<8x128xf32>
    %89 = arith.divf %87, %88 : vector<8x128xf32>
    %90 = vector.extract_strided_slice %80 {offsets = [0, 128], sizes = [8, 128], strides = [1, 1]} : vector<8x384xf32> to vector<8x128xf32>
    %91 = vector.extract_strided_slice %81 {offsets = [0, 128], sizes = [8, 128], strides = [1, 1]} : vector<8x384xf32> to vector<8x128xf32>
    %92 = arith.addf %90, %91 : vector<8x128xf32>
    %93 = arith.negf %92 : vector<8x128xf32>
    %94 = math.exp %93 : vector<8x128xf32>
    %cst_26 = arith.constant 1.000000e+00 : f32
    %95 = vector.broadcast %cst_26 : f32 to vector<8x128xf32>
    %96 = arith.addf %95, %94 : vector<8x128xf32>
    %97 = arith.divf %95, %96 : vector<8x128xf32>
    %98 = vector.extract_strided_slice %80 {offsets = [0, 256], sizes = [8, 128], strides = [1, 1]} : vector<8x384xf32> to vector<8x128xf32>
    %99 = vector.extract_strided_slice %81 {offsets = [0, 256], sizes = [8, 128], strides = [1, 1]} : vector<8x384xf32> to vector<8x128xf32>
    %100 = vector.broadcast %4 : vector<1x128xf32> to vector<8x128xf32>
    %101 = arith.addf %99, %100 : vector<8x128xf32>
    %102 = arith.mulf %89, %101 : vector<8x128xf32>
    %103 = arith.addf %98, %102 : vector<8x128xf32>
    %104 = math.tanh %103 : vector<8x128xf32>
    %cst_27 = arith.constant 1.000000e+00 : f32
    %105 = vector.broadcast %cst_27 : f32 to vector<8x128xf32>
    %106 = arith.subf %105, %97 : vector<8x128xf32>
    %107 = arith.mulf %106, %104 : vector<8x128xf32>
    %108 = arith.mulf %97, %73 : vector<8x128xf32>
    %109 = arith.addf %107, %108 : vector<8x128xf32>
    %110 = arith.index_cast %c2_i32 : i32 to index
    %c0_28 = arith.constant 0 : index
    %c0_29 = arith.constant 0 : index
    %111 = vector.load %arg4[%110, %c0_28, %c0_29] : memref<8x8x128xf32, #tpu.memory_space<vmem>>, vector<1x8x128xf32>
    %112 = vector.shape_cast %111 : vector<1x8x128xf32> to vector<8x128xf32>
    %113 = vector.shape_cast %109 : vector<8x128xf32> to vector<1x8x128xf32>
    tpu.vector_store %arg4[%110, %c0_28, %c0_29], %113 {strides = array<i32>} : memref<8x8x128xf32, #tpu.memory_space<vmem>>, vector<1x8x128xf32>,
    %c3_i32 = arith.constant 3 : i32
    %114 = arith.index_cast %c3_i32 : i32 to index
    %c0_30 = arith.constant 0 : index
    %c0_31 = arith.constant 0 : index
    %115 = vector.load %arg1[%114, %c0_30, %c0_31] : memref<8x8x384xf32, #tpu.memory_space<vmem>>, vector<1x8x384xf32>
    %116 = vector.shape_cast %115 : vector<1x8x384xf32> to vector<8x384xf32>
    %cst_32 = arith.constant dense<0.000000e+00> : vector<8x384xf32>
    %117 = tpu.matmul %109, %3, %cst_32 {dimension_numbers = #tpu.dot_dimension_numbers<[1], [0], [0], [1], [0, 0, 1, 1], [], []>} : vector<8x128xf32>, vector<128x384xf32>, vector<8x384xf32> -> vector<8x384xf32>
    %118 = vector.extract_strided_slice %116 {offsets = [0, 0], sizes = [8, 128], strides = [1, 1]} : vector<8x384xf32> to vector<8x128xf32>
    %119 = vector.extract_strided_slice %117 {offsets = [0, 0], sizes = [8, 128], strides = [1, 1]} : vector<8x384xf32> to vector<8x128xf32>
    %120 = arith.addf %118, %119 : vector<8x128xf32>
    %121 = arith.negf %120 : vector<8x128xf32>
    %122 = math.exp %121 : vector<8x128xf32>
    %cst_33 = arith.constant 1.000000e+00 : f32
    %123 = vector.broadcast %cst_33 : f32 to vector<8x128xf32>
    %124 = arith.addf %123, %122 : vector<8x128xf32>
    %125 = arith.divf %123, %124 : vector<8x128xf32>
    %126 = vector.extract_strided_slice %116 {offsets = [0, 128], sizes = [8, 128], strides = [1, 1]} : vector<8x384xf32> to vector<8x128xf32>
    %127 = vector.extract_strided_slice %117 {offsets = [0, 128], sizes = [8, 128], strides = [1, 1]} : vector<8x384xf32> to vector<8x128xf32>
    %128 = arith.addf %126, %127 : vector<8x128xf32>
    %129 = arith.negf %128 : vector<8x128xf32>
    %130 = math.exp %129 : vector<8x128xf32>
    %cst_34 = arith.constant 1.000000e+00 : f32
    %131 = vector.broadcast %cst_34 : f32 to vector<8x128xf32>
    %132 = arith.addf %131, %130 : vector<8x128xf32>
    %133 = arith.divf %131, %132 : vector<8x128xf32>
    %134 = vector.extract_strided_slice %116 {offsets = [0, 256], sizes = [8, 128], strides = [1, 1]} : vector<8x384xf32> to vector<8x128xf32>
    %135 = vector.extract_strided_slice %117 {offsets = [0, 256], sizes = [8, 128], strides = [1, 1]} : vector<8x384xf32> to vector<8x128xf32>
    %136 = vector.broadcast %4 : vector<1x128xf32> to vector<8x128xf32>
    %137 = arith.addf %135, %136 : vector<8x128xf32>
    %138 = arith.mulf %125, %137 : vector<8x128xf32>
    %139 = arith.addf %134, %138 : vector<8x128xf32>
    %140 = math.tanh %139 : vector<8x128xf32>
    %cst_35 = arith.constant 1.000000e+00 : f32
    %141 = vector.broadcast %cst_35 : f32 to vector<8x128xf32>
    %142 = arith.subf %141, %133 : vector<8x128xf32>
    %143 = arith.mulf %142, %140 : vector<8x128xf32>
    %144 = arith.mulf %133, %109 : vector<8x128xf32>
    %145 = arith.addf %143, %144 : vector<8x128xf32>
    %146 = arith.index_cast %c3_i32 : i32 to index
    %c0_36 = arith.constant 0 : index
    %c0_37 = arith.constant 0 : index
    %147 = vector.load %arg4[%146, %c0_36, %c0_37] : memref<8x8x128xf32, #tpu.memory_space<vmem>>, vector<1x8x128xf32>
    %148 = vector.shape_cast %147 : vector<1x8x128xf32> to vector<8x128xf32>
    %149 = vector.shape_cast %145 : vector<8x128xf32> to vector<1x8x128xf32>
    tpu.vector_store %arg4[%146, %c0_36, %c0_37], %149 {strides = array<i32>} : memref<8x8x128xf32, #tpu.memory_space<vmem>>, vector<1x8x128xf32>,
    %c4_i32 = arith.constant 4 : i32
    %150 = arith.index_cast %c4_i32 : i32 to index
    %c0_38 = arith.constant 0 : index
    %c0_39 = arith.constant 0 : index
    %151 = vector.load %arg1[%150, %c0_38, %c0_39] : memref<8x8x384xf32, #tpu.memory_space<vmem>>, vector<1x8x384xf32>
    %152 = vector.shape_cast %151 : vector<1x8x384xf32> to vector<8x384xf32>
    %cst_40 = arith.constant dense<0.000000e+00> : vector<8x384xf32>
    %153 = tpu.matmul %145, %3, %cst_40 {dimension_numbers = #tpu.dot_dimension_numbers<[1], [0], [0], [1], [0, 0, 1, 1], [], []>} : vector<8x128xf32>, vector<128x384xf32>, vector<8x384xf32> -> vector<8x384xf32>
    %154 = vector.extract_strided_slice %152 {offsets = [0, 0], sizes = [8, 128], strides = [1, 1]} : vector<8x384xf32> to vector<8x128xf32>
    %155 = vector.extract_strided_slice %153 {offsets = [0, 0], sizes = [8, 128], strides = [1, 1]} : vector<8x384xf32> to vector<8x128xf32>
    %156 = arith.addf %154, %155 : vector<8x128xf32>
    %157 = arith.negf %156 : vector<8x128xf32>
    %158 = math.exp %157 : vector<8x128xf32>
    %cst_41 = arith.constant 1.000000e+00 : f32
    %159 = vector.broadcast %cst_41 : f32 to vector<8x128xf32>
    %160 = arith.addf %159, %158 : vector<8x128xf32>
    %161 = arith.divf %159, %160 : vector<8x128xf32>
    %162 = vector.extract_strided_slice %152 {offsets = [0, 128], sizes = [8, 128], strides = [1, 1]} : vector<8x384xf32> to vector<8x128xf32>
    %163 = vector.extract_strided_slice %153 {offsets = [0, 128], sizes = [8, 128], strides = [1, 1]} : vector<8x384xf32> to vector<8x128xf32>
    %164 = arith.addf %162, %163 : vector<8x128xf32>
    %165 = arith.negf %164 : vector<8x128xf32>
    %166 = math.exp %165 : vector<8x128xf32>
    %cst_42 = arith.constant 1.000000e+00 : f32
    %167 = vector.broadcast %cst_42 : f32 to vector<8x128xf32>
    %168 = arith.addf %167, %166 : vector<8x128xf32>
    %169 = arith.divf %167, %168 : vector<8x128xf32>
    %170 = vector.extract_strided_slice %152 {offsets = [0, 256], sizes = [8, 128], strides = [1, 1]} : vector<8x384xf32> to vector<8x128xf32>
    %171 = vector.extract_strided_slice %153 {offsets = [0, 256], sizes = [8, 128], strides = [1, 1]} : vector<8x384xf32> to vector<8x128xf32>
    %172 = vector.broadcast %4 : vector<1x128xf32> to vector<8x128xf32>
    %173 = arith.addf %171, %172 : vector<8x128xf32>
    %174 = arith.mulf %161, %173 : vector<8x128xf32>
    %175 = arith.addf %170, %174 : vector<8x128xf32>
    %176 = math.tanh %175 : vector<8x128xf32>
    %cst_43 = arith.constant 1.000000e+00 : f32
    %177 = vector.broadcast %cst_43 : f32 to vector<8x128xf32>
    %178 = arith.subf %177, %169 : vector<8x128xf32>
    %179 = arith.mulf %178, %176 : vector<8x128xf32>
    %180 = arith.mulf %169, %145 : vector<8x128xf32>
    %181 = arith.addf %179, %180 : vector<8x128xf32>
    %182 = arith.index_cast %c4_i32 : i32 to index
    %c0_44 = arith.constant 0 : index
    %c0_45 = arith.constant 0 : index
    %183 = vector.load %arg4[%182, %c0_44, %c0_45] : memref<8x8x128xf32, #tpu.memory_space<vmem>>, vector<1x8x128xf32>
    %184 = vector.shape_cast %183 : vector<1x8x128xf32> to vector<8x128xf32>
    %185 = vector.shape_cast %181 : vector<8x128xf32> to vector<1x8x128xf32>
    tpu.vector_store %arg4[%182, %c0_44, %c0_45], %185 {strides = array<i32>} : memref<8x8x128xf32, #tpu.memory_space<vmem>>, vector<1x8x128xf32>,
    %c5_i32 = arith.constant 5 : i32
    %186 = arith.index_cast %c5_i32 : i32 to index
    %c0_46 = arith.constant 0 : index
    %c0_47 = arith.constant 0 : index
    %187 = vector.load %arg1[%186, %c0_46, %c0_47] : memref<8x8x384xf32, #tpu.memory_space<vmem>>, vector<1x8x384xf32>
    %188 = vector.shape_cast %187 : vector<1x8x384xf32> to vector<8x384xf32>
    %cst_48 = arith.constant dense<0.000000e+00> : vector<8x384xf32>
    %189 = tpu.matmul %181, %3, %cst_48 {dimension_numbers = #tpu.dot_dimension_numbers<[1], [0], [0], [1], [0, 0, 1, 1], [], []>} : vector<8x128xf32>, vector<128x384xf32>, vector<8x384xf32> -> vector<8x384xf32>
    %190 = vector.extract_strided_slice %188 {offsets = [0, 0], sizes = [8, 128], strides = [1, 1]} : vector<8x384xf32> to vector<8x128xf32>
    %191 = vector.extract_strided_slice %189 {offsets = [0, 0], sizes = [8, 128], strides = [1, 1]} : vector<8x384xf32> to vector<8x128xf32>
    %192 = arith.addf %190, %191 : vector<8x128xf32>
    %193 = arith.negf %192 : vector<8x128xf32>
    %194 = math.exp %193 : vector<8x128xf32>
    %cst_49 = arith.constant 1.000000e+00 : f32
    %195 = vector.broadcast %cst_49 : f32 to vector<8x128xf32>
    %196 = arith.addf %195, %194 : vector<8x128xf32>
    %197 = arith.divf %195, %196 : vector<8x128xf32>
    %198 = vector.extract_strided_slice %188 {offsets = [0, 128], sizes = [8, 128], strides = [1, 1]} : vector<8x384xf32> to vector<8x128xf32>
    %199 = vector.extract_strided_slice %189 {offsets = [0, 128], sizes = [8, 128], strides = [1, 1]} : vector<8x384xf32> to vector<8x128xf32>
    %200 = arith.addf %198, %199 : vector<8x128xf32>
    %201 = arith.negf %200 : vector<8x128xf32>
    %202 = math.exp %201 : vector<8x128xf32>
    %cst_50 = arith.constant 1.000000e+00 : f32
    %203 = vector.broadcast %cst_50 : f32 to vector<8x128xf32>
    %204 = arith.addf %203, %202 : vector<8x128xf32>
    %205 = arith.divf %203, %204 : vector<8x128xf32>
    %206 = vector.extract_strided_slice %188 {offsets = [0, 256], sizes = [8, 128], strides = [1, 1]} : vector<8x384xf32> to vector<8x128xf32>
    %207 = vector.extract_strided_slice %189 {offsets = [0, 256], sizes = [8, 128], strides = [1, 1]} : vector<8x384xf32> to vector<8x128xf32>
    %208 = vector.broadcast %4 : vector<1x128xf32> to vector<8x128xf32>
    %209 = arith.addf %207, %208 : vector<8x128xf32>
    %210 = arith.mulf %197, %209 : vector<8x128xf32>
    %211 = arith.addf %206, %210 : vector<8x128xf32>
    %212 = math.tanh %211 : vector<8x128xf32>
    %cst_51 = arith.constant 1.000000e+00 : f32
    %213 = vector.broadcast %cst_51 : f32 to vector<8x128xf32>
    %214 = arith.subf %213, %205 : vector<8x128xf32>
    %215 = arith.mulf %214, %212 : vector<8x128xf32>
    %216 = arith.mulf %205, %181 : vector<8x128xf32>
    %217 = arith.addf %215, %216 : vector<8x128xf32>
    %218 = arith.index_cast %c5_i32 : i32 to index
    %c0_52 = arith.constant 0 : index
    %c0_53 = arith.constant 0 : index
    %219 = vector.load %arg4[%218, %c0_52, %c0_53] : memref<8x8x128xf32, #tpu.memory_space<vmem>>, vector<1x8x128xf32>
    %220 = vector.shape_cast %219 : vector<1x8x128xf32> to vector<8x128xf32>
    %221 = vector.shape_cast %217 : vector<8x128xf32> to vector<1x8x128xf32>
    tpu.vector_store %arg4[%218, %c0_52, %c0_53], %221 {strides = array<i32>} : memref<8x8x128xf32, #tpu.memory_space<vmem>>, vector<1x8x128xf32>,
    %c6_i32 = arith.constant 6 : i32
    %222 = arith.index_cast %c6_i32 : i32 to index
    %c0_54 = arith.constant 0 : index
    %c0_55 = arith.constant 0 : index
    %223 = vector.load %arg1[%222, %c0_54, %c0_55] : memref<8x8x384xf32, #tpu.memory_space<vmem>>, vector<1x8x384xf32>
    %224 = vector.shape_cast %223 : vector<1x8x384xf32> to vector<8x384xf32>
    %cst_56 = arith.constant dense<0.000000e+00> : vector<8x384xf32>
    %225 = tpu.matmul %217, %3, %cst_56 {dimension_numbers = #tpu.dot_dimension_numbers<[1], [0], [0], [1], [0, 0, 1, 1], [], []>} : vector<8x128xf32>, vector<128x384xf32>, vector<8x384xf32> -> vector<8x384xf32>
    %226 = vector.extract_strided_slice %224 {offsets = [0, 0], sizes = [8, 128], strides = [1, 1]} : vector<8x384xf32> to vector<8x128xf32>
    %227 = vector.extract_strided_slice %225 {offsets = [0, 0], sizes = [8, 128], strides = [1, 1]} : vector<8x384xf32> to vector<8x128xf32>
    %228 = arith.addf %226, %227 : vector<8x128xf32>
    %229 = arith.negf %228 : vector<8x128xf32>
    %230 = math.exp %229 : vector<8x128xf32>
    %cst_57 = arith.constant 1.000000e+00 : f32
    %231 = vector.broadcast %cst_57 : f32 to vector<8x128xf32>
    %232 = arith.addf %231, %230 : vector<8x128xf32>
    %233 = arith.divf %231, %232 : vector<8x128xf32>
    %234 = vector.extract_strided_slice %224 {offsets = [0, 128], sizes = [8, 128], strides = [1, 1]} : vector<8x384xf32> to vector<8x128xf32>
    %235 = vector.extract_strided_slice %225 {offsets = [0, 128], sizes = [8, 128], strides = [1, 1]} : vector<8x384xf32> to vector<8x128xf32>
    %236 = arith.addf %234, %235 : vector<8x128xf32>
    %237 = arith.negf %236 : vector<8x128xf32>
    %238 = math.exp %237 : vector<8x128xf32>
    %cst_58 = arith.constant 1.000000e+00 : f32
    %239 = vector.broadcast %cst_58 : f32 to vector<8x128xf32>
    %240 = arith.addf %239, %238 : vector<8x128xf32>
    %241 = arith.divf %239, %240 : vector<8x128xf32>
    %242 = vector.extract_strided_slice %224 {offsets = [0, 256], sizes = [8, 128], strides = [1, 1]} : vector<8x384xf32> to vector<8x128xf32>
    %243 = vector.extract_strided_slice %225 {offsets = [0, 256], sizes = [8, 128], strides = [1, 1]} : vector<8x384xf32> to vector<8x128xf32>
    %244 = vector.broadcast %4 : vector<1x128xf32> to vector<8x128xf32>
    %245 = arith.addf %243, %244 : vector<8x128xf32>
    %246 = arith.mulf %233, %245 : vector<8x128xf32>
    %247 = arith.addf %242, %246 : vector<8x128xf32>
    %248 = math.tanh %247 : vector<8x128xf32>
    %cst_59 = arith.constant 1.000000e+00 : f32
    %249 = vector.broadcast %cst_59 : f32 to vector<8x128xf32>
    %250 = arith.subf %249, %241 : vector<8x128xf32>
    %251 = arith.mulf %250, %248 : vector<8x128xf32>
    %252 = arith.mulf %241, %217 : vector<8x128xf32>
    %253 = arith.addf %251, %252 : vector<8x128xf32>
    %254 = arith.index_cast %c6_i32 : i32 to index
    %c0_60 = arith.constant 0 : index
    %c0_61 = arith.constant 0 : index
    %255 = vector.load %arg4[%254, %c0_60, %c0_61] : memref<8x8x128xf32, #tpu.memory_space<vmem>>, vector<1x8x128xf32>
    %256 = vector.shape_cast %255 : vector<1x8x128xf32> to vector<8x128xf32>
    %257 = vector.shape_cast %253 : vector<8x128xf32> to vector<1x8x128xf32>
    tpu.vector_store %arg4[%254, %c0_60, %c0_61], %257 {strides = array<i32>} : memref<8x8x128xf32, #tpu.memory_space<vmem>>, vector<1x8x128xf32>,
    %c7_i32 = arith.constant 7 : i32
    %258 = arith.index_cast %c7_i32 : i32 to index
    %c0_62 = arith.constant 0 : index
    %c0_63 = arith.constant 0 : index
    %259 = vector.load %arg1[%258, %c0_62, %c0_63] : memref<8x8x384xf32, #tpu.memory_space<vmem>>, vector<1x8x384xf32>
    %260 = vector.shape_cast %259 : vector<1x8x384xf32> to vector<8x384xf32>
    %cst_64 = arith.constant dense<0.000000e+00> : vector<8x384xf32>
    %261 = tpu.matmul %253, %3, %cst_64 {dimension_numbers = #tpu.dot_dimension_numbers<[1], [0], [0], [1], [0, 0, 1, 1], [], []>} : vector<8x128xf32>, vector<128x384xf32>, vector<8x384xf32> -> vector<8x384xf32>
    %262 = vector.extract_strided_slice %260 {offsets = [0, 0], sizes = [8, 128], strides = [1, 1]} : vector<8x384xf32> to vector<8x128xf32>
    %263 = vector.extract_strided_slice %261 {offsets = [0, 0], sizes = [8, 128], strides = [1, 1]} : vector<8x384xf32> to vector<8x128xf32>
    %264 = arith.addf %262, %263 : vector<8x128xf32>
    %265 = arith.negf %264 : vector<8x128xf32>
    %266 = math.exp %265 : vector<8x128xf32>
    %cst_65 = arith.constant 1.000000e+00 : f32
    %267 = vector.broadcast %cst_65 : f32 to vector<8x128xf32>
    %268 = arith.addf %267, %266 : vector<8x128xf32>
    %269 = arith.divf %267, %268 : vector<8x128xf32>
    %270 = vector.extract_strided_slice %260 {offsets = [0, 128], sizes = [8, 128], strides = [1, 1]} : vector<8x384xf32> to vector<8x128xf32>
    %271 = vector.extract_strided_slice %261 {offsets = [0, 128], sizes = [8, 128], strides = [1, 1]} : vector<8x384xf32> to vector<8x128xf32>
    %272 = arith.addf %270, %271 : vector<8x128xf32>
    %273 = arith.negf %272 : vector<8x128xf32>
    %274 = math.exp %273 : vector<8x128xf32>
    %cst_66 = arith.constant 1.000000e+00 : f32
    %275 = vector.broadcast %cst_66 : f32 to vector<8x128xf32>
    %276 = arith.addf %275, %274 : vector<8x128xf32>
    %277 = arith.divf %275, %276 : vector<8x128xf32>
    %278 = vector.extract_strided_slice %260 {offsets = [0, 256], sizes = [8, 128], strides = [1, 1]} : vector<8x384xf32> to vector<8x128xf32>
    %279 = vector.extract_strided_slice %261 {offsets = [0, 256], sizes = [8, 128], strides = [1, 1]} : vector<8x384xf32> to vector<8x128xf32>
    %280 = vector.broadcast %4 : vector<1x128xf32> to vector<8x128xf32>
    %281 = arith.addf %279, %280 : vector<8x128xf32>
    %282 = arith.mulf %269, %281 : vector<8x128xf32>
    %283 = arith.addf %278, %282 : vector<8x128xf32>
    %284 = math.tanh %283 : vector<8x128xf32>
    %cst_67 = arith.constant 1.000000e+00 : f32
    %285 = vector.broadcast %cst_67 : f32 to vector<8x128xf32>
    %286 = arith.subf %285, %277 : vector<8x128xf32>
    %287 = arith.mulf %286, %284 : vector<8x128xf32>
    %288 = arith.mulf %277, %253 : vector<8x128xf32>
    %289 = arith.addf %287, %288 : vector<8x128xf32>
    %290 = arith.index_cast %c7_i32 : i32 to index
    %c0_68 = arith.constant 0 : index
    %c0_69 = arith.constant 0 : index
    %291 = vector.load %arg4[%290, %c0_68, %c0_69] : memref<8x8x128xf32, #tpu.memory_space<vmem>>, vector<1x8x128xf32>
    %292 = vector.shape_cast %291 : vector<1x8x128xf32> to vector<8x128xf32>
    %293 = vector.shape_cast %289 : vector<8x128xf32> to vector<1x8x128xf32>
    tpu.vector_store %arg4[%290, %c0_68, %c0_69], %293 {strides = array<i32>} : memref<8x8x128xf32, #tpu.memory_space<vmem>>, vector<1x8x128xf32>,
    %c8_i32 = arith.constant 8 : i32
    %c0_70 = arith.constant 0 : index
    %c0_71 = arith.constant 0 : index
    %294 = vector.load %arg5[%c0_70, %c0_71] : memref<8x128xf32, #tpu.memory_space<vmem>>, vector<8x128xf32>
    tpu.vector_store %arg5[%c0_70, %c0_71], %289 {strides = array<i32>} : memref<8x128xf32, #tpu.memory_space<vmem>>, vector<8x128xf32>,
    return
  }
  func.func @transform_0(%arg0: i32) -> (i32, i32, i32) {
    %c0_i32 = arith.constant 0 : i32
    %c0_i32_0 = arith.constant 0 : i32
    %c0_i32_1 = arith.constant 0 : i32
    return %arg0, %c0_i32, %c0_i32_0 : i32, i32, i32
  }
  func.func @transform_1(%arg0: i32) -> (i32, i32) {
    %c0_i32 = arith.constant 0 : i32
    %c0_i32_0 = arith.constant 0 : i32
    %c0_i32_1 = arith.constant 0 : i32
    return %c0_i32, %c0_i32_0 : i32, i32
  }
  func.func @transform_2(%arg0: i32) -> (i32, i32) {
    %c0_i32 = arith.constant 0 : i32
    %c0_i32_0 = arith.constant 0 : i32
    %c0_i32_1 = arith.constant 0 : i32
    return %c0_i32, %c0_i32_0 : i32, i32
  }
  func.func @transform_3(%arg0: i32) -> (i32, i32, i32) {
    %c0_i32 = arith.constant 0 : i32
    %c0_i32_0 = arith.constant 0 : i32
    %c0_i32_1 = arith.constant 0 : i32
    return %arg0, %c0_i32, %c0_i32_0 : i32, i32, i32
  }
}

module attributes {stable_mosaic.version = 11 : i64} {
  func.func @gru_last_fused_kernel(%arg0: i32, %arg1: memref<8x8x384xf32, #tpu.memory_space<vmem>>, %arg2: memref<128x384xf32, #tpu.memory_space<vmem>>, %arg3: memref<1x128xf32, #tpu.memory_space<vmem>>, %arg4: memref<128x4xf32, #tpu.memory_space<vmem>>, %arg5: memref<1x4xf32, #tpu.memory_space<vmem>>, %arg6: memref<8x4xf32, #tpu.memory_space<vmem>>, %arg7: memref<8x128xf32, #tpu.memory_space<vmem>>) attributes {dimension_semantics = [#tpu.dimension_semantics<arbitrary>], iteration_bounds = array<i64: 1>, scalar_prefetch = 0 : i64, scratch_operands = 1 : i64, tpu.core_type = #tpu.core_type<tc>, window_params = [{transform_indices = @transform_0, window_bounds = array<i64: 8, 8, 384>}, {pipeline_mode = #tpu.pipeline_mode<synchronous>, transform_indices = @transform_1, window_bounds = array<i64: 128, 384>}, {pipeline_mode = #tpu.pipeline_mode<synchronous>, transform_indices = @transform_2, window_bounds = array<i64: 1, 128>}, {pipeline_mode = #tpu.pipeline_mode<synchronous>, transform_indices = @transform_3, window_bounds = array<i64: 128, 4>}, {pipeline_mode = #tpu.pipeline_mode<synchronous>, transform_indices = @transform_4, window_bounds = array<i64: 1, 4>}, {pipeline_mode = #tpu.pipeline_mode<synchronous>, transform_indices = @transform_5, window_bounds = array<i64: 8, 4>}]} {
    %c0_i32 = arith.constant 0 : i32
    %0 = arith.cmpi eq, %arg0, %c0_i32 : i32
    %1 = arith.extui %0 : i1 to i32
    %c0_i32_0 = arith.constant 0 : i32
    %2 = arith.cmpi ne, %1, %c0_i32_0 : i32
    scf.if %2 {
      %cst_58 = arith.constant 0.000000e+00 : f32
      %266 = vector.broadcast %cst_58 : f32 to vector<8x128xf32>
      %c0_59 = arith.constant 0 : index
      %c0_60 = arith.constant 0 : index
      %267 = vector.load %arg7[%c0_59, %c0_60] : memref<8x128xf32, #tpu.memory_space<vmem>>, vector<8x128xf32>
      tpu.vector_store %arg7[%c0_59, %c0_60], %266 {strides = array<i32>} : memref<8x128xf32, #tpu.memory_space<vmem>>, vector<8x128xf32>,
    } else {
    }
    %c0 = arith.constant 0 : index
    %c0_1 = arith.constant 0 : index
    %3 = vector.load %arg2[%c0, %c0_1] : memref<128x384xf32, #tpu.memory_space<vmem>>, vector<128x384xf32>
    %c0_2 = arith.constant 0 : index
    %c0_3 = arith.constant 0 : index
    %4 = vector.load %arg3[%c0_2, %c0_3] : memref<1x128xf32, #tpu.memory_space<vmem>>, vector<1x128xf32>
    %c0_4 = arith.constant 0 : index
    %c0_5 = arith.constant 0 : index
    %5 = vector.load %arg7[%c0_4, %c0_5] : memref<8x128xf32, #tpu.memory_space<vmem>>, vector<8x128xf32>
    %c0_i32_6 = arith.constant 0 : i32
    %6 = arith.index_cast %c0_i32_6 : i32 to index
    %c0_7 = arith.constant 0 : index
    %c0_8 = arith.constant 0 : index
    %7 = vector.load %arg1[%6, %c0_7, %c0_8] : memref<8x8x384xf32, #tpu.memory_space<vmem>>, vector<1x8x384xf32>
    %8 = vector.shape_cast %7 : vector<1x8x384xf32> to vector<8x384xf32>
    %cst = arith.constant dense<0.000000e+00> : vector<8x384xf32>
    %9 = tpu.matmul %5, %3, %cst {dimension_numbers = #tpu.dot_dimension_numbers<[1], [0], [0], [1], [0, 0, 1, 1], [], []>} : vector<8x128xf32>, vector<128x384xf32>, vector<8x384xf32> -> vector<8x384xf32>
    %10 = vector.extract_strided_slice %8 {offsets = [0, 0], sizes = [8, 128], strides = [1, 1]} : vector<8x384xf32> to vector<8x128xf32>
    %11 = vector.extract_strided_slice %9 {offsets = [0, 0], sizes = [8, 128], strides = [1, 1]} : vector<8x384xf32> to vector<8x128xf32>
    %12 = arith.addf %10, %11 : vector<8x128xf32>
    %13 = arith.negf %12 : vector<8x128xf32>
    %14 = math.exp %13 : vector<8x128xf32>
    %cst_9 = arith.constant 1.000000e+00 : f32
    %15 = vector.broadcast %cst_9 : f32 to vector<8x128xf32>
    %16 = arith.addf %15, %14 : vector<8x128xf32>
    %17 = arith.divf %15, %16 : vector<8x128xf32>
    %18 = vector.extract_strided_slice %8 {offsets = [0, 128], sizes = [8, 128], strides = [1, 1]} : vector<8x384xf32> to vector<8x128xf32>
    %19 = vector.extract_strided_slice %9 {offsets = [0, 128], sizes = [8, 128], strides = [1, 1]} : vector<8x384xf32> to vector<8x128xf32>
    %20 = arith.addf %18, %19 : vector<8x128xf32>
    %21 = arith.negf %20 : vector<8x128xf32>
    %22 = math.exp %21 : vector<8x128xf32>
    %cst_10 = arith.constant 1.000000e+00 : f32
    %23 = vector.broadcast %cst_10 : f32 to vector<8x128xf32>
    %24 = arith.addf %23, %22 : vector<8x128xf32>
    %25 = arith.divf %23, %24 : vector<8x128xf32>
    %26 = vector.extract_strided_slice %8 {offsets = [0, 256], sizes = [8, 128], strides = [1, 1]} : vector<8x384xf32> to vector<8x128xf32>
    %27 = vector.extract_strided_slice %9 {offsets = [0, 256], sizes = [8, 128], strides = [1, 1]} : vector<8x384xf32> to vector<8x128xf32>
    %28 = vector.broadcast %4 : vector<1x128xf32> to vector<8x128xf32>
    %29 = arith.addf %27, %28 : vector<8x128xf32>
    %30 = arith.mulf %17, %29 : vector<8x128xf32>
    %31 = arith.addf %26, %30 : vector<8x128xf32>
    %32 = math.tanh %31 : vector<8x128xf32>
    %cst_11 = arith.constant 1.000000e+00 : f32
    %33 = vector.broadcast %cst_11 : f32 to vector<8x128xf32>
    %34 = arith.subf %33, %25 : vector<8x128xf32>
    %35 = arith.mulf %34, %32 : vector<8x128xf32>
    %36 = arith.mulf %25, %5 : vector<8x128xf32>
    %37 = arith.addf %35, %36 : vector<8x128xf32>
    %c1_i32 = arith.constant 1 : i32
    %38 = arith.index_cast %c1_i32 : i32 to index
    %c0_12 = arith.constant 0 : index
    %c0_13 = arith.constant 0 : index
    %39 = vector.load %arg1[%38, %c0_12, %c0_13] : memref<8x8x384xf32, #tpu.memory_space<vmem>>, vector<1x8x384xf32>
    %40 = vector.shape_cast %39 : vector<1x8x384xf32> to vector<8x384xf32>
    %cst_14 = arith.constant dense<0.000000e+00> : vector<8x384xf32>
    %41 = tpu.matmul %37, %3, %cst_14 {dimension_numbers = #tpu.dot_dimension_numbers<[1], [0], [0], [1], [0, 0, 1, 1], [], []>} : vector<8x128xf32>, vector<128x384xf32>, vector<8x384xf32> -> vector<8x384xf32>
    %42 = vector.extract_strided_slice %40 {offsets = [0, 0], sizes = [8, 128], strides = [1, 1]} : vector<8x384xf32> to vector<8x128xf32>
    %43 = vector.extract_strided_slice %41 {offsets = [0, 0], sizes = [8, 128], strides = [1, 1]} : vector<8x384xf32> to vector<8x128xf32>
    %44 = arith.addf %42, %43 : vector<8x128xf32>
    %45 = arith.negf %44 : vector<8x128xf32>
    %46 = math.exp %45 : vector<8x128xf32>
    %cst_15 = arith.constant 1.000000e+00 : f32
    %47 = vector.broadcast %cst_15 : f32 to vector<8x128xf32>
    %48 = arith.addf %47, %46 : vector<8x128xf32>
    %49 = arith.divf %47, %48 : vector<8x128xf32>
    %50 = vector.extract_strided_slice %40 {offsets = [0, 128], sizes = [8, 128], strides = [1, 1]} : vector<8x384xf32> to vector<8x128xf32>
    %51 = vector.extract_strided_slice %41 {offsets = [0, 128], sizes = [8, 128], strides = [1, 1]} : vector<8x384xf32> to vector<8x128xf32>
    %52 = arith.addf %50, %51 : vector<8x128xf32>
    %53 = arith.negf %52 : vector<8x128xf32>
    %54 = math.exp %53 : vector<8x128xf32>
    %cst_16 = arith.constant 1.000000e+00 : f32
    %55 = vector.broadcast %cst_16 : f32 to vector<8x128xf32>
    %56 = arith.addf %55, %54 : vector<8x128xf32>
    %57 = arith.divf %55, %56 : vector<8x128xf32>
    %58 = vector.extract_strided_slice %40 {offsets = [0, 256], sizes = [8, 128], strides = [1, 1]} : vector<8x384xf32> to vector<8x128xf32>
    %59 = vector.extract_strided_slice %41 {offsets = [0, 256], sizes = [8, 128], strides = [1, 1]} : vector<8x384xf32> to vector<8x128xf32>
    %60 = vector.broadcast %4 : vector<1x128xf32> to vector<8x128xf32>
    %61 = arith.addf %59, %60 : vector<8x128xf32>
    %62 = arith.mulf %49, %61 : vector<8x128xf32>
    %63 = arith.addf %58, %62 : vector<8x128xf32>
    %64 = math.tanh %63 : vector<8x128xf32>
    %cst_17 = arith.constant 1.000000e+00 : f32
    %65 = vector.broadcast %cst_17 : f32 to vector<8x128xf32>
    %66 = arith.subf %65, %57 : vector<8x128xf32>
    %67 = arith.mulf %66, %64 : vector<8x128xf32>
    %68 = arith.mulf %57, %37 : vector<8x128xf32>
    %69 = arith.addf %67, %68 : vector<8x128xf32>
    %c2_i32 = arith.constant 2 : i32
    %70 = arith.index_cast %c2_i32 : i32 to index
    %c0_18 = arith.constant 0 : index
    %c0_19 = arith.constant 0 : index
    %71 = vector.load %arg1[%70, %c0_18, %c0_19] : memref<8x8x384xf32, #tpu.memory_space<vmem>>, vector<1x8x384xf32>
    %72 = vector.shape_cast %71 : vector<1x8x384xf32> to vector<8x384xf32>
    %cst_20 = arith.constant dense<0.000000e+00> : vector<8x384xf32>
    %73 = tpu.matmul %69, %3, %cst_20 {dimension_numbers = #tpu.dot_dimension_numbers<[1], [0], [0], [1], [0, 0, 1, 1], [], []>} : vector<8x128xf32>, vector<128x384xf32>, vector<8x384xf32> -> vector<8x384xf32>
    %74 = vector.extract_strided_slice %72 {offsets = [0, 0], sizes = [8, 128], strides = [1, 1]} : vector<8x384xf32> to vector<8x128xf32>
    %75 = vector.extract_strided_slice %73 {offsets = [0, 0], sizes = [8, 128], strides = [1, 1]} : vector<8x384xf32> to vector<8x128xf32>
    %76 = arith.addf %74, %75 : vector<8x128xf32>
    %77 = arith.negf %76 : vector<8x128xf32>
    %78 = math.exp %77 : vector<8x128xf32>
    %cst_21 = arith.constant 1.000000e+00 : f32
    %79 = vector.broadcast %cst_21 : f32 to vector<8x128xf32>
    %80 = arith.addf %79, %78 : vector<8x128xf32>
    %81 = arith.divf %79, %80 : vector<8x128xf32>
    %82 = vector.extract_strided_slice %72 {offsets = [0, 128], sizes = [8, 128], strides = [1, 1]} : vector<8x384xf32> to vector<8x128xf32>
    %83 = vector.extract_strided_slice %73 {offsets = [0, 128], sizes = [8, 128], strides = [1, 1]} : vector<8x384xf32> to vector<8x128xf32>
    %84 = arith.addf %82, %83 : vector<8x128xf32>
    %85 = arith.negf %84 : vector<8x128xf32>
    %86 = math.exp %85 : vector<8x128xf32>
    %cst_22 = arith.constant 1.000000e+00 : f32
    %87 = vector.broadcast %cst_22 : f32 to vector<8x128xf32>
    %88 = arith.addf %87, %86 : vector<8x128xf32>
    %89 = arith.divf %87, %88 : vector<8x128xf32>
    %90 = vector.extract_strided_slice %72 {offsets = [0, 256], sizes = [8, 128], strides = [1, 1]} : vector<8x384xf32> to vector<8x128xf32>
    %91 = vector.extract_strided_slice %73 {offsets = [0, 256], sizes = [8, 128], strides = [1, 1]} : vector<8x384xf32> to vector<8x128xf32>
    %92 = vector.broadcast %4 : vector<1x128xf32> to vector<8x128xf32>
    %93 = arith.addf %91, %92 : vector<8x128xf32>
    %94 = arith.mulf %81, %93 : vector<8x128xf32>
    %95 = arith.addf %90, %94 : vector<8x128xf32>
    %96 = math.tanh %95 : vector<8x128xf32>
    %cst_23 = arith.constant 1.000000e+00 : f32
    %97 = vector.broadcast %cst_23 : f32 to vector<8x128xf32>
    %98 = arith.subf %97, %89 : vector<8x128xf32>
    %99 = arith.mulf %98, %96 : vector<8x128xf32>
    %100 = arith.mulf %89, %69 : vector<8x128xf32>
    %101 = arith.addf %99, %100 : vector<8x128xf32>
    %c3_i32 = arith.constant 3 : i32
    %102 = arith.index_cast %c3_i32 : i32 to index
    %c0_24 = arith.constant 0 : index
    %c0_25 = arith.constant 0 : index
    %103 = vector.load %arg1[%102, %c0_24, %c0_25] : memref<8x8x384xf32, #tpu.memory_space<vmem>>, vector<1x8x384xf32>
    %104 = vector.shape_cast %103 : vector<1x8x384xf32> to vector<8x384xf32>
    %cst_26 = arith.constant dense<0.000000e+00> : vector<8x384xf32>
    %105 = tpu.matmul %101, %3, %cst_26 {dimension_numbers = #tpu.dot_dimension_numbers<[1], [0], [0], [1], [0, 0, 1, 1], [], []>} : vector<8x128xf32>, vector<128x384xf32>, vector<8x384xf32> -> vector<8x384xf32>
    %106 = vector.extract_strided_slice %104 {offsets = [0, 0], sizes = [8, 128], strides = [1, 1]} : vector<8x384xf32> to vector<8x128xf32>
    %107 = vector.extract_strided_slice %105 {offsets = [0, 0], sizes = [8, 128], strides = [1, 1]} : vector<8x384xf32> to vector<8x128xf32>
    %108 = arith.addf %106, %107 : vector<8x128xf32>
    %109 = arith.negf %108 : vector<8x128xf32>
    %110 = math.exp %109 : vector<8x128xf32>
    %cst_27 = arith.constant 1.000000e+00 : f32
    %111 = vector.broadcast %cst_27 : f32 to vector<8x128xf32>
    %112 = arith.addf %111, %110 : vector<8x128xf32>
    %113 = arith.divf %111, %112 : vector<8x128xf32>
    %114 = vector.extract_strided_slice %104 {offsets = [0, 128], sizes = [8, 128], strides = [1, 1]} : vector<8x384xf32> to vector<8x128xf32>
    %115 = vector.extract_strided_slice %105 {offsets = [0, 128], sizes = [8, 128], strides = [1, 1]} : vector<8x384xf32> to vector<8x128xf32>
    %116 = arith.addf %114, %115 : vector<8x128xf32>
    %117 = arith.negf %116 : vector<8x128xf32>
    %118 = math.exp %117 : vector<8x128xf32>
    %cst_28 = arith.constant 1.000000e+00 : f32
    %119 = vector.broadcast %cst_28 : f32 to vector<8x128xf32>
    %120 = arith.addf %119, %118 : vector<8x128xf32>
    %121 = arith.divf %119, %120 : vector<8x128xf32>
    %122 = vector.extract_strided_slice %104 {offsets = [0, 256], sizes = [8, 128], strides = [1, 1]} : vector<8x384xf32> to vector<8x128xf32>
    %123 = vector.extract_strided_slice %105 {offsets = [0, 256], sizes = [8, 128], strides = [1, 1]} : vector<8x384xf32> to vector<8x128xf32>
    %124 = vector.broadcast %4 : vector<1x128xf32> to vector<8x128xf32>
    %125 = arith.addf %123, %124 : vector<8x128xf32>
    %126 = arith.mulf %113, %125 : vector<8x128xf32>
    %127 = arith.addf %122, %126 : vector<8x128xf32>
    %128 = math.tanh %127 : vector<8x128xf32>
    %cst_29 = arith.constant 1.000000e+00 : f32
    %129 = vector.broadcast %cst_29 : f32 to vector<8x128xf32>
    %130 = arith.subf %129, %121 : vector<8x128xf32>
    %131 = arith.mulf %130, %128 : vector<8x128xf32>
    %132 = arith.mulf %121, %101 : vector<8x128xf32>
    %133 = arith.addf %131, %132 : vector<8x128xf32>
    %c4_i32 = arith.constant 4 : i32
    %134 = arith.index_cast %c4_i32 : i32 to index
    %c0_30 = arith.constant 0 : index
    %c0_31 = arith.constant 0 : index
    %135 = vector.load %arg1[%134, %c0_30, %c0_31] : memref<8x8x384xf32, #tpu.memory_space<vmem>>, vector<1x8x384xf32>
    %136 = vector.shape_cast %135 : vector<1x8x384xf32> to vector<8x384xf32>
    %cst_32 = arith.constant dense<0.000000e+00> : vector<8x384xf32>
    %137 = tpu.matmul %133, %3, %cst_32 {dimension_numbers = #tpu.dot_dimension_numbers<[1], [0], [0], [1], [0, 0, 1, 1], [], []>} : vector<8x128xf32>, vector<128x384xf32>, vector<8x384xf32> -> vector<8x384xf32>
    %138 = vector.extract_strided_slice %136 {offsets = [0, 0], sizes = [8, 128], strides = [1, 1]} : vector<8x384xf32> to vector<8x128xf32>
    %139 = vector.extract_strided_slice %137 {offsets = [0, 0], sizes = [8, 128], strides = [1, 1]} : vector<8x384xf32> to vector<8x128xf32>
    %140 = arith.addf %138, %139 : vector<8x128xf32>
    %141 = arith.negf %140 : vector<8x128xf32>
    %142 = math.exp %141 : vector<8x128xf32>
    %cst_33 = arith.constant 1.000000e+00 : f32
    %143 = vector.broadcast %cst_33 : f32 to vector<8x128xf32>
    %144 = arith.addf %143, %142 : vector<8x128xf32>
    %145 = arith.divf %143, %144 : vector<8x128xf32>
    %146 = vector.extract_strided_slice %136 {offsets = [0, 128], sizes = [8, 128], strides = [1, 1]} : vector<8x384xf32> to vector<8x128xf32>
    %147 = vector.extract_strided_slice %137 {offsets = [0, 128], sizes = [8, 128], strides = [1, 1]} : vector<8x384xf32> to vector<8x128xf32>
    %148 = arith.addf %146, %147 : vector<8x128xf32>
    %149 = arith.negf %148 : vector<8x128xf32>
    %150 = math.exp %149 : vector<8x128xf32>
    %cst_34 = arith.constant 1.000000e+00 : f32
    %151 = vector.broadcast %cst_34 : f32 to vector<8x128xf32>
    %152 = arith.addf %151, %150 : vector<8x128xf32>
    %153 = arith.divf %151, %152 : vector<8x128xf32>
    %154 = vector.extract_strided_slice %136 {offsets = [0, 256], sizes = [8, 128], strides = [1, 1]} : vector<8x384xf32> to vector<8x128xf32>
    %155 = vector.extract_strided_slice %137 {offsets = [0, 256], sizes = [8, 128], strides = [1, 1]} : vector<8x384xf32> to vector<8x128xf32>
    %156 = vector.broadcast %4 : vector<1x128xf32> to vector<8x128xf32>
    %157 = arith.addf %155, %156 : vector<8x128xf32>
    %158 = arith.mulf %145, %157 : vector<8x128xf32>
    %159 = arith.addf %154, %158 : vector<8x128xf32>
    %160 = math.tanh %159 : vector<8x128xf32>
    %cst_35 = arith.constant 1.000000e+00 : f32
    %161 = vector.broadcast %cst_35 : f32 to vector<8x128xf32>
    %162 = arith.subf %161, %153 : vector<8x128xf32>
    %163 = arith.mulf %162, %160 : vector<8x128xf32>
    %164 = arith.mulf %153, %133 : vector<8x128xf32>
    %165 = arith.addf %163, %164 : vector<8x128xf32>
    %c5_i32 = arith.constant 5 : i32
    %166 = arith.index_cast %c5_i32 : i32 to index
    %c0_36 = arith.constant 0 : index
    %c0_37 = arith.constant 0 : index
    %167 = vector.load %arg1[%166, %c0_36, %c0_37] : memref<8x8x384xf32, #tpu.memory_space<vmem>>, vector<1x8x384xf32>
    %168 = vector.shape_cast %167 : vector<1x8x384xf32> to vector<8x384xf32>
    %cst_38 = arith.constant dense<0.000000e+00> : vector<8x384xf32>
    %169 = tpu.matmul %165, %3, %cst_38 {dimension_numbers = #tpu.dot_dimension_numbers<[1], [0], [0], [1], [0, 0, 1, 1], [], []>} : vector<8x128xf32>, vector<128x384xf32>, vector<8x384xf32> -> vector<8x384xf32>
    %170 = vector.extract_strided_slice %168 {offsets = [0, 0], sizes = [8, 128], strides = [1, 1]} : vector<8x384xf32> to vector<8x128xf32>
    %171 = vector.extract_strided_slice %169 {offsets = [0, 0], sizes = [8, 128], strides = [1, 1]} : vector<8x384xf32> to vector<8x128xf32>
    %172 = arith.addf %170, %171 : vector<8x128xf32>
    %173 = arith.negf %172 : vector<8x128xf32>
    %174 = math.exp %173 : vector<8x128xf32>
    %cst_39 = arith.constant 1.000000e+00 : f32
    %175 = vector.broadcast %cst_39 : f32 to vector<8x128xf32>
    %176 = arith.addf %175, %174 : vector<8x128xf32>
    %177 = arith.divf %175, %176 : vector<8x128xf32>
    %178 = vector.extract_strided_slice %168 {offsets = [0, 128], sizes = [8, 128], strides = [1, 1]} : vector<8x384xf32> to vector<8x128xf32>
    %179 = vector.extract_strided_slice %169 {offsets = [0, 128], sizes = [8, 128], strides = [1, 1]} : vector<8x384xf32> to vector<8x128xf32>
    %180 = arith.addf %178, %179 : vector<8x128xf32>
    %181 = arith.negf %180 : vector<8x128xf32>
    %182 = math.exp %181 : vector<8x128xf32>
    %cst_40 = arith.constant 1.000000e+00 : f32
    %183 = vector.broadcast %cst_40 : f32 to vector<8x128xf32>
    %184 = arith.addf %183, %182 : vector<8x128xf32>
    %185 = arith.divf %183, %184 : vector<8x128xf32>
    %186 = vector.extract_strided_slice %168 {offsets = [0, 256], sizes = [8, 128], strides = [1, 1]} : vector<8x384xf32> to vector<8x128xf32>
    %187 = vector.extract_strided_slice %169 {offsets = [0, 256], sizes = [8, 128], strides = [1, 1]} : vector<8x384xf32> to vector<8x128xf32>
    %188 = vector.broadcast %4 : vector<1x128xf32> to vector<8x128xf32>
    %189 = arith.addf %187, %188 : vector<8x128xf32>
    %190 = arith.mulf %177, %189 : vector<8x128xf32>
    %191 = arith.addf %186, %190 : vector<8x128xf32>
    %192 = math.tanh %191 : vector<8x128xf32>
    %cst_41 = arith.constant 1.000000e+00 : f32
    %193 = vector.broadcast %cst_41 : f32 to vector<8x128xf32>
    %194 = arith.subf %193, %185 : vector<8x128xf32>
    %195 = arith.mulf %194, %192 : vector<8x128xf32>
    %196 = arith.mulf %185, %165 : vector<8x128xf32>
    %197 = arith.addf %195, %196 : vector<8x128xf32>
    %c6_i32 = arith.constant 6 : i32
    %198 = arith.index_cast %c6_i32 : i32 to index
    %c0_42 = arith.constant 0 : index
    %c0_43 = arith.constant 0 : index
    %199 = vector.load %arg1[%198, %c0_42, %c0_43] : memref<8x8x384xf32, #tpu.memory_space<vmem>>, vector<1x8x384xf32>
    %200 = vector.shape_cast %199 : vector<1x8x384xf32> to vector<8x384xf32>
    %cst_44 = arith.constant dense<0.000000e+00> : vector<8x384xf32>
    %201 = tpu.matmul %197, %3, %cst_44 {dimension_numbers = #tpu.dot_dimension_numbers<[1], [0], [0], [1], [0, 0, 1, 1], [], []>} : vector<8x128xf32>, vector<128x384xf32>, vector<8x384xf32> -> vector<8x384xf32>
    %202 = vector.extract_strided_slice %200 {offsets = [0, 0], sizes = [8, 128], strides = [1, 1]} : vector<8x384xf32> to vector<8x128xf32>
    %203 = vector.extract_strided_slice %201 {offsets = [0, 0], sizes = [8, 128], strides = [1, 1]} : vector<8x384xf32> to vector<8x128xf32>
    %204 = arith.addf %202, %203 : vector<8x128xf32>
    %205 = arith.negf %204 : vector<8x128xf32>
    %206 = math.exp %205 : vector<8x128xf32>
    %cst_45 = arith.constant 1.000000e+00 : f32
    %207 = vector.broadcast %cst_45 : f32 to vector<8x128xf32>
    %208 = arith.addf %207, %206 : vector<8x128xf32>
    %209 = arith.divf %207, %208 : vector<8x128xf32>
    %210 = vector.extract_strided_slice %200 {offsets = [0, 128], sizes = [8, 128], strides = [1, 1]} : vector<8x384xf32> to vector<8x128xf32>
    %211 = vector.extract_strided_slice %201 {offsets = [0, 128], sizes = [8, 128], strides = [1, 1]} : vector<8x384xf32> to vector<8x128xf32>
    %212 = arith.addf %210, %211 : vector<8x128xf32>
    %213 = arith.negf %212 : vector<8x128xf32>
    %214 = math.exp %213 : vector<8x128xf32>
    %cst_46 = arith.constant 1.000000e+00 : f32
    %215 = vector.broadcast %cst_46 : f32 to vector<8x128xf32>
    %216 = arith.addf %215, %214 : vector<8x128xf32>
    %217 = arith.divf %215, %216 : vector<8x128xf32>
    %218 = vector.extract_strided_slice %200 {offsets = [0, 256], sizes = [8, 128], strides = [1, 1]} : vector<8x384xf32> to vector<8x128xf32>
    %219 = vector.extract_strided_slice %201 {offsets = [0, 256], sizes = [8, 128], strides = [1, 1]} : vector<8x384xf32> to vector<8x128xf32>
    %220 = vector.broadcast %4 : vector<1x128xf32> to vector<8x128xf32>
    %221 = arith.addf %219, %220 : vector<8x128xf32>
    %222 = arith.mulf %209, %221 : vector<8x128xf32>
    %223 = arith.addf %218, %222 : vector<8x128xf32>
    %224 = math.tanh %223 : vector<8x128xf32>
    %cst_47 = arith.constant 1.000000e+00 : f32
    %225 = vector.broadcast %cst_47 : f32 to vector<8x128xf32>
    %226 = arith.subf %225, %217 : vector<8x128xf32>
    %227 = arith.mulf %226, %224 : vector<8x128xf32>
    %228 = arith.mulf %217, %197 : vector<8x128xf32>
    %229 = arith.addf %227, %228 : vector<8x128xf32>
    %c7_i32 = arith.constant 7 : i32
    %230 = arith.index_cast %c7_i32 : i32 to index
    %c0_48 = arith.constant 0 : index
    %c0_49 = arith.constant 0 : index
    %231 = vector.load %arg1[%230, %c0_48, %c0_49] : memref<8x8x384xf32, #tpu.memory_space<vmem>>, vector<1x8x384xf32>
    %232 = vector.shape_cast %231 : vector<1x8x384xf32> to vector<8x384xf32>
    %cst_50 = arith.constant dense<0.000000e+00> : vector<8x384xf32>
    %233 = tpu.matmul %229, %3, %cst_50 {dimension_numbers = #tpu.dot_dimension_numbers<[1], [0], [0], [1], [0, 0, 1, 1], [], []>} : vector<8x128xf32>, vector<128x384xf32>, vector<8x384xf32> -> vector<8x384xf32>
    %234 = vector.extract_strided_slice %232 {offsets = [0, 0], sizes = [8, 128], strides = [1, 1]} : vector<8x384xf32> to vector<8x128xf32>
    %235 = vector.extract_strided_slice %233 {offsets = [0, 0], sizes = [8, 128], strides = [1, 1]} : vector<8x384xf32> to vector<8x128xf32>
    %236 = arith.addf %234, %235 : vector<8x128xf32>
    %237 = arith.negf %236 : vector<8x128xf32>
    %238 = math.exp %237 : vector<8x128xf32>
    %cst_51 = arith.constant 1.000000e+00 : f32
    %239 = vector.broadcast %cst_51 : f32 to vector<8x128xf32>
    %240 = arith.addf %239, %238 : vector<8x128xf32>
    %241 = arith.divf %239, %240 : vector<8x128xf32>
    %242 = vector.extract_strided_slice %232 {offsets = [0, 128], sizes = [8, 128], strides = [1, 1]} : vector<8x384xf32> to vector<8x128xf32>
    %243 = vector.extract_strided_slice %233 {offsets = [0, 128], sizes = [8, 128], strides = [1, 1]} : vector<8x384xf32> to vector<8x128xf32>
    %244 = arith.addf %242, %243 : vector<8x128xf32>
    %245 = arith.negf %244 : vector<8x128xf32>
    %246 = math.exp %245 : vector<8x128xf32>
    %cst_52 = arith.constant 1.000000e+00 : f32
    %247 = vector.broadcast %cst_52 : f32 to vector<8x128xf32>
    %248 = arith.addf %247, %246 : vector<8x128xf32>
    %249 = arith.divf %247, %248 : vector<8x128xf32>
    %250 = vector.extract_strided_slice %232 {offsets = [0, 256], sizes = [8, 128], strides = [1, 1]} : vector<8x384xf32> to vector<8x128xf32>
    %251 = vector.extract_strided_slice %233 {offsets = [0, 256], sizes = [8, 128], strides = [1, 1]} : vector<8x384xf32> to vector<8x128xf32>
    %252 = vector.broadcast %4 : vector<1x128xf32> to vector<8x128xf32>
    %253 = arith.addf %251, %252 : vector<8x128xf32>
    %254 = arith.mulf %241, %253 : vector<8x128xf32>
    %255 = arith.addf %250, %254 : vector<8x128xf32>
    %256 = math.tanh %255 : vector<8x128xf32>
    %cst_53 = arith.constant 1.000000e+00 : f32
    %257 = vector.broadcast %cst_53 : f32 to vector<8x128xf32>
    %258 = arith.subf %257, %249 : vector<8x128xf32>
    %259 = arith.mulf %258, %256 : vector<8x128xf32>
    %260 = arith.mulf %249, %229 : vector<8x128xf32>
    %261 = arith.addf %259, %260 : vector<8x128xf32>
    %c8_i32 = arith.constant 8 : i32
    %c0_54 = arith.constant 0 : index
    %c0_55 = arith.constant 0 : index
    %262 = vector.load %arg7[%c0_54, %c0_55] : memref<8x128xf32, #tpu.memory_space<vmem>>, vector<8x128xf32>
    tpu.vector_store %arg7[%c0_54, %c0_55], %261 {strides = array<i32>} : memref<8x128xf32, #tpu.memory_space<vmem>>, vector<8x128xf32>,
    %c0_i32_56 = arith.constant 0 : i32
    %263 = arith.cmpi eq, %arg0, %c0_i32_56 : i32
    %264 = arith.extui %263 : i1 to i32
    %c0_i32_57 = arith.constant 0 : i32
    %265 = arith.cmpi ne, %264, %c0_i32_57 : i32
    scf.if %265 {
      %c0_58 = arith.constant 0 : index
      %c0_59 = arith.constant 0 : index
      %266 = vector.load %arg7[%c0_58, %c0_59] : memref<8x128xf32, #tpu.memory_space<vmem>>, vector<8x128xf32>
      %c0_60 = arith.constant 0 : index
      %c0_61 = arith.constant 0 : index
      %267 = vector.load %arg4[%c0_60, %c0_61] : memref<128x4xf32, #tpu.memory_space<vmem>>, vector<128x4xf32>
      %cst_62 = arith.constant dense<0.000000e+00> : vector<8x4xf32>
      %268 = tpu.matmul %266, %267, %cst_62 {dimension_numbers = #tpu.dot_dimension_numbers<[1], [0], [0], [1], [0, 0, 1, 1], [], []>} : vector<8x128xf32>, vector<128x4xf32>, vector<8x4xf32> -> vector<8x4xf32>
      %c0_63 = arith.constant 0 : index
      %c0_64 = arith.constant 0 : index
      %269 = vector.load %arg5[%c0_63, %c0_64] : memref<1x4xf32, #tpu.memory_space<vmem>>, vector<1x4xf32>
      %270 = vector.broadcast %269 : vector<1x4xf32> to vector<8x4xf32>
      %271 = arith.addf %268, %270 : vector<8x4xf32>
      %c0_65 = arith.constant 0 : index
      %c0_66 = arith.constant 0 : index
      %272 = vector.load %arg6[%c0_65, %c0_66] : memref<8x4xf32, #tpu.memory_space<vmem>>, vector<8x4xf32>
      tpu.vector_store %arg6[%c0_65, %c0_66], %271 {strides = array<i32>} : memref<8x4xf32, #tpu.memory_space<vmem>>, vector<8x4xf32>,
    } else {
    }
    return
  }
  func.func @transform_0(%arg0: i32) -> (i32, i32, i32) {
    %c0_i32 = arith.constant 0 : i32
    %c0_i32_0 = arith.constant 0 : i32
    %c0_i32_1 = arith.constant 0 : i32
    return %arg0, %c0_i32, %c0_i32_0 : i32, i32, i32
  }
  func.func @transform_1(%arg0: i32) -> (i32, i32) {
    %c0_i32 = arith.constant 0 : i32
    %c0_i32_0 = arith.constant 0 : i32
    %c0_i32_1 = arith.constant 0 : i32
    return %c0_i32, %c0_i32_0 : i32, i32
  }
  func.func @transform_2(%arg0: i32) -> (i32, i32) {
    %c0_i32 = arith.constant 0 : i32
    %c0_i32_0 = arith.constant 0 : i32
    %c0_i32_1 = arith.constant 0 : i32
    return %c0_i32, %c0_i32_0 : i32, i32
  }
  func.func @transform_3(%arg0: i32) -> (i32, i32) {
    %c0_i32 = arith.constant 0 : i32
    %c0_i32_0 = arith.constant 0 : i32
    %c0_i32_1 = arith.constant 0 : i32
    return %c0_i32, %c0_i32_0 : i32, i32
  }
  func.func @transform_4(%arg0: i32) -> (i32, i32) {
    %c0_i32 = arith.constant 0 : i32
    %c0_i32_0 = arith.constant 0 : i32
    %c0_i32_1 = arith.constant 0 : i32
    return %c0_i32, %c0_i32_0 : i32, i32
  }
  func.func @transform_5(%arg0: i32) -> (i32, i32) {
    %c0_i32 = arith.constant 0 : i32
    %c0_i32_0 = arith.constant 0 : i32
    %c0_i32_1 = arith.constant 0 : i32
    return %c0_i32, %c0_i32_0 : i32, i32
  }
}

</mosaic_0001>

<llo_original>
// kernel: gru_model_forward.6
$region0: #{gru_model_forward.6}
  #allocation0 [shape = 'u32[]', space=smem, size = 0x4, offset = 0x4, fixed_abs, tag = 'smem constant byte address 0x4 - core index']
  #allocation1 [shape = 'u32[144,128]{1,0:T(1,128)}', space=vmem, size = 0x12000, scoped, tag = 'internal scratch']
  %s0 = inlined_call_operand.vmem [shape: f32[64,16], index: 0, kind: input, shape index: {}]
  %s1 = inlined_call_operand.vmem [shape: f32[16,384], index: 1, kind: input, shape index: {}]
  %s2 = inlined_call_operand.vmem [shape: f32[1,384], index: 2, kind: input, shape index: {}]
  %s3 = inlined_call_operand.vmem [shape: f32[64,384], index: 3, kind: output, shape index: {}]
  %s4 = sld [smem:[#allocation0]]
  $region22: #{gru_model_forward.6} parent=0
    _
  %s6 = ssub.s32 1, %s4
  %s7 = scalar_select 0, %s6, %s4
  // Predicated region
  $region2: #{gru_model_forward.6} parent=0 // pred_check
    _
  $region3: #{gru_model_forward.6} parent=0 // pred_check_branch
    %9 = sbr.rel (0) target = $region5
  $region4: #{gru_model_forward.6} parent=0 // pred_region
    _
  $region5: #{gru_model_forward.6} parent=0 // pred_fallthru
    _
  // Predicated region
  $region6: #{gru_model_forward.6} parent=0 // pred_check
    _
  $region7: #{gru_model_forward.6} parent=0 // pred_check_branch
    %11 = sbr.rel (0) target = $region9
  $region8: #{gru_model_forward.6} parent=0 // pred_region
    _
  $region9: #{gru_model_forward.6} parent=0 // pred_fallthru
    _
  // Predicated region
  $region10: #{gru_model_forward.6} parent=0 // pred_check
    _
  $region11: #{gru_model_forward.6} parent=0 // pred_check_branch
    %13 = sbr.rel (0) target = $region13
  $region12: #{gru_model_forward.6} parent=0 // pred_region
    _
  $region13: #{gru_model_forward.6} parent=0 // pred_fallthru
    _
  %v14 = vld [vmem:[%s0] sm:$0xff]
  %v15 = vld [vmem:[%s0 + $0x8] sm:$0xff]
  %v16 = vld [vmem:[%s0 + $0x10] sm:$0xff]
  %v17 = vld [vmem:[%s0 + $0x18] sm:$0xff]
  %v18 = vld [vmem:[%s0 + $0x20] sm:$0xff]
  %v19 = vld [vmem:[%s0 + $0x28] sm:$0xff]
  %v20 = vld [vmem:[%s0 + $0x30] sm:$0xff]
  %v21 = vld [vmem:[%s0 + $0x38] sm:$0xff]
  %v22 = vld [vmem:[%s1] sm:$0xff]
  %v23 = vld [vmem:[%s1 + $0x8] sm:$0xff]
  %v24 = vld [vmem:[%s1 + $0x10] sm:$0xff]
  %v25 = vld [vmem:[%s1 + $0x18] sm:$0xff]
  %v26 = vld [vmem:[%s1 + $0x20] sm:$0xff]
  %v27 = vld [vmem:[%s1 + $0x28] sm:$0xff]
  %v28 = vld [vmem:[%s2] sm:$0x7]
  %v30 = vlaneseq
  %v31 = vshrl.u32 %v30, 7
  %v32 = vsub.s32 0, %v31
  %v33 = vrot.slane %v28, %v32
  %v34 = vlaneseq
  %v35 = vshrl.u32 %v34, 7
  %v36 = vsub.s32 1, %v35
  %v37 = vrot.slane %v28, %v36
  %v38 = vlaneseq
  %v39 = vshrl.u32 %v38, 7
  %v40 = vsub.s32 2, %v39
  %v41 = vrot.slane %v28, %v40
  %vm45 = vcmask 130048
  %v47 = vsel %vm45, %v14, 0
  %v50 = vsel %vm45, %v15, 0
  %v53 = vsel %vm45, %v16, 0
  %v56 = vsel %vm45, %v17, 0
  %v59 = vsel %vm45, %v18, 0
  %v62 = vsel %vm45, %v19, 0
  %v65 = vsel %vm45, %v20, 0
  %v68 = vsel %vm45, %v21, 0
  %70 = vmatprep.subr.mxu0 %v23
  %71 = vmatpush1.msra.mxu0 %v22
  %72 = vmatprep.subr.mxu0 %v26
  %73 = vmatpush1.msra.mxu0 %v25
  %74 = vmatprep.subr.mxu0 0.0
  %75 = vmatpush1.msra.mxu0 0.0
  %76 = vmatprep.subr.mxu0 0.0
  %77 = vmatpush1.msra.mxu0 0.0
  %78 = vmatprep.subr.mxu0 0.0
  %79 = vmatpush1.msra.mxu0 0.0
  %80 = vmatprep.subr.mxu0 0.0
  %81 = vmatpush1.msra.mxu0 0.0
  %82 = vmatprep.subr.mxu0 0.0
  %83 = vmatpush1.msra.mxu0 0.0
  %84 = vmatprep.subr.mxu0 0.0
  %85 = vmatpush1.msra.mxu0 0.0
  %86 = vmatprep.subr.mxu0 0.0
  %87 = vmatpush1.msra.mxu0 0.0
  %88 = vmatprep.subr.mxu0 0.0
  %89 = vmatpush1.msra.mxu0 0.0
  %90 = vmatprep.subr.mxu0 0.0
  %91 = vmatpush1.msra.mxu0 0.0
  %92 = vmatprep.subr.mxu0 0.0
  %93 = vmatpush1.msra.mxu0 0.0
  %94 = vmatprep.subr.mxu0 0.0
  %95 = vmatpush1.msra.mxu0 0.0
  %96 = vmatprep.subr.mxu0 0.0
  %97 = vmatpush1.msra.mxu0 0.0
  %98 = vmatprep.subr.mxu0 0.0
  %99 = vmatpush1.msra.mxu0 0.0
  %100 = vmatprep.subr.mxu0 0.0
  %101 = vmatpush1.msra.mxu0 0.0
  %102 = vmatprep.subr.mxu0 0.0
  %103 = vmatpush1.msra.mxu0 0.0
  %104 = vmatprep.subr.mxu0 0.0
  %105 = vmatpush1.msra.mxu0 0.0
  %106 = vmatprep.subr.mxu0 0.0
  %107 = vmatpush1.msra.mxu0 0.0
  %108 = vmatprep.subr.mxu0 0.0
  %109 = vmatpush1.msra.mxu0 0.0
  %110 = vmatprep.subr.mxu0 0.0
  %111 = vmatpush1.msra.mxu0 0.0
  %112 = vmatprep.subr.mxu0 0.0
  %113 = vmatpush1.msra.mxu0 0.0
  %114 = vmatprep.subr.mxu0 0.0
  %115 = vmatpush1.msra.mxu0 0.0
  %116 = vmatprep.subr.mxu0 0.0
  %117 = vmatpush1.msra.mxu0 0.0
  %118 = vmatprep.subr.mxu0 0.0
  %119 = vmatpush1.msra.mxu0 0.0
  %120 = vmatprep.subr.mxu0 0.0
  %121 = vmatpush1.msra.mxu0 0.0
  %122 = vmatprep.subr.mxu0 0.0
  %123 = vmatpush1.msra.mxu0 0.0
  %124 = vmatprep.subr.mxu0 0.0
  %125 = vmatpush1.msra.mxu0 0.0
  %126 = vmatprep.subr.mxu0 0.0
  %127 = vmatpush1.msra.mxu0 0.0
  %128 = vmatprep.subr.mxu0 0.0
  %129 = vmatpush1.msra.mxu0 0.0
  %130 = vmatprep.subr.mxu0 0.0
  %131 = vmatpush1.msra.mxu0 0.0
  %132 = vmatprep.subr.mxu0 0.0
  %133 = vmatpush1.msra.mxu0 0.0
  %134 = vmatprep.mubr.f32.mxu0 0.0
  %135 = vmatmul.mubr.f32.gmra.mrb[0].mxu0 %v47
  %v136 = vpop.f32.mrb[0].mxu0
  %v137 = vadd.f32 %v33, %v136
  %v138 = vpop.f32.mrb[0].mxu0
  %v139 = vadd.f32 %v37, %v138
  %140 = vmatprep.mubr.f32.mxu0 0.0
  %141 = vmatmul.mubr.f32.gmra.mrb[0].mxu0 %v50
  %v142 = vpop.f32.mrb[0].mxu0
  %v143 = vadd.f32 %v33, %v142
  %v144 = vpop.f32.mrb[0].mxu0
  %v145 = vadd.f32 %v37, %v144
  %146 = vmatprep.mubr.f32.mxu0 0.0
  %147 = vmatmul.mubr.f32.gmra.mrb[0].mxu0 %v53
  %v148 = vpop.f32.mrb[0].mxu0
  %v149 = vadd.f32 %v33, %v148
  %v150 = vpop.f32.mrb[0].mxu0
  %v151 = vadd.f32 %v37, %v150
  %152 = vmatprep.mubr.f32.mxu0 0.0
  %153 = vmatmul.mubr.f32.gmra.mrb[0].mxu0 %v56
  %v154 = vpop.f32.mrb[0].mxu0
  %v155 = vadd.f32 %v33, %v154
  %v156 = vpop.f32.mrb[0].mxu0
  %v157 = vadd.f32 %v37, %v156
  %158 = vmatprep.mubr.f32.mxu0 0.0
  %159 = vmatmul.mubr.f32.gmra.mrb[0].mxu0 %v59
  %v160 = vpop.f32.mrb[0].mxu0
  %v161 = vadd.f32 %v33, %v160
  %v162 = vpop.f32.mrb[0].mxu0
  %v163 = vadd.f32 %v37, %v162
  %164 = vmatprep.mubr.f32.mxu0 0.0
  %165 = vmatmul.mubr.f32.gmra.mrb[0].mxu0 %v62
  %v166 = vpop.f32.mrb[0].mxu0
  %v167 = vadd.f32 %v33, %v166
  %v168 = vpop.f32.mrb[0].mxu0
  %v169 = vadd.f32 %v37, %v168
  %170 = vmatprep.mubr.f32.mxu0 0.0
  %171 = vmatmul.mubr.f32.gmra.mrb[0].mxu0 %v65
  %v172 = vpop.f32.mrb[0].mxu0
  %v173 = vadd.f32 %v33, %v172
  %v174 = vpop.f32.mrb[0].mxu0
  %v175 = vadd.f32 %v37, %v174
  %176 = vmatprep.mubr.f32.mxu0 0.0
  %177 = vmatmul.mubr.f32.gmra.mrb[0].mxu0 %v68
  %v178 = vpop.f32.mrb[0].mxu0
  %v179 = vadd.f32 %v33, %v178
  %v180 = vpop.f32.mrb[0].mxu0
  %v181 = vadd.f32 %v37, %v180
  %182 = vdwg.mxu0
  %183 = vmatprep.subr.mxu0 0.0
  %184 = vmatpush1.msra.mxu0 %v24
  %185 = vmatprep.subr.mxu0 0.0
  %186 = vmatpush1.msra.mxu0 %v27
  %187 = vmatprep.subr.mxu0 0.0
  %188 = vmatpush1.msra.mxu0 0.0
  %189 = vmatprep.subr.mxu0 0.0
  %190 = vmatpush1.msra.mxu0 0.0
  %191 = vmatprep.subr.mxu0 0.0
  %192 = vmatpush1.msra.mxu0 0.0
  %193 = vmatprep.subr.mxu0 0.0
  %194 = vmatpush1.msra.mxu0 0.0
  %195 = vmatprep.subr.mxu0 0.0
  %196 = vmatpush1.msra.mxu0 0.0
  %197 = vmatprep.subr.mxu0 0.0
  %198 = vmatpush1.msra.mxu0 0.0
  %199 = vmatprep.subr.mxu0 0.0
  %200 = vmatpush1.msra.mxu0 0.0
  %201 = vmatprep.subr.mxu0 0.0
  %202 = vmatpush1.msra.mxu0 0.0
  %203 = vmatprep.subr.mxu0 0.0
  %204 = vmatpush1.msra.mxu0 0.0
  %205 = vmatprep.subr.mxu0 0.0
  %206 = vmatpush1.msra.mxu0 0.0
  %207 = vmatprep.subr.mxu0 0.0
  %208 = vmatpush1.msra.mxu0 0.0
  %209 = vmatprep.subr.mxu0 0.0
  %210 = vmatpush1.msra.mxu0 0.0
  %211 = vmatprep.subr.mxu0 0.0
  %212 = vmatpush1.msra.mxu0 0.0
  %213 = vmatprep.subr.mxu0 0.0
  %214 = vmatpush1.msra.mxu0 0.0
  %215 = vmatprep.subr.mxu0 0.0
  %216 = vmatpush1.msra.mxu0 0.0
  %217 = vmatprep.subr.mxu0 0.0
  %218 = vmatpush1.msra.mxu0 0.0
  %219 = vmatprep.subr.mxu0 0.0
  %220 = vmatpush1.msra.mxu0 0.0
  %221 = vmatprep.subr.mxu0 0.0
  %222 = vmatpush1.msra.mxu0 0.0
  %223 = vmatprep.subr.mxu0 0.0
  %224 = vmatpush1.msra.mxu0 0.0
  %225 = vmatprep.subr.mxu0 0.0
  %226 = vmatpush1.msra.mxu0 0.0
  %227 = vmatprep.subr.mxu0 0.0
  %228 = vmatpush1.msra.mxu0 0.0
  %229 = vmatprep.subr.mxu0 0.0
  %230 = vmatpush1.msra.mxu0 0.0
  %231 = vmatprep.subr.mxu0 0.0
  %232 = vmatpush1.msra.mxu0 0.0
  %233 = vmatprep.subr.mxu0 0.0
  %234 = vmatpush1.msra.mxu0 0.0
  %235 = vmatprep.subr.mxu0 0.0
  %236 = vmatpush1.msra.mxu0 0.0
  %237 = vmatprep.subr.mxu0 0.0
  %238 = vmatpush1.msra.mxu0 0.0
  %239 = vmatprep.subr.mxu0 0.0
  %240 = vmatpush1.msra.mxu0 0.0
  %241 = vmatprep.subr.mxu0 0.0
  %242 = vmatpush1.msra.mxu0 0.0
  %243 = vmatprep.subr.mxu0 0.0
  %244 = vmatpush1.msra.mxu0 0.0
  %245 = vmatprep.subr.mxu0 0.0
  %246 = vmatpush1.msra.mxu0 0.0
  %247 = vmatprep.mubr.f32.mxu0 0.0
  %248 = vmatmul.mubr.f32.gmra.mrb[0].mxu0 %v47
  %v249 = vpop.f32.mrb[0].mxu0
  %v250 = vadd.f32 %v41, %v249
  %v251 = vpop.f32.mrb[0].mxu0
  %252 = vmatprep.mubr.f32.mxu0 0.0
  %253 = vmatmul.mubr.f32.gmra.mrb[0].mxu0 %v50
  %v254 = vpop.f32.mrb[0].mxu0
  %v255 = vadd.f32 %v41, %v254
  %v256 = vpop.f32.mrb[0].mxu0
  %257 = vmatprep.mubr.f32.mxu0 0.0
  %258 = vmatmul.mubr.f32.gmra.mrb[0].mxu0 %v53
  %v259 = vpop.f32.mrb[0].mxu0
  %v260 = vadd.f32 %v41, %v259
  %v261 = vpop.f32.mrb[0].mxu0
  %262 = vmatprep.mubr.f32.mxu0 0.0
  %263 = vmatmul.mubr.f32.gmra.mrb[0].mxu0 %v56
  %v264 = vpop.f32.mrb[0].mxu0
  %v265 = vadd.f32 %v41, %v264
  %v266 = vpop.f32.mrb[0].mxu0
  %267 = vmatprep.mubr.f32.mxu0 0.0
  %268 = vmatmul.mubr.f32.gmra.mrb[0].mxu0 %v59
  %v269 = vpop.f32.mrb[0].mxu0
  %v270 = vadd.f32 %v41, %v269
  %v271 = vpop.f32.mrb[0].mxu0
  %272 = vmatprep.mubr.f32.mxu0 0.0
  %273 = vmatmul.mubr.f32.gmra.mrb[0].mxu0 %v62
  %v274 = vpop.f32.mrb[0].mxu0
  %v275 = vadd.f32 %v41, %v274
  %v276 = vpop.f32.mrb[0].mxu0
  %277 = vmatprep.mubr.f32.mxu0 0.0
  %278 = vmatmul.mubr.f32.gmra.mrb[0].mxu0 %v65
  %v279 = vpop.f32.mrb[0].mxu0
  %v280 = vadd.f32 %v41, %v279
  %v281 = vpop.f32.mrb[0].mxu0
  %282 = vmatprep.mubr.f32.mxu0 0.0
  %283 = vmatmul.mubr.f32.gmra.mrb[0].mxu0 %v68
  %v284 = vpop.f32.mrb[0].mxu0
  %v285 = vadd.f32 %v41, %v284
  %v286 = vpop.f32.mrb[0].mxu0
  %287 = vdwg.mxu0
  %288 = vst [vmem:[%s3] sm:$0xff] %v137
  %289 = vst [vmem:[%s3 + $0x8] sm:$0xff] %v139
  %290 = vst [vmem:[%s3 + $0x10] sm:$0xff] %v250
  %291 = vst [vmem:[%s3 + $0x18] sm:$0xff] %v143
  %292 = vst [vmem:[%s3 + $0x20] sm:$0xff] %v145
  %293 = vst [vmem:[%s3 + $0x28] sm:$0xff] %v255
  %294 = vst [vmem:[%s3 + $0x30] sm:$0xff] %v149
  %295 = vst [vmem:[%s3 + $0x38] sm:$0xff] %v151
  %296 = vst [vmem:[%s3 + $0x40] sm:$0xff] %v260
  %297 = vst [vmem:[%s3 + $0x48] sm:$0xff] %v155
  %298 = vst [vmem:[%s3 + $0x50] sm:$0xff] %v157
  %299 = vst [vmem:[%s3 + $0x58] sm:$0xff] %v265
  %300 = vst [vmem:[%s3 + $0x60] sm:$0xff] %v161
  %301 = vst [vmem:[%s3 + $0x68] sm:$0xff] %v163
  %302 = vst [vmem:[%s3 + $0x70] sm:$0xff] %v270
  %303 = vst [vmem:[%s3 + $0x78] sm:$0xff] %v167
  %304 = vst [vmem:[%s3 + $0x80] sm:$0xff] %v169
  %305 = vst [vmem:[%s3 + $0x88] sm:$0xff] %v275
  %306 = vst [vmem:[%s3 + $0x90] sm:$0xff] %v173
  %307 = vst [vmem:[%s3 + $0x98] sm:$0xff] %v175
  %308 = vst [vmem:[%s3 + $0xa0] sm:$0xff] %v280
  %309 = vst [vmem:[%s3 + $0xa8] sm:$0xff] %v179
  %310 = vst [vmem:[%s3 + $0xb0] sm:$0xff] %v181
  %311 = vst [vmem:[%s3 + $0xb8] sm:$0xff] %v285
  // Predicated region
  $region14: #{gru_model_forward.6} parent=0 // pred_check
    _
  $region15: #{gru_model_forward.6} parent=0 // pred_check_branch
    %313 = sbr.rel (0) target = $region17
  $region16: #{gru_model_forward.6} parent=0 // pred_region
    _
  $region17: #{gru_model_forward.6} parent=0 // pred_fallthru
    _
  // Predicated region
  $region18: #{gru_model_forward.6} parent=0 // pred_check
    _
  $region19: #{gru_model_forward.6} parent=0 // pred_check_branch
    %315 = sbr.rel (0) target = $region21
  $region20: #{gru_model_forward.6} parent=0 // pred_region
    _
  $region21: #{gru_model_forward.6} parent=0 // pred_fallthru
    _

// kernel: gru_model_forward.8
$region0: #{gru_model_forward.8}
  #allocation0 [shape = 'u32[]', space=smem, size = 0x4, offset = 0x4, fixed_abs, tag = 'smem constant byte address 0x4 - core index']
  #allocation1 [shape = 'u32[144,128]{1,0:T(1,128)}', space=vmem, size = 0x12000, scoped, tag = 'internal scratch']
  %s0 = inlined_call_operand.vmem [shape: f32[64,128], index: 0, kind: input, shape index: {}]
  %s1 = inlined_call_operand.vmem [shape: f32[128,384], index: 1, kind: input, shape index: {}]
  %s2 = inlined_call_operand.vmem [shape: f32[1,384], index: 2, kind: input, shape index: {}]
  %s3 = inlined_call_operand.vmem [shape: f32[64,384], index: 3, kind: output, shape index: {}]
  %s4 = sld [smem:[#allocation0]]
  $region22: #{gru_model_forward.8} parent=0
    _
  %s6 = ssub.s32 1, %s4
  %s7 = scalar_select 0, %s6, %s4
  // Predicated region
  $region2: #{gru_model_forward.8} parent=0 // pred_check
    _
  $region3: #{gru_model_forward.8} parent=0 // pred_check_branch
    %9 = sbr.rel (0) target = $region5
  $region4: #{gru_model_forward.8} parent=0 // pred_region
    _
  $region5: #{gru_model_forward.8} parent=0 // pred_fallthru
    _
  // Predicated region
  $region6: #{gru_model_forward.8} parent=0 // pred_check
    _
  $region7: #{gru_model_forward.8} parent=0 // pred_check_branch
    %11 = sbr.rel (0) target = $region9
  $region8: #{gru_model_forward.8} parent=0 // pred_region
    _
  $region9: #{gru_model_forward.8} parent=0 // pred_fallthru
    _
  // Predicated region
  $region10: #{gru_model_forward.8} parent=0 // pred_check
    _
  $region11: #{gru_model_forward.8} parent=0 // pred_check_branch
    %13 = sbr.rel (0) target = $region13
  $region12: #{gru_model_forward.8} parent=0 // pred_region
    _
  $region13: #{gru_model_forward.8} parent=0 // pred_fallthru
    _
  %v14 = vld [vmem:[%s0] sm:$0xff]
  %v15 = vld [vmem:[%s0 + $0x8] sm:$0xff]
  %v16 = vld [vmem:[%s0 + $0x10] sm:$0xff]
  %v17 = vld [vmem:[%s0 + $0x18] sm:$0xff]
  %v18 = vld [vmem:[%s0 + $0x20] sm:$0xff]
  %v19 = vld [vmem:[%s0 + $0x28] sm:$0xff]
  %v20 = vld [vmem:[%s0 + $0x30] sm:$0xff]
  %v21 = vld [vmem:[%s0 + $0x38] sm:$0xff]
  %v22 = vld [vmem:[%s1] sm:$0xff]
  %v23 = vld [vmem:[%s1 + $0x8] sm:$0xff]
  %v24 = vld [vmem:[%s1 + $0x10] sm:$0xff]
  %v25 = vld [vmem:[%s1 + $0x18] sm:$0xff]
  %v26 = vld [vmem:[%s1 + $0x20] sm:$0xff]
  %v27 = vld [vmem:[%s1 + $0x28] sm:$0xff]
  %v28 = vld [vmem:[%s1 + $0x30] sm:$0xff]
  %v29 = vld [vmem:[%s1 + $0x38] sm:$0xff]
  %v30 = vld [vmem:[%s1 + $0x40] sm:$0xff]
  %v31 = vld [vmem:[%s1 + $0x48] sm:$0xff]
  %v32 = vld [vmem:[%s1 + $0x50] sm:$0xff]
  %v33 = vld [vmem:[%s1 + $0x58] sm:$0xff]
  %v34 = vld [vmem:[%s1 + $0x60] sm:$0xff]
  %v35 = vld [vmem:[%s1 + $0x68] sm:$0xff]
  %v36 = vld [vmem:[%s1 + $0x70] sm:$0xff]
  %v37 = vld [vmem:[%s1 + $0x78] sm:$0xff]
  %v38 = vld [vmem:[%s1 + $0x80] sm:$0xff]
  %v39 = vld [vmem:[%s1 + $0x88] sm:$0xff]
  %v40 = vld [vmem:[%s1 + $0x90] sm:$0xff]
  %v41 = vld [vmem:[%s1 + $0x98] sm:$0xff]
  %v42 = vld [vmem:[%s1 + $0xa0] sm:$0xff]
  %v43 = vld [vmem:[%s1 + $0xa8] sm:$0xff]
  %v44 = vld [vmem:[%s1 + $0xb0] sm:$0xff]
  %v45 = vld [vmem:[%s1 + $0xb8] sm:$0xff]
  %v46 = vld [vmem:[%s1 + $0xc0] sm:$0xff]
  %v47 = vld [vmem:[%s1 + $0xc8] sm:$0xff]
  %v48 = vld [vmem:[%s1 + $0xd0] sm:$0xff]
  %v49 = vld [vmem:[%s1 + $0xd8] sm:$0xff]
  %v50 = vld [vmem:[%s1 + $0xe0] sm:$0xff]
  %v51 = vld [vmem:[%s1 + $0xe8] sm:$0xff]
  %v52 = vld [vmem:[%s1 + $0xf0] sm:$0xff]
  %v53 = vld [vmem:[%s1 + $0xf8] sm:$0xff]
  %v54 = vld [vmem:[%s1 + $0x100] sm:$0xff]
  %v55 = vld [vmem:[%s1 + $0x108] sm:$0xff]
  %v56 = vld [vmem:[%s1 + $0x110] sm:$0xff]
  %v57 = vld [vmem:[%s1 + $0x118] sm:$0xff]
  %v58 = vld [vmem:[%s1 + $0x120] sm:$0xff]
  %v59 = vld [vmem:[%s1 + $0x128] sm:$0xff]
  %v60 = vld [vmem:[%s1 + $0x130] sm:$0xff]
  %v61 = vld [vmem:[%s1 + $0x138] sm:$0xff]
  %v62 = vld [vmem:[%s1 + $0x140] sm:$0xff]
  %v63 = vld [vmem:[%s1 + $0x148] sm:$0xff]
  %v64 = vld [vmem:[%s1 + $0x150] sm:$0xff]
  %v65 = vld [vmem:[%s1 + $0x158] sm:$0xff]
  %v66 = vld [vmem:[%s1 + $0x160] sm:$0xff]
  %v67 = vld [vmem:[%s1 + $0x168] sm:$0xff]
  %v68 = vld [vmem:[%s1 + $0x170] sm:$0xff]
  %v69 = vld [vmem:[%s1 + $0x178] sm:$0xff]
  %v70 = vld [vmem:[%s2] sm:$0x7]
  %v72 = vlaneseq
  %v73 = vshrl.u32 %v72, 7
  %v74 = vsub.s32 0, %v73
  %v75 = vrot.slane %v70, %v74
  %v76 = vlaneseq
  %v77 = vshrl.u32 %v76, 7
  %v78 = vsub.s32 1, %v77
  %v79 = vrot.slane %v70, %v78
  %v80 = vlaneseq
  %v81 = vshrl.u32 %v80, 7
  %v82 = vsub.s32 2, %v81
  %v83 = vrot.slane %v70, %v82
  %87 = vmatprep.subr.mxu0 %v23
  %88 = vmatpush1.msra.mxu0 %v22
  %89 = vmatprep.subr.mxu0 %v26
  %90 = vmatpush1.msra.mxu0 %v25
  %91 = vmatprep.subr.mxu0 %v29
  %92 = vmatpush1.msra.mxu0 %v28
  %93 = vmatprep.subr.mxu0 %v32
  %94 = vmatpush1.msra.mxu0 %v31
  %95 = vmatprep.subr.mxu0 %v35
  %96 = vmatpush1.msra.mxu0 %v34
  %97 = vmatprep.subr.mxu0 %v38
  %98 = vmatpush1.msra.mxu0 %v37
  %99 = vmatprep.subr.mxu0 %v41
  %100 = vmatpush1.msra.mxu0 %v40
  %101 = vmatprep.subr.mxu0 %v44
  %102 = vmatpush1.msra.mxu0 %v43
  %103 = vmatprep.subr.mxu0 %v47
  %104 = vmatpush1.msra.mxu0 %v46
  %105 = vmatprep.subr.mxu0 %v50
  %106 = vmatpush1.msra.mxu0 %v49
  %107 = vmatprep.subr.mxu0 %v53
  %108 = vmatpush1.msra.mxu0 %v52
  %109 = vmatprep.subr.mxu0 %v56
  %110 = vmatpush1.msra.mxu0 %v55
  %111 = vmatprep.subr.mxu0 %v59
  %112 = vmatpush1.msra.mxu0 %v58
  %113 = vmatprep.subr.mxu0 %v62
  %114 = vmatpush1.msra.mxu0 %v61
  %115 = vmatprep.subr.mxu0 %v65
  %116 = vmatpush1.msra.mxu0 %v64
  %117 = vmatprep.subr.mxu0 %v68
  %118 = vmatpush1.msra.mxu0 %v67
  %119 = vmatprep.subr.mxu0 0.0
  %120 = vmatpush1.msra.mxu0 0.0
  %121 = vmatprep.subr.mxu0 0.0
  %122 = vmatpush1.msra.mxu0 0.0
  %123 = vmatprep.subr.mxu0 0.0
  %124 = vmatpush1.msra.mxu0 0.0
  %125 = vmatprep.subr.mxu0 0.0
  %126 = vmatpush1.msra.mxu0 0.0
  %127 = vmatprep.subr.mxu0 0.0
  %128 = vmatpush1.msra.mxu0 0.0
  %129 = vmatprep.subr.mxu0 0.0
  %130 = vmatpush1.msra.mxu0 0.0
  %131 = vmatprep.subr.mxu0 0.0
  %132 = vmatpush1.msra.mxu0 0.0
  %133 = vmatprep.subr.mxu0 0.0
  %134 = vmatpush1.msra.mxu0 0.0
  %135 = vmatprep.subr.mxu0 0.0
  %136 = vmatpush1.msra.mxu0 0.0
  %137 = vmatprep.subr.mxu0 0.0
  %138 = vmatpush1.msra.mxu0 0.0
  %139 = vmatprep.subr.mxu0 0.0
  %140 = vmatpush1.msra.mxu0 0.0
  %141 = vmatprep.subr.mxu0 0.0
  %142 = vmatpush1.msra.mxu0 0.0
  %143 = vmatprep.subr.mxu0 0.0
  %144 = vmatpush1.msra.mxu0 0.0
  %145 = vmatprep.subr.mxu0 0.0
  %146 = vmatpush1.msra.mxu0 0.0
  %147 = vmatprep.subr.mxu0 0.0
  %148 = vmatpush1.msra.mxu0 0.0
  %149 = vmatprep.subr.mxu0 0.0
  %150 = vmatpush1.msra.mxu0 0.0
  %151 = vmatprep.mubr.f32.mxu0 0.0
  %152 = vmatmul.mubr.f32.gmra.mrb[0].mxu0 %v14
  %v153 = vpop.f32.mrb[0].mxu0
  %v154 = vadd.f32 %v75, %v153
  %v155 = vpop.f32.mrb[0].mxu0
  %v156 = vadd.f32 %v79, %v155
  %157 = vmatprep.mubr.f32.mxu0 0.0
  %158 = vmatmul.mubr.f32.gmra.mrb[0].mxu0 %v15
  %v159 = vpop.f32.mrb[0].mxu0
  %v160 = vadd.f32 %v75, %v159
  %v161 = vpop.f32.mrb[0].mxu0
  %v162 = vadd.f32 %v79, %v161
  %163 = vmatprep.mubr.f32.mxu0 0.0
  %164 = vmatmul.mubr.f32.gmra.mrb[0].mxu0 %v16
  %v165 = vpop.f32.mrb[0].mxu0
  %v166 = vadd.f32 %v75, %v165
  %v167 = vpop.f32.mrb[0].mxu0
  %v168 = vadd.f32 %v79, %v167
  %169 = vmatprep.mubr.f32.mxu0 0.0
  %170 = vmatmul.mubr.f32.gmra.mrb[0].mxu0 %v17
  %v171 = vpop.f32.mrb[0].mxu0
  %v172 = vadd.f32 %v75, %v171
  %v173 = vpop.f32.mrb[0].mxu0
  %v174 = vadd.f32 %v79, %v173
  %175 = vmatprep.mubr.f32.mxu0 0.0
  %176 = vmatmul.mubr.f32.gmra.mrb[0].mxu0 %v18
  %v177 = vpop.f32.mrb[0].mxu0
  %v178 = vadd.f32 %v75, %v177
  %v179 = vpop.f32.mrb[0].mxu0
  %v180 = vadd.f32 %v79, %v179
  %181 = vmatprep.mubr.f32.mxu0 0.0
  %182 = vmatmul.mubr.f32.gmra.mrb[0].mxu0 %v19
  %v183 = vpop.f32.mrb[0].mxu0
  %v184 = vadd.f32 %v75, %v183
  %v185 = vpop.f32.mrb[0].mxu0
  %v186 = vadd.f32 %v79, %v185
  %187 = vmatprep.mubr.f32.mxu0 0.0
  %188 = vmatmul.mubr.f32.gmra.mrb[0].mxu0 %v20
  %v189 = vpop.f32.mrb[0].mxu0
  %v190 = vadd.f32 %v75, %v189
  %v191 = vpop.f32.mrb[0].mxu0
  %v192 = vadd.f32 %v79, %v191
  %193 = vmatprep.mubr.f32.mxu0 0.0
  %194 = vmatmul.mubr.f32.gmra.mrb[0].mxu0 %v21
  %v195 = vpop.f32.mrb[0].mxu0
  %v196 = vadd.f32 %v75, %v195
  %v197 = vpop.f32.mrb[0].mxu0
  %v198 = vadd.f32 %v79, %v197
  %199 = vdwg.mxu0
  %200 = vmatprep.subr.mxu0 0.0
  %201 = vmatpush1.msra.mxu0 %v24
  %202 = vmatprep.subr.mxu0 0.0
  %203 = vmatpush1.msra.mxu0 %v27
  %204 = vmatprep.subr.mxu0 0.0
  %205 = vmatpush1.msra.mxu0 %v30
  %206 = vmatprep.subr.mxu0 0.0
  %207 = vmatpush1.msra.mxu0 %v33
  %208 = vmatprep.subr.mxu0 0.0
  %209 = vmatpush1.msra.mxu0 %v36
  %210 = vmatprep.subr.mxu0 0.0
  %211 = vmatpush1.msra.mxu0 %v39
  %212 = vmatprep.subr.mxu0 0.0
  %213 = vmatpush1.msra.mxu0 %v42
  %214 = vmatprep.subr.mxu0 0.0
  %215 = vmatpush1.msra.mxu0 %v45
  %216 = vmatprep.subr.mxu0 0.0
  %217 = vmatpush1.msra.mxu0 %v48
  %218 = vmatprep.subr.mxu0 0.0
  %219 = vmatpush1.msra.mxu0 %v51
  %220 = vmatprep.subr.mxu0 0.0
  %221 = vmatpush1.msra.mxu0 %v54
  %222 = vmatprep.subr.mxu0 0.0
  %223 = vmatpush1.msra.mxu0 %v57
  %224 = vmatprep.subr.mxu0 0.0
  %225 = vmatpush1.msra.mxu0 %v60
  %226 = vmatprep.subr.mxu0 0.0
  %227 = vmatpush1.msra.mxu0 %v63
  %228 = vmatprep.subr.mxu0 0.0
  %229 = vmatpush1.msra.mxu0 %v66
  %230 = vmatprep.subr.mxu0 0.0
  %231 = vmatpush1.msra.mxu0 %v69
  %232 = vmatprep.subr.mxu0 0.0
  %233 = vmatpush1.msra.mxu0 0.0
  %234 = vmatprep.subr.mxu0 0.0
  %235 = vmatpush1.msra.mxu0 0.0
  %236 = vmatprep.subr.mxu0 0.0
  %237 = vmatpush1.msra.mxu0 0.0
  %238 = vmatprep.subr.mxu0 0.0
  %239 = vmatpush1.msra.mxu0 0.0
  %240 = vmatprep.subr.mxu0 0.0
  %241 = vmatpush1.msra.mxu0 0.0
  %242 = vmatprep.subr.mxu0 0.0
  %243 = vmatpush1.msra.mxu0 0.0
  %244 = vmatprep.subr.mxu0 0.0
  %245 = vmatpush1.msra.mxu0 0.0
  %246 = vmatprep.subr.mxu0 0.0
  %247 = vmatpush1.msra.mxu0 0.0
  %248 = vmatprep.subr.mxu0 0.0
  %249 = vmatpush1.msra.mxu0 0.0
  %250 = vmatprep.subr.mxu0 0.0
  %251 = vmatpush1.msra.mxu0 0.0
  %252 = vmatprep.subr.mxu0 0.0
  %253 = vmatpush1.msra.mxu0 0.0
  %254 = vmatprep.subr.mxu0 0.0
  %255 = vmatpush1.msra.mxu0 0.0
  %256 = vmatprep.subr.mxu0 0.0
  %257 = vmatpush1.msra.mxu0 0.0
  %258 = vmatprep.subr.mxu0 0.0
  %259 = vmatpush1.msra.mxu0 0.0
  %260 = vmatprep.subr.mxu0 0.0
  %261 = vmatpush1.msra.mxu0 0.0
  %262 = vmatprep.subr.mxu0 0.0
  %263 = vmatpush1.msra.mxu0 0.0
  %264 = vmatprep.mubr.f32.mxu0 0.0
  %265 = vmatmul.mubr.f32.gmra.mrb[0].mxu0 %v14
  %v266 = vpop.f32.mrb[0].mxu0
  %v267 = vadd.f32 %v83, %v266
  %v268 = vpop.f32.mrb[0].mxu0
  %269 = vmatprep.mubr.f32.mxu0 0.0
  %270 = vmatmul.mubr.f32.gmra.mrb[0].mxu0 %v15
  %v271 = vpop.f32.mrb[0].mxu0
  %v272 = vadd.f32 %v83, %v271
  %v273 = vpop.f32.mrb[0].mxu0
  %274 = vmatprep.mubr.f32.mxu0 0.0
  %275 = vmatmul.mubr.f32.gmra.mrb[0].mxu0 %v16
  %v276 = vpop.f32.mrb[0].mxu0
  %v277 = vadd.f32 %v83, %v276
  %v278 = vpop.f32.mrb[0].mxu0
  %279 = vmatprep.mubr.f32.mxu0 0.0
  %280 = vmatmul.mubr.f32.gmra.mrb[0].mxu0 %v17
  %v281 = vpop.f32.mrb[0].mxu0
  %v282 = vadd.f32 %v83, %v281
  %v283 = vpop.f32.mrb[0].mxu0
  %284 = vmatprep.mubr.f32.mxu0 0.0
  %285 = vmatmul.mubr.f32.gmra.mrb[0].mxu0 %v18
  %v286 = vpop.f32.mrb[0].mxu0
  %v287 = vadd.f32 %v83, %v286
  %v288 = vpop.f32.mrb[0].mxu0
  %289 = vmatprep.mubr.f32.mxu0 0.0
  %290 = vmatmul.mubr.f32.gmra.mrb[0].mxu0 %v19
  %v291 = vpop.f32.mrb[0].mxu0
  %v292 = vadd.f32 %v83, %v291
  %v293 = vpop.f32.mrb[0].mxu0
  %294 = vmatprep.mubr.f32.mxu0 0.0
  %295 = vmatmul.mubr.f32.gmra.mrb[0].mxu0 %v20
  %v296 = vpop.f32.mrb[0].mxu0
  %v297 = vadd.f32 %v83, %v296
  %v298 = vpop.f32.mrb[0].mxu0
  %299 = vmatprep.mubr.f32.mxu0 0.0
  %300 = vmatmul.mubr.f32.gmra.mrb[0].mxu0 %v21
  %v301 = vpop.f32.mrb[0].mxu0
  %v302 = vadd.f32 %v83, %v301
  %v303 = vpop.f32.mrb[0].mxu0
  %304 = vdwg.mxu0
  %305 = vst [vmem:[%s3] sm:$0xff] %v154
  %306 = vst [vmem:[%s3 + $0x8] sm:$0xff] %v156
  %307 = vst [vmem:[%s3 + $0x10] sm:$0xff] %v267
  %308 = vst [vmem:[%s3 + $0x18] sm:$0xff] %v160
  %309 = vst [vmem:[%s3 + $0x20] sm:$0xff] %v162
  %310 = vst [vmem:[%s3 + $0x28] sm:$0xff] %v272
  %311 = vst [vmem:[%s3 + $0x30] sm:$0xff] %v166
  %312 = vst [vmem:[%s3 + $0x38] sm:$0xff] %v168
  %313 = vst [vmem:[%s3 + $0x40] sm:$0xff] %v277
  %314 = vst [vmem:[%s3 + $0x48] sm:$0xff] %v172
  %315 = vst [vmem:[%s3 + $0x50] sm:$0xff] %v174
  %316 = vst [vmem:[%s3 + $0x58] sm:$0xff] %v282
  %317 = vst [vmem:[%s3 + $0x60] sm:$0xff] %v178
  %318 = vst [vmem:[%s3 + $0x68] sm:$0xff] %v180
  %319 = vst [vmem:[%s3 + $0x70] sm:$0xff] %v287
  %320 = vst [vmem:[%s3 + $0x78] sm:$0xff] %v184
  %321 = vst [vmem:[%s3 + $0x80] sm:$0xff] %v186
  %322 = vst [vmem:[%s3 + $0x88] sm:$0xff] %v292
  %323 = vst [vmem:[%s3 + $0x90] sm:$0xff] %v190
  %324 = vst [vmem:[%s3 + $0x98] sm:$0xff] %v192
  %325 = vst [vmem:[%s3 + $0xa0] sm:$0xff] %v297
  %326 = vst [vmem:[%s3 + $0xa8] sm:$0xff] %v196
  %327 = vst [vmem:[%s3 + $0xb0] sm:$0xff] %v198
  %328 = vst [vmem:[%s3 + $0xb8] sm:$0xff] %v302
  // Predicated region
  $region14: #{gru_model_forward.8} parent=0 // pred_check
    _
  $region15: #{gru_model_forward.8} parent=0 // pred_check_branch
    %330 = sbr.rel (0) target = $region17
  $region16: #{gru_model_forward.8} parent=0 // pred_region
    _
  $region17: #{gru_model_forward.8} parent=0 // pred_fallthru
    _
  // Predicated region
  $region18: #{gru_model_forward.8} parent=0 // pred_check
    _
  $region19: #{gru_model_forward.8} parent=0 // pred_check_branch
    %332 = sbr.rel (0) target = $region21
  $region20: #{gru_model_forward.8} parent=0 // pred_region
    _
  $region21: #{gru_model_forward.8} parent=0 // pred_fallthru
    _

// kernel: gru_model_forward.11
$region0: #{gru_model_forward.11}
  #allocation0 [shape = 'u32[]', space=smem, size = 0x4, offset = 0x4, fixed_abs, tag = 'smem constant byte address 0x4 - core index']
  #allocation1 [shape = 'u32[144,128]{1,0:T(1,128)}', space=vmem, size = 0x12000, scoped, tag = 'internal scratch']
  #allocation2 [shape = 'f32[8,128]{1,0:T(8,128)}', space=vmem, size = 0x1000, scoped, tag = 'scratch operand']
  %s0 = inlined_call_operand.vmem [shape: f32[8,8,384], index: 0, kind: input, shape index: {}]
  %s1 = inlined_call_operand.vmem [shape: f32[128,384], index: 1, kind: input, shape index: {}]
  %s2 = inlined_call_operand.vmem [shape: f32[1,128], index: 2, kind: input, shape index: {}]
  %s3 = inlined_call_operand.vmem [shape: f32[128,4], index: 3, kind: input, shape index: {}]
  %s4 = inlined_call_operand.vmem [shape: f32[1,4], index: 4, kind: input, shape index: {}]
  %s5 = inlined_call_operand.vmem [shape: f32[8,4], index: 5, kind: output, shape index: {}]
  %s6 = sld [smem:[#allocation0]]
  $region38: #{gru_model_forward.11} parent=0
    _
  %s8 = ssub.s32 1, %s6
  %s9 = scalar_select 0, %s8, %s6
  // Predicated region
  $region2: #{gru_model_forward.11} parent=0 // pred_check
    _
  $region3: #{gru_model_forward.11} parent=0 // pred_check_branch
    %11 = sbr.rel (0) target = $region5
  $region4: #{gru_model_forward.11} parent=0 // pred_region
    _
  $region5: #{gru_model_forward.11} parent=0 // pred_fallthru
    _
  // Predicated region
  $region6: #{gru_model_forward.11} parent=0 // pred_check
    _
  $region7: #{gru_model_forward.11} parent=0 // pred_check_branch
    %13 = sbr.rel (0) target = $region9
  $region8: #{gru_model_forward.11} parent=0 // pred_region
    _
  $region9: #{gru_model_forward.11} parent=0 // pred_fallthru
    _
  // Predicated region
  $region10: #{gru_model_forward.11} parent=0 // pred_check
    _
  $region11: #{gru_model_forward.11} parent=0 // pred_check_branch
    %15 = sbr.rel (0) target = $region13
  $region12: #{gru_model_forward.11} parent=0 // pred_region
    _
  $region13: #{gru_model_forward.11} parent=0 // pred_fallthru
    _
  // Predicated region
  $region14: #{gru_model_forward.11} parent=0 // pred_check
    _
  $region15: #{gru_model_forward.11} parent=0 // pred_check_branch
    %17 = sbr.rel (0) target = $region17
  $region16: #{gru_model_forward.11} parent=0 // pred_region
    _
  $region17: #{gru_model_forward.11} parent=0 // pred_fallthru
    _
  // Predicated region
  $region18: #{gru_model_forward.11} parent=0 // pred_check
    _
  $region19: #{gru_model_forward.11} parent=0 // pred_check_branch
    %19 = sbr.rel (0) target = $region21
  $region20: #{gru_model_forward.11} parent=0 // pred_region
    _
  $region21: #{gru_model_forward.11} parent=0 // pred_fallthru
    _
  %p20 = scmp.eq.s32.totalorder 0, 0
  // Predicated region
  $region22: #{gru_model_forward.11} parent=0 // pred_check
    %p21 = pneg %p20
  $region23: #{gru_model_forward.11} parent=0 // pred_check_branch
    %23 = sbr.rel (%p21) target = $region25
  $region24: #{gru_model_forward.11} parent=0 // pred_region
    %24 = vst [vmem:[#allocation2] sm:$0xff] 0.0
  $region25: #{gru_model_forward.11} parent=0 // pred_fallthru
    _
  %v25 = vld [vmem:[%s1] sm:$0xff]
  %v26 = vld [vmem:[%s1 + $0x8] sm:$0xff]
  %v27 = vld [vmem:[%s1 + $0x10] sm:$0xff]
  %v28 = vld [vmem:[%s1 + $0x18] sm:$0xff]
  %v29 = vld [vmem:[%s1 + $0x20] sm:$0xff]
  %v30 = vld [vmem:[%s1 + $0x28] sm:$0xff]
  %v31 = vld [vmem:[%s1 + $0x30] sm:$0xff]
  %v32 = vld [vmem:[%s1 + $0x38] sm:$0xff]
  %v33 = vld [vmem:[%s1 + $0x40] sm:$0xff]
  %v34 = vld [vmem:[%s1 + $0x48] sm:$0xff]
  %v35 = vld [vmem:[%s1 + $0x50] sm:$0xff]
  %v36 = vld [vmem:[%s1 + $0x58] sm:$0xff]
  %v37 = vld [vmem:[%s1 + $0x60] sm:$0xff]
  %v38 = vld [vmem:[%s1 + $0x68] sm:$0xff]
  %v39 = vld [vmem:[%s1 + $0x70] sm:$0xff]
  %v40 = vld [vmem:[%s1 + $0x78] sm:$0xff]
  %v41 = vld [vmem:[%s1 + $0x80] sm:$0xff]
  %v42 = vld [vmem:[%s1 + $0x88] sm:$0xff]
  %v43 = vld [vmem:[%s1 + $0x90] sm:$0xff]
  %v44 = vld [vmem:[%s1 + $0x98] sm:$0xff]
  %v45 = vld [vmem:[%s1 + $0xa0] sm:$0xff]
  %v46 = vld [vmem:[%s1 + $0xa8] sm:$0xff]
  %v47 = vld [vmem:[%s1 + $0xb0] sm:$0xff]
  %v48 = vld [vmem:[%s1 + $0xb8] sm:$0xff]
  %v49 = vld [vmem:[%s1 + $0xc0] sm:$0xff]
  %v50 = vld [vmem:[%s1 + $0xc8] sm:$0xff]
  %v51 = vld [vmem:[%s1 + $0xd0] sm:$0xff]
  %v52 = vld [vmem:[%s1 + $0xd8] sm:$0xff]
  %v53 = vld [vmem:[%s1 + $0xe0] sm:$0xff]
  %v54 = vld [vmem:[%s1 + $0xe8] sm:$0xff]
  %v55 = vld [vmem:[%s1 + $0xf0] sm:$0xff]
  %v56 = vld [vmem:[%s1 + $0xf8] sm:$0xff]
  %v57 = vld [vmem:[%s1 + $0x100] sm:$0xff]
  %v58 = vld [vmem:[%s1 + $0x108] sm:$0xff]
  %v59 = vld [vmem:[%s1 + $0x110] sm:$0xff]
  %v60 = vld [vmem:[%s1 + $0x118] sm:$0xff]
  %v61 = vld [vmem:[%s1 + $0x120] sm:$0xff]
  %v62 = vld [vmem:[%s1 + $0x128] sm:$0xff]
  %v63 = vld [vmem:[%s1 + $0x130] sm:$0xff]
  %v64 = vld [vmem:[%s1 + $0x138] sm:$0xff]
  %v65 = vld [vmem:[%s1 + $0x140] sm:$0xff]
  %v66 = vld [vmem:[%s1 + $0x148] sm:$0xff]
  %v67 = vld [vmem:[%s1 + $0x150] sm:$0xff]
  %v68 = vld [vmem:[%s1 + $0x158] sm:$0xff]
  %v69 = vld [vmem:[%s1 + $0x160] sm:$0xff]
  %v70 = vld [vmem:[%s1 + $0x168] sm:$0xff]
  %v71 = vld [vmem:[%s1 + $0x170] sm:$0xff]
  %v72 = vld [vmem:[%s1 + $0x178] sm:$0xff]
  %v73 = vld [vmem:[%s2] sm:$0x1]
  %v74 = vld [vmem:[#allocation2] sm:$0xff]
  %v75 = vld [vmem:[%s0] sm:$0xff]
  %v76 = vld [vmem:[%s0 + $0x8] sm:$0xff]
  %v77 = vld [vmem:[%s0 + $0x10] sm:$0xff]
  %78 = vmatprep.subr.mxu0 %v26
  %79 = vmatpush1.msra.mxu0 %v25
  %80 = vmatprep.subr.mxu0 %v29
  %81 = vmatpush1.msra.mxu0 %v28
  %82 = vmatprep.subr.mxu0 %v32
  %83 = vmatpush1.msra.mxu0 %v31
  %84 = vmatprep.subr.mxu0 %v35
  %85 = vmatpush1.msra.mxu0 %v34
  %86 = vmatprep.subr.mxu0 %v38
  %87 = vmatpush1.msra.mxu0 %v37
  %88 = vmatprep.subr.mxu0 %v41
  %89 = vmatpush1.msra.mxu0 %v40
  %90 = vmatprep.subr.mxu0 %v44
  %91 = vmatpush1.msra.mxu0 %v43
  %92 = vmatprep.subr.mxu0 %v47
  %93 = vmatpush1.msra.mxu0 %v46
  %94 = vmatprep.subr.mxu0 %v50
  %95 = vmatpush1.msra.mxu0 %v49
  %96 = vmatprep.subr.mxu0 %v53
  %97 = vmatpush1.msra.mxu0 %v52
  %98 = vmatprep.subr.mxu0 %v56
  %99 = vmatpush1.msra.mxu0 %v55
  %100 = vmatprep.subr.mxu0 %v59
  %101 = vmatpush1.msra.mxu0 %v58
  %102 = vmatprep.subr.mxu0 %v62
  %103 = vmatpush1.msra.mxu0 %v61
  %104 = vmatprep.subr.mxu0 %v65
  %105 = vmatpush1.msra.mxu0 %v64
  %106 = vmatprep.subr.mxu0 %v68
  %107 = vmatpush1.msra.mxu0 %v67
  %108 = vmatprep.subr.mxu0 %v71
  %109 = vmatpush1.msra.mxu0 %v70
  %110 = vmatprep.subr.mxu0 0.0
  %111 = vmatpush1.msra.mxu0 0.0
  %112 = vmatprep.subr.mxu0 0.0
  %113 = vmatpush1.msra.mxu0 0.0
  %114 = vmatprep.subr.mxu0 0.0
  %115 = vmatpush1.msra.mxu0 0.0
  %116 = vmatprep.subr.mxu0 0.0
  %117 = vmatpush1.msra.mxu0 0.0
  %118 = vmatprep.subr.mxu0 0.0
  %119 = vmatpush1.msra.mxu0 0.0
  %120 = vmatprep.subr.mxu0 0.0
  %121 = vmatpush1.msra.mxu0 0.0
  %122 = vmatprep.subr.mxu0 0.0
  %123 = vmatpush1.msra.mxu0 0.0
  %124 = vmatprep.subr.mxu0 0.0
  %125 = vmatpush1.msra.mxu0 0.0
  %126 = vmatprep.subr.mxu0 0.0
  %127 = vmatpush1.msra.mxu0 0.0
  %128 = vmatprep.subr.mxu0 0.0
  %129 = vmatpush1.msra.mxu0 0.0
  %130 = vmatprep.subr.mxu0 0.0
  %131 = vmatpush1.msra.mxu0 0.0
  %132 = vmatprep.subr.mxu0 0.0
  %133 = vmatpush1.msra.mxu0 0.0
  %134 = vmatprep.subr.mxu0 0.0
  %135 = vmatpush1.msra.mxu0 0.0
  %136 = vmatprep.subr.mxu0 0.0
  %137 = vmatpush1.msra.mxu0 0.0
  %138 = vmatprep.subr.mxu0 0.0
  %139 = vmatpush1.msra.mxu0 0.0
  %140 = vmatprep.subr.mxu0 0.0
  %141 = vmatpush1.msra.mxu0 0.0
  %142 = vmatprep.mubr.f32.mxu0 0.0
  %143 = vmatmul.mubr.f32.gmra.mrb[0].mxu0 %v74
  %v144 = vpop.f32.mrb[0].mxu0
  %v145 = vadd.f32 0.0, %v144
  %v146 = vpop.f32.mrb[0].mxu0
  %v147 = vadd.f32 0.0, %v146
  %148 = vdwg.mxu0
  %149 = vmatprep.subr.mxu0 0.0
  %150 = vmatpush1.msra.mxu0 %v27
  %151 = vmatprep.subr.mxu0 0.0
  %152 = vmatpush1.msra.mxu0 %v30
  %153 = vmatprep.subr.mxu0 0.0
  %154 = vmatpush1.msra.mxu0 %v33
  %155 = vmatprep.subr.mxu0 0.0
  %156 = vmatpush1.msra.mxu0 %v36
  %157 = vmatprep.subr.mxu0 0.0
  %158 = vmatpush1.msra.mxu0 %v39
  %159 = vmatprep.subr.mxu0 0.0
  %160 = vmatpush1.msra.mxu0 %v42
  %161 = vmatprep.subr.mxu0 0.0
  %162 = vmatpush1.msra.mxu0 %v45
  %163 = vmatprep.subr.mxu0 0.0
  %164 = vmatpush1.msra.mxu0 %v48
  %165 = vmatprep.subr.mxu0 0.0
  %166 = vmatpush1.msra.mxu0 %v51
  %167 = vmatprep.subr.mxu0 0.0
  %168 = vmatpush1.msra.mxu0 %v54
  %169 = vmatprep.subr.mxu0 0.0
  %170 = vmatpush1.msra.mxu0 %v57
  %171 = vmatprep.subr.mxu0 0.0
  %172 = vmatpush1.msra.mxu0 %v60
  %173 = vmatprep.subr.mxu0 0.0
  %174 = vmatpush1.msra.mxu0 %v63
  %175 = vmatprep.subr.mxu0 0.0
  %176 = vmatpush1.msra.mxu0 %v66
  %177 = vmatprep.subr.mxu0 0.0
  %178 = vmatpush1.msra.mxu0 %v69
  %179 = vmatprep.subr.mxu0 0.0
  %180 = vmatpush1.msra.mxu0 %v72
  %181 = vmatprep.subr.mxu0 0.0
  %182 = vmatpush1.msra.mxu0 0.0
  %183 = vmatprep.subr.mxu0 0.0
  %184 = vmatpush1.msra.mxu0 0.0
  %185 = vmatprep.subr.mxu0 0.0
  %186 = vmatpush1.msra.mxu0 0.0
  %187 = vmatprep.subr.mxu0 0.0
  %188 = vmatpush1.msra.mxu0 0.0
  %189 = vmatprep.subr.mxu0 0.0
  %190 = vmatpush1.msra.mxu0 0.0
  %191 = vmatprep.subr.mxu0 0.0
  %192 = vmatpush1.msra.mxu0 0.0
  %193 = vmatprep.subr.mxu0 0.0
  %194 = vmatpush1.msra.mxu0 0.0
  %195 = vmatprep.subr.mxu0 0.0
  %196 = vmatpush1.msra.mxu0 0.0
  %197 = vmatprep.subr.mxu0 0.0
  %198 = vmatpush1.msra.mxu0 0.0
  %199 = vmatprep.subr.mxu0 0.0
  %200 = vmatpush1.msra.mxu0 0.0
  %201 = vmatprep.subr.mxu0 0.0
  %202 = vmatpush1.msra.mxu0 0.0
  %203 = vmatprep.subr.mxu0 0.0
  %204 = vmatpush1.msra.mxu0 0.0
  %205 = vmatprep.subr.mxu0 0.0
  %206 = vmatpush1.msra.mxu0 0.0
  %207 = vmatprep.subr.mxu0 0.0
  %208 = vmatpush1.msra.mxu0 0.0
  %209 = vmatprep.subr.mxu0 0.0
  %210 = vmatpush1.msra.mxu0 0.0
  %211 = vmatprep.subr.mxu0 0.0
  %212 = vmatpush1.msra.mxu0 0.0
  %213 = vmatprep.mubr.f32.mxu0 0.0
  %214 = vmatmul.mubr.f32.gmra.mrb[0].mxu0 %v74
  %v215 = vpop.f32.mrb[0].mxu0
  %v216 = vadd.f32 0.0, %v215
  %v217 = vpop.f32.mrb[0].mxu0
  %218 = vdwg.mxu0
  %v219 = vadd.f32 %v75, %v145
  %v220 = vxor.u32 %v219, 2147483648
  %v221 = vmul.f32 %v220, 1.442695
  %v222 = vpow.pop %v221
  %v223 = vadd.f32 %v222, 1.0
  %v224 = vrcp.pop %v223
  %v225 = vmul.f32 1.0, %v224
  %v226 = vadd.f32 %v76, %v147
  %v227 = vxor.u32 %v226, 2147483648
  %v228 = vmul.f32 %v227, 1.442695
  %v229 = vpow.pop %v228
  %v230 = vadd.f32 %v229, 1.0
  %v231 = vrcp.pop %v230
  %v232 = vmul.f32 1.0, %v231
  %v234 = vlaneseq
  %v235 = vshrl.u32 %v234, 7
  %v236 = vsub.s32 0, %v235
  %v237 = vrot.slane %v73, %v236
  %v239 = vadd.f32 %v216, %v237
  %v240 = vmul.f32 %v225, %v239
  %v241 = vadd.f32 %v77, %v240
  %v242 = vtanh.pop %v241
  %v243 = vsub.f32 1.0, %v232
  %v244 = vmul.f32 %v243, %v242
  %v245 = vmul.f32 %v232, %v74
  %v246 = vadd.f32 %v244, %v245
  %s247 = scalar_lea.vmem %s0, 24
  %v248 = vld [vmem:[%s247] sm:$0xff]
  %v249 = vld [vmem:[%s247 + $0x8] sm:$0xff]
  %v250 = vld [vmem:[%s247 + $0x10] sm:$0xff]
  %251 = vmatprep.subr.mxu0 %v26
  %252 = vmatpush1.msra.mxu0 %v25
  %253 = vmatprep.subr.mxu0 %v29
  %254 = vmatpush1.msra.mxu0 %v28
  %255 = vmatprep.subr.mxu0 %v32
  %256 = vmatpush1.msra.mxu0 %v31
  %257 = vmatprep.subr.mxu0 %v35
  %258 = vmatpush1.msra.mxu0 %v34
  %259 = vmatprep.subr.mxu0 %v38
  %260 = vmatpush1.msra.mxu0 %v37
  %261 = vmatprep.subr.mxu0 %v41
  %262 = vmatpush1.msra.mxu0 %v40
  %263 = vmatprep.subr.mxu0 %v44
  %264 = vmatpush1.msra.mxu0 %v43
  %265 = vmatprep.subr.mxu0 %v47
  %266 = vmatpush1.msra.mxu0 %v46
  %267 = vmatprep.subr.mxu0 %v50
  %268 = vmatpush1.msra.mxu0 %v49
  %269 = vmatprep.subr.mxu0 %v53
  %270 = vmatpush1.msra.mxu0 %v52
  %271 = vmatprep.subr.mxu0 %v56
  %272 = vmatpush1.msra.mxu0 %v55
  %273 = vmatprep.subr.mxu0 %v59
  %274 = vmatpush1.msra.mxu0 %v58
  %275 = vmatprep.subr.mxu0 %v62
  %276 = vmatpush1.msra.mxu0 %v61
  %277 = vmatprep.subr.mxu0 %v65
  %278 = vmatpush1.msra.mxu0 %v64
  %279 = vmatprep.subr.mxu0 %v68
  %280 = vmatpush1.msra.mxu0 %v67
  %281 = vmatprep.subr.mxu0 %v71
  %282 = vmatpush1.msra.mxu0 %v70
  %283 = vmatprep.subr.mxu0 0.0
  %284 = vmatpush1.msra.mxu0 0.0
  %285 = vmatprep.subr.mxu0 0.0
  %286 = vmatpush1.msra.mxu0 0.0
  %287 = vmatprep.subr.mxu0 0.0
  %288 = vmatpush1.msra.mxu0 0.0
  %289 = vmatprep.subr.mxu0 0.0
  %290 = vmatpush1.msra.mxu0 0.0
  %291 = vmatprep.subr.mxu0 0.0
  %292 = vmatpush1.msra.mxu0 0.0
  %293 = vmatprep.subr.mxu0 0.0
  %294 = vmatpush1.msra.mxu0 0.0
  %295 = vmatprep.subr.mxu0 0.0
  %296 = vmatpush1.msra.mxu0 0.0
  %297 = vmatprep.subr.mxu0 0.0
  %298 = vmatpush1.msra.mxu0 0.0
  %299 = vmatprep.subr.mxu0 0.0
  %300 = vmatpush1.msra.mxu0 0.0
  %301 = vmatprep.subr.mxu0 0.0
  %302 = vmatpush1.msra.mxu0 0.0
  %303 = vmatprep.subr.mxu0 0.0
  %304 = vmatpush1.msra.mxu0 0.0
  %305 = vmatprep.subr.mxu0 0.0
  %306 = vmatpush1.msra.mxu0 0.0
  %307 = vmatprep.subr.mxu0 0.0
  %308 = vmatpush1.msra.mxu0 0.0
  %309 = vmatprep.subr.mxu0 0.0
  %310 = vmatpush1.msra.mxu0 0.0
  %311 = vmatprep.subr.mxu0 0.0
  %312 = vmatpush1.msra.mxu0 0.0
  %313 = vmatprep.subr.mxu0 0.0
  %314 = vmatpush1.msra.mxu0 0.0
  %315 = vmatprep.mubr.f32.mxu0 0.0
  %316 = vmatmul.mubr.f32.gmra.mrb[0].mxu0 %v246
  %v317 = vpop.f32.mrb[0].mxu0
  %v318 = vadd.f32 0.0, %v317
  %v319 = vpop.f32.mrb[0].mxu0
  %v320 = vadd.f32 0.0, %v319
  %321 = vdwg.mxu0
  %322 = vmatprep.subr.mxu0 0.0
  %323 = vmatpush1.msra.mxu0 %v27
  %324 = vmatprep.subr.mxu0 0.0
  %325 = vmatpush1.msra.mxu0 %v30
  %326 = vmatprep.subr.mxu0 0.0
  %327 = vmatpush1.msra.mxu0 %v33
  %328 = vmatprep.subr.mxu0 0.0
  %329 = vmatpush1.msra.mxu0 %v36
  %330 = vmatprep.subr.mxu0 0.0
  %331 = vmatpush1.msra.mxu0 %v39
  %332 = vmatprep.subr.mxu0 0.0
  %333 = vmatpush1.msra.mxu0 %v42
  %334 = vmatprep.subr.mxu0 0.0
  %335 = vmatpush1.msra.mxu0 %v45
  %336 = vmatprep.subr.mxu0 0.0
  %337 = vmatpush1.msra.mxu0 %v48
  %338 = vmatprep.subr.mxu0 0.0
  %339 = vmatpush1.msra.mxu0 %v51
  %340 = vmatprep.subr.mxu0 0.0
  %341 = vmatpush1.msra.mxu0 %v54
  %342 = vmatprep.subr.mxu0 0.0
  %343 = vmatpush1.msra.mxu0 %v57
  %344 = vmatprep.subr.mxu0 0.0
  %345 = vmatpush1.msra.mxu0 %v60
  %346 = vmatprep.subr.mxu0 0.0
  %347 = vmatpush1.msra.mxu0 %v63
  %348 = vmatprep.subr.mxu0 0.0
  %349 = vmatpush1.msra.mxu0 %v66
  %350 = vmatprep.subr.mxu0 0.0
  %351 = vmatpush1.msra.mxu0 %v69
  %352 = vmatprep.subr.mxu0 0.0
  %353 = vmatpush1.msra.mxu0 %v72
  %354 = vmatprep.subr.mxu0 0.0
  %355 = vmatpush1.msra.mxu0 0.0
  %356 = vmatprep.subr.mxu0 0.0
  %357 = vmatpush1.msra.mxu0 0.0
  %358 = vmatprep.subr.mxu0 0.0
  %359 = vmatpush1.msra.mxu0 0.0
  %360 = vmatprep.subr.mxu0 0.0
  %361 = vmatpush1.msra.mxu0 0.0
  %362 = vmatprep.subr.mxu0 0.0
  %363 = vmatpush1.msra.mxu0 0.0
  %364 = vmatprep.subr.mxu0 0.0
  %365 = vmatpush1.msra.mxu0 0.0
  %366 = vmatprep.subr.mxu0 0.0
  %367 = vmatpush1.msra.mxu0 0.0
  %368 = vmatprep.subr.mxu0 0.0
  %369 = vmatpush1.msra.mxu0 0.0
  %370 = vmatprep.subr.mxu0 0.0
  %371 = vmatpush1.msra.mxu0 0.0
  %372 = vmatprep.subr.mxu0 0.0
  %373 = vmatpush1.msra.mxu0 0.0
  %374 = vmatprep.subr.mxu0 0.0
  %375 = vmatpush1.msra.mxu0 0.0
  %376 = vmatprep.subr.mxu0 0.0
  %377 = vmatpush1.msra.mxu0 0.0
  %378 = vmatprep.subr.mxu0 0.0
  %379 = vmatpush1.msra.mxu0 0.0
  %380 = vmatprep.subr.mxu0 0.0
  %381 = vmatpush1.msra.mxu0 0.0
  %382 = vmatprep.subr.mxu0 0.0
  %383 = vmatpush1.msra.mxu0 0.0
  %384 = vmatprep.subr.mxu0 0.0
  %385 = vmatpush1.msra.mxu0 0.0
  %386 = vmatprep.mubr.f32.mxu0 0.0
  %387 = vmatmul.mubr.f32.gmra.mrb[0].mxu0 %v246
  %v388 = vpop.f32.mrb[0].mxu0
  %v389 = vadd.f32 0.0, %v388
  %v390 = vpop.f32.mrb[0].mxu0
  %391 = vdwg.mxu0
  %v392 = vadd.f32 %v248, %v318
  %v393 = vxor.u32 %v392, 2147483648
  %v394 = vmul.f32 %v393, 1.442695
  %v395 = vpow.pop %v394
  %v396 = vadd.f32 %v395, 1.0
  %v397 = vrcp.pop %v396
  %v398 = vmul.f32 1.0, %v397
  %v399 = vadd.f32 %v249, %v320
  %v400 = vxor.u32 %v399, 2147483648
  %v401 = vmul.f32 %v400, 1.442695
  %v402 = vpow.pop %v401
  %v403 = vadd.f32 %v402, 1.0
  %v404 = vrcp.pop %v403
  %v405 = vmul.f32 1.0, %v404
  %v406 = vadd.f32 %v389, %v237
  %v407 = vmul.f32 %v398, %v406
  %v408 = vadd.f32 %v250, %v407
  %v409 = vtanh.pop %v408
  %v410 = vsub.f32 1.0, %v405
  %v411 = vmul.f32 %v410, %v409
  %v412 = vmul.f32 %v405, %v246
  %v413 = vadd.f32 %v411, %v412
  %s414 = scalar_lea.vmem %s0, 48
  %v415 = vld [vmem:[%s414] sm:$0xff]
  %v416 = vld [vmem:[%s414 + $0x8] sm:$0xff]
  %v417 = vld [vmem:[%s414 + $0x10] sm:$0xff]
  %418 = vmatprep.subr.mxu0 %v26
  %419 = vmatpush1.msra.mxu0 %v25
  %420 = vmatprep.subr.mxu0 %v29
  %421 = vmatpush1.msra.mxu0 %v28
  %422 = vmatprep.subr.mxu0 %v32
  %423 = vmatpush1.msra.mxu0 %v31
  %424 = vmatprep.subr.mxu0 %v35
  %425 = vmatpush1.msra.mxu0 %v34
  %426 = vmatprep.subr.mxu0 %v38
  %427 = vmatpush1.msra.mxu0 %v37
  %428 = vmatprep.subr.mxu0 %v41
  %429 = vmatpush1.msra.mxu0 %v40
  %430 = vmatprep.subr.mxu0 %v44
  %431 = vmatpush1.msra.mxu0 %v43
  %432 = vmatprep.subr.mxu0 %v47
  %433 = vmatpush1.msra.mxu0 %v46
  %434 = vmatprep.subr.mxu0 %v50
  %435 = vmatpush1.msra.mxu0 %v49
  %436 = vmatprep.subr.mxu0 %v53
  %437 = vmatpush1.msra.mxu0 %v52
  %438 = vmatprep.subr.mxu0 %v56
  %439 = vmatpush1.msra.mxu0 %v55
  %440 = vmatprep.subr.mxu0 %v59
  %441 = vmatpush1.msra.mxu0 %v58
  %442 = vmatprep.subr.mxu0 %v62
  %443 = vmatpush1.msra.mxu0 %v61
  %444 = vmatprep.subr.mxu0 %v65
  %445 = vmatpush1.msra.mxu0 %v64
  %446 = vmatprep.subr.mxu0 %v68
  %447 = vmatpush1.msra.mxu0 %v67
  %448 = vmatprep.subr.mxu0 %v71
  %449 = vmatpush1.msra.mxu0 %v70
  %450 = vmatprep.subr.mxu0 0.0
  %451 = vmatpush1.msra.mxu0 0.0
  %452 = vmatprep.subr.mxu0 0.0
  %453 = vmatpush1.msra.mxu0 0.0
  %454 = vmatprep.subr.mxu0 0.0
  %455 = vmatpush1.msra.mxu0 0.0
  %456 = vmatprep.subr.mxu0 0.0
  %457 = vmatpush1.msra.mxu0 0.0
  %458 = vmatprep.subr.mxu0 0.0
  %459 = vmatpush1.msra.mxu0 0.0
  %460 = vmatprep.subr.mxu0 0.0
  %461 = vmatpush1.msra.mxu0 0.0
  %462 = vmatprep.subr.mxu0 0.0
  %463 = vmatpush1.msra.mxu0 0.0
  %464 = vmatprep.subr.mxu0 0.0
  %465 = vmatpush1.msra.mxu0 0.0
  %466 = vmatprep.subr.mxu0 0.0
  %467 = vmatpush1.msra.mxu0 0.0
  %468 = vmatprep.subr.mxu0 0.0
  %469 = vmatpush1.msra.mxu0 0.0
  %470 = vmatprep.subr.mxu0 0.0
  %471 = vmatpush1.msra.mxu0 0.0
  %472 = vmatprep.subr.mxu0 0.0
  %473 = vmatpush1.msra.mxu0 0.0
  %474 = vmatprep.subr.mxu0 0.0
  %475 = vmatpush1.msra.mxu0 0.0
  %476 = vmatprep.subr.mxu0 0.0
  %477 = vmatpush1.msra.mxu0 0.0
  %478 = vmatprep.subr.mxu0 0.0
  %479 = vmatpush1.msra.mxu0 0.0
  %480 = vmatprep.subr.mxu0 0.0
  %481 = vmatpush1.msra.mxu0 0.0
  %482 = vmatprep.mubr.f32.mxu0 0.0
  %483 = vmatmul.mubr.f32.gmra.mrb[0].mxu0 %v413
  %v484 = vpop.f32.mrb[0].mxu0
  %v485 = vadd.f32 0.0, %v484
  %v486 = vpop.f32.mrb[0].mxu0
  %v487 = vadd.f32 0.0, %v486
  %488 = vdwg.mxu0
  %489 = vmatprep.subr.mxu0 0.0
  %490 = vmatpush1.msra.mxu0 %v27
  %491 = vmatprep.subr.mxu0 0.0
  %492 = vmatpush1.msra.mxu0 %v30
  %493 = vmatprep.subr.mxu0 0.0
  %494 = vmatpush1.msra.mxu0 %v33
  %495 = vmatprep.subr.mxu0 0.0
  %496 = vmatpush1.msra.mxu0 %v36
  %497 = vmatprep.subr.mxu0 0.0
  %498 = vmatpush1.msra.mxu0 %v39
  %499 = vmatprep.subr.mxu0 0.0
  %500 = vmatpush1.msra.mxu0 %v42
  %501 = vmatprep.subr.mxu0 0.0
  %502 = vmatpush1.msra.mxu0 %v45
  %503 = vmatprep.subr.mxu0 0.0
  %504 = vmatpush1.msra.mxu0 %v48
  %505 = vmatprep.subr.mxu0 0.0
  %506 = vmatpush1.msra.mxu0 %v51
  %507 = vmatprep.subr.mxu0 0.0
  %508 = vmatpush1.msra.mxu0 %v54
  %509 = vmatprep.subr.mxu0 0.0
  %510 = vmatpush1.msra.mxu0 %v57
  %511 = vmatprep.subr.mxu0 0.0
  %512 = vmatpush1.msra.mxu0 %v60
  %513 = vmatprep.subr.mxu0 0.0
  %514 = vmatpush1.msra.mxu0 %v63
  %515 = vmatprep.subr.mxu0 0.0
  %516 = vmatpush1.msra.mxu0 %v66
  %517 = vmatprep.subr.mxu0 0.0
  %518 = vmatpush1.msra.mxu0 %v69
  %519 = vmatprep.subr.mxu0 0.0
  %520 = vmatpush1.msra.mxu0 %v72
  %521 = vmatprep.subr.mxu0 0.0
  %522 = vmatpush1.msra.mxu0 0.0
  %523 = vmatprep.subr.mxu0 0.0
  %524 = vmatpush1.msra.mxu0 0.0
  %525 = vmatprep.subr.mxu0 0.0
  %526 = vmatpush1.msra.mxu0 0.0
  %527 = vmatprep.subr.mxu0 0.0
  %528 = vmatpush1.msra.mxu0 0.0
  %529 = vmatprep.subr.mxu0 0.0
  %530 = vmatpush1.msra.mxu0 0.0
  %531 = vmatprep.subr.mxu0 0.0
  %532 = vmatpush1.msra.mxu0 0.0
  %533 = vmatprep.subr.mxu0 0.0
  %534 = vmatpush1.msra.mxu0 0.0
  %535 = vmatprep.subr.mxu0 0.0
  %536 = vmatpush1.msra.mxu0 0.0
  %537 = vmatprep.subr.mxu0 0.0
  %538 = vmatpush1.msra.mxu0 0.0
  %539 = vmatprep.subr.mxu0 0.0
  %540 = vmatpush1.msra.mxu0 0.0
  %541 = vmatprep.subr.mxu0 0.0
  %542 = vmatpush1.msra.mxu0 0.0
  %543 = vmatprep.subr.mxu0 0.0
  %544 = vmatpush1.msra.mxu0 0.0
  %545 = vmatprep.subr.mxu0 0.0
  %546 = vmatpush1.msra.mxu0 0.0
  %547 = vmatprep.subr.mxu0 0.0
  %548 = vmatpush1.msra.mxu0 0.0
  %549 = vmatprep.subr.mxu0 0.0
  %550 = vmatpush1.msra.mxu0 0.0
  %551 = vmatprep.subr.mxu0 0.0
  %552 = vmatpush1.msra.mxu0 0.0
  %553 = vmatprep.mubr.f32.mxu0 0.0
  %554 = vmatmul.mubr.f32.gmra.mrb[0].mxu0 %v413
  %v555 = vpop.f32.mrb[0].mxu0
  %v556 = vadd.f32 0.0, %v555
  %v557 = vpop.f32.mrb[0].mxu0
  %558 = vdwg.mxu0
  %v559 = vadd.f32 %v415, %v485
  %v560 = vxor.u32 %v559, 2147483648
  %v561 = vmul.f32 %v560, 1.442695
  %v562 = vpow.pop %v561
  %v563 = vadd.f32 %v562, 1.0
  %v564 = vrcp.pop %v563
  %v565 = vmul.f32 1.0, %v564
  %v566 = vadd.f32 %v416, %v487
  %v567 = vxor.u32 %v566, 2147483648
  %v568 = vmul.f32 %v567, 1.442695
  %v569 = vpow.pop %v568
  %v570 = vadd.f32 %v569, 1.0
  %v571 = vrcp.pop %v570
  %v572 = vmul.f32 1.0, %v571
  %v573 = vadd.f32 %v556, %v237
  %v574 = vmul.f32 %v565, %v573
  %v575 = vadd.f32 %v417, %v574
  %v576 = vtanh.pop %v575
  %v577 = vsub.f32 1.0, %v572
  %v578 = vmul.f32 %v577, %v576
  %v579 = vmul.f32 %v572, %v413
  %v580 = vadd.f32 %v578, %v579
  %s581 = scalar_lea.vmem %s0, 72
  %v582 = vld [vmem:[%s581] sm:$0xff]
  %v583 = vld [vmem:[%s581 + $0x8] sm:$0xff]
  %v584 = vld [vmem:[%s581 + $0x10] sm:$0xff]
  %585 = vmatprep.subr.mxu0 %v26
  %586 = vmatpush1.msra.mxu0 %v25
  %587 = vmatprep.subr.mxu0 %v29
  %588 = vmatpush1.msra.mxu0 %v28
  %589 = vmatprep.subr.mxu0 %v32
  %590 = vmatpush1.msra.mxu0 %v31
  %591 = vmatprep.subr.mxu0 %v35
  %592 = vmatpush1.msra.mxu0 %v34
  %593 = vmatprep.subr.mxu0 %v38
  %594 = vmatpush1.msra.mxu0 %v37
  %595 = vmatprep.subr.mxu0 %v41
  %596 = vmatpush1.msra.mxu0 %v40
  %597 = vmatprep.subr.mxu0 %v44
  %598 = vmatpush1.msra.mxu0 %v43
  %599 = vmatprep.subr.mxu0 %v47
  %600 = vmatpush1.msra.mxu0 %v46
  %601 = vmatprep.subr.mxu0 %v50
  %602 = vmatpush1.msra.mxu0 %v49
  %603 = vmatprep.subr.mxu0 %v53
  %604 = vmatpush1.msra.mxu0 %v52
  %605 = vmatprep.subr.mxu0 %v56
  %606 = vmatpush1.msra.mxu0 %v55
  %607 = vmatprep.subr.mxu0 %v59
  %608 = vmatpush1.msra.mxu0 %v58
  %609 = vmatprep.subr.mxu0 %v62
  %610 = vmatpush1.msra.mxu0 %v61
  %611 = vmatprep.subr.mxu0 %v65
  %612 = vmatpush1.msra.mxu0 %v64
  %613 = vmatprep.subr.mxu0 %v68
  %614 = vmatpush1.msra.mxu0 %v67
  %615 = vmatprep.subr.mxu0 %v71
  %616 = vmatpush1.msra.mxu0 %v70
  %617 = vmatprep.subr.mxu0 0.0
  %618 = vmatpush1.msra.mxu0 0.0
  %619 = vmatprep.subr.mxu0 0.0
  %620 = vmatpush1.msra.mxu0 0.0
  %621 = vmatprep.subr.mxu0 0.0
  %622 = vmatpush1.msra.mxu0 0.0
  %623 = vmatprep.subr.mxu0 0.0
  %624 = vmatpush1.msra.mxu0 0.0
  %625 = vmatprep.subr.mxu0 0.0
  %626 = vmatpush1.msra.mxu0 0.0
  %627 = vmatprep.subr.mxu0 0.0
  %628 = vmatpush1.msra.mxu0 0.0
  %629 = vmatprep.subr.mxu0 0.0
  %630 = vmatpush1.msra.mxu0 0.0
  %631 = vmatprep.subr.mxu0 0.0
  %632 = vmatpush1.msra.mxu0 0.0
  %633 = vmatprep.subr.mxu0 0.0
  %634 = vmatpush1.msra.mxu0 0.0
  %635 = vmatprep.subr.mxu0 0.0
  %636 = vmatpush1.msra.mxu0 0.0
  %637 = vmatprep.subr.mxu0 0.0
  %638 = vmatpush1.msra.mxu0 0.0
  %639 = vmatprep.subr.mxu0 0.0
  %640 = vmatpush1.msra.mxu0 0.0
  %641 = vmatprep.subr.mxu0 0.0
  %642 = vmatpush1.msra.mxu0 0.0
  %643 = vmatprep.subr.mxu0 0.0
  %644 = vmatpush1.msra.mxu0 0.0
  %645 = vmatprep.subr.mxu0 0.0
  %646 = vmatpush1.msra.mxu0 0.0
  %647 = vmatprep.subr.mxu0 0.0
  %648 = vmatpush1.msra.mxu0 0.0
  %649 = vmatprep.mubr.f32.mxu0 0.0
  %650 = vmatmul.mubr.f32.gmra.mrb[0].mxu0 %v580
  %v651 = vpop.f32.mrb[0].mxu0
  %v652 = vadd.f32 0.0, %v651
  %v653 = vpop.f32.mrb[0].mxu0
  %v654 = vadd.f32 0.0, %v653
  %655 = vdwg.mxu0
  %656 = vmatprep.subr.mxu0 0.0
  %657 = vmatpush1.msra.mxu0 %v27
  %658 = vmatprep.subr.mxu0 0.0
  %659 = vmatpush1.msra.mxu0 %v30
  %660 = vmatprep.subr.mxu0 0.0
  %661 = vmatpush1.msra.mxu0 %v33
  %662 = vmatprep.subr.mxu0 0.0
  %663 = vmatpush1.msra.mxu0 %v36
  %664 = vmatprep.subr.mxu0 0.0
  %665 = vmatpush1.msra.mxu0 %v39
  %666 = vmatprep.subr.mxu0 0.0
  %667 = vmatpush1.msra.mxu0 %v42
  %668 = vmatprep.subr.mxu0 0.0
  %669 = vmatpush1.msra.mxu0 %v45
  %670 = vmatprep.subr.mxu0 0.0
  %671 = vmatpush1.msra.mxu0 %v48
  %672 = vmatprep.subr.mxu0 0.0
  %673 = vmatpush1.msra.mxu0 %v51
  %674 = vmatprep.subr.mxu0 0.0
  %675 = vmatpush1.msra.mxu0 %v54
  %676 = vmatprep.subr.mxu0 0.0
  %677 = vmatpush1.msra.mxu0 %v57
  %678 = vmatprep.subr.mxu0 0.0
  %679 = vmatpush1.msra.mxu0 %v60
  %680 = vmatprep.subr.mxu0 0.0
  %681 = vmatpush1.msra.mxu0 %v63
  %682 = vmatprep.subr.mxu0 0.0
  %683 = vmatpush1.msra.mxu0 %v66
  %684 = vmatprep.subr.mxu0 0.0
  %685 = vmatpush1.msra.mxu0 %v69
  %686 = vmatprep.subr.mxu0 0.0
  %687 = vmatpush1.msra.mxu0 %v72
  %688 = vmatprep.subr.mxu0 0.0
  %689 = vmatpush1.msra.mxu0 0.0
  %690 = vmatprep.subr.mxu0 0.0
  %691 = vmatpush1.msra.mxu0 0.0
  %692 = vmatprep.subr.mxu0 0.0
  %693 = vmatpush1.msra.mxu0 0.0
  %694 = vmatprep.subr.mxu0 0.0
  %695 = vmatpush1.msra.mxu0 0.0
  %696 = vmatprep.subr.mxu0 0.0
  %697 = vmatpush1.msra.mxu0 0.0
  %698 = vmatprep.subr.mxu0 0.0
  %699 = vmatpush1.msra.mxu0 0.0
  %700 = vmatprep.subr.mxu0 0.0
  %701 = vmatpush1.msra.mxu0 0.0
  %702 = vmatprep.subr.mxu0 0.0
  %703 = vmatpush1.msra.mxu0 0.0
  %704 = vmatprep.subr.mxu0 0.0
  %705 = vmatpush1.msra.mxu0 0.0
  %706 = vmatprep.subr.mxu0 0.0
  %707 = vmatpush1.msra.mxu0 0.0
  %708 = vmatprep.subr.mxu0 0.0
  %709 = vmatpush1.msra.mxu0 0.0
  %710 = vmatprep.subr.mxu0 0.0
  %711 = vmatpush1.msra.mxu0 0.0
  %712 = vmatprep.subr.mxu0 0.0
  %713 = vmatpush1.msra.mxu0 0.0
  %714 = vmatprep.subr.mxu0 0.0
  %715 = vmatpush1.msra.mxu0 0.0
  %716 = vmatprep.subr.mxu0 0.0
  %717 = vmatpush1.msra.mxu0 0.0
  %718 = vmatprep.subr.mxu0 0.0
  %719 = vmatpush1.msra.mxu0 0.0
  %720 = vmatprep.mubr.f32.mxu0 0.0
  %721 = vmatmul.mubr.f32.gmra.mrb[0].mxu0 %v580
  %v722 = vpop.f32.mrb[0].mxu0
  %v723 = vadd.f32 0.0, %v722
  %v724 = vpop.f32.mrb[0].mxu0
  %725 = vdwg.mxu0
  %v726 = vadd.f32 %v582, %v652
  %v727 = vxor.u32 %v726, 2147483648
  %v728 = vmul.f32 %v727, 1.442695
  %v729 = vpow.pop %v728
  %v730 = vadd.f32 %v729, 1.0
  %v731 = vrcp.pop %v730
  %v732 = vmul.f32 1.0, %v731
  %v733 = vadd.f32 %v583, %v654
  %v734 = vxor.u32 %v733, 2147483648
  %v735 = vmul.f32 %v734, 1.442695
  %v736 = vpow.pop %v735
  %v737 = vadd.f32 %v736, 1.0
  %v738 = vrcp.pop %v737
  %v739 = vmul.f32 1.0, %v738
  %v740 = vadd.f32 %v723, %v237
  %v741 = vmul.f32 %v732, %v740
  %v742 = vadd.f32 %v584, %v741
  %v743 = vtanh.pop %v742
  %v744 = vsub.f32 1.0, %v739
  %v745 = vmul.f32 %v744, %v743
  %v746 = vmul.f32 %v739, %v580
  %v747 = vadd.f32 %v745, %v746
  %s748 = scalar_lea.vmem %s0, 96
  %v749 = vld [vmem:[%s748] sm:$0xff]
  %v750 = vld [vmem:[%s748 + $0x8] sm:$0xff]
  %v751 = vld [vmem:[%s748 + $0x10] sm:$0xff]
  %752 = vmatprep.subr.mxu0 %v26
  %753 = vmatpush1.msra.mxu0 %v25
  %754 = vmatprep.subr.mxu0 %v29
  %755 = vmatpush1.msra.mxu0 %v28
  %756 = vmatprep.subr.mxu0 %v32
  %757 = vmatpush1.msra.mxu0 %v31
  %758 = vmatprep.subr.mxu0 %v35
  %759 = vmatpush1.msra.mxu0 %v34
  %760 = vmatprep.subr.mxu0 %v38
  %761 = vmatpush1.msra.mxu0 %v37
  %762 = vmatprep.subr.mxu0 %v41
  %763 = vmatpush1.msra.mxu0 %v40
  %764 = vmatprep.subr.mxu0 %v44
  %765 = vmatpush1.msra.mxu0 %v43
  %766 = vmatprep.subr.mxu0 %v47
  %767 = vmatpush1.msra.mxu0 %v46
  %768 = vmatprep.subr.mxu0 %v50
  %769 = vmatpush1.msra.mxu0 %v49
  %770 = vmatprep.subr.mxu0 %v53
  %771 = vmatpush1.msra.mxu0 %v52
  %772 = vmatprep.subr.mxu0 %v56
  %773 = vmatpush1.msra.mxu0 %v55
  %774 = vmatprep.subr.mxu0 %v59
  %775 = vmatpush1.msra.mxu0 %v58
  %776 = vmatprep.subr.mxu0 %v62
  %777 = vmatpush1.msra.mxu0 %v61
  %778 = vmatprep.subr.mxu0 %v65
  %779 = vmatpush1.msra.mxu0 %v64
  %780 = vmatprep.subr.mxu0 %v68
  %781 = vmatpush1.msra.mxu0 %v67
  %782 = vmatprep.subr.mxu0 %v71
  %783 = vmatpush1.msra.mxu0 %v70
  %784 = vmatprep.subr.mxu0 0.0
  %785 = vmatpush1.msra.mxu0 0.0
  %786 = vmatprep.subr.mxu0 0.0
  %787 = vmatpush1.msra.mxu0 0.0
  %788 = vmatprep.subr.mxu0 0.0
  %789 = vmatpush1.msra.mxu0 0.0
  %790 = vmatprep.subr.mxu0 0.0
  %791 = vmatpush1.msra.mxu0 0.0
  %792 = vmatprep.subr.mxu0 0.0
  %793 = vmatpush1.msra.mxu0 0.0
  %794 = vmatprep.subr.mxu0 0.0
  %795 = vmatpush1.msra.mxu0 0.0
  %796 = vmatprep.subr.mxu0 0.0
  %797 = vmatpush1.msra.mxu0 0.0
  %798 = vmatprep.subr.mxu0 0.0
  %799 = vmatpush1.msra.mxu0 0.0
  %800 = vmatprep.subr.mxu0 0.0
  %801 = vmatpush1.msra.mxu0 0.0
  %802 = vmatprep.subr.mxu0 0.0
  %803 = vmatpush1.msra.mxu0 0.0
  %804 = vmatprep.subr.mxu0 0.0
  %805 = vmatpush1.msra.mxu0 0.0
  %806 = vmatprep.subr.mxu0 0.0
  %807 = vmatpush1.msra.mxu0 0.0
  %808 = vmatprep.subr.mxu0 0.0
  %809 = vmatpush1.msra.mxu0 0.0
  %810 = vmatprep.subr.mxu0 0.0
  %811 = vmatpush1.msra.mxu0 0.0
  %812 = vmatprep.subr.mxu0 0.0
  %813 = vmatpush1.msra.mxu0 0.0
  %814 = vmatprep.subr.mxu0 0.0
  %815 = vmatpush1.msra.mxu0 0.0
  %816 = vmatprep.mubr.f32.mxu0 0.0
  %817 = vmatmul.mubr.f32.gmra.mrb[0].mxu0 %v747
  %v818 = vpop.f32.mrb[0].mxu0
  %v819 = vadd.f32 0.0, %v818
  %v820 = vpop.f32.mrb[0].mxu0
  %v821 = vadd.f32 0.0, %v820
  %822 = vdwg.mxu0
  %823 = vmatprep.subr.mxu0 0.0
  %824 = vmatpush1.msra.mxu0 %v27
  %825 = vmatprep.subr.mxu0 0.0
  %826 = vmatpush1.msra.mxu0 %v30
  %827 = vmatprep.subr.mxu0 0.0
  %828 = vmatpush1.msra.mxu0 %v33
  %829 = vmatprep.subr.mxu0 0.0
  %830 = vmatpush1.msra.mxu0 %v36
  %831 = vmatprep.subr.mxu0 0.0
  %832 = vmatpush1.msra.mxu0 %v39
  %833 = vmatprep.subr.mxu0 0.0
  %834 = vmatpush1.msra.mxu0 %v42
  %835 = vmatprep.subr.mxu0 0.0
  %836 = vmatpush1.msra.mxu0 %v45
  %837 = vmatprep.subr.mxu0 0.0
  %838 = vmatpush1.msra.mxu0 %v48
  %839 = vmatprep.subr.mxu0 0.0
  %840 = vmatpush1.msra.mxu0 %v51
  %841 = vmatprep.subr.mxu0 0.0
  %842 = vmatpush1.msra.mxu0 %v54
  %843 = vmatprep.subr.mxu0 0.0
  %844 = vmatpush1.msra.mxu0 %v57
  %845 = vmatprep.subr.mxu0 0.0
  %846 = vmatpush1.msra.mxu0 %v60
  %847 = vmatprep.subr.mxu0 0.0
  %848 = vmatpush1.msra.mxu0 %v63
  %849 = vmatprep.subr.mxu0 0.0
  %850 = vmatpush1.msra.mxu0 %v66
  %851 = vmatprep.subr.mxu0 0.0
  %852 = vmatpush1.msra.mxu0 %v69
  %853 = vmatprep.subr.mxu0 0.0
  %854 = vmatpush1.msra.mxu0 %v72
  %855 = vmatprep.subr.mxu0 0.0
  %856 = vmatpush1.msra.mxu0 0.0
  %857 = vmatprep.subr.mxu0 0.0
  %858 = vmatpush1.msra.mxu0 0.0
  %859 = vmatprep.subr.mxu0 0.0
  %860 = vmatpush1.msra.mxu0 0.0
  %861 = vmatprep.subr.mxu0 0.0
  %862 = vmatpush1.msra.mxu0 0.0
  %863 = vmatprep.subr.mxu0 0.0
  %864 = vmatpush1.msra.mxu0 0.0
  %865 = vmatprep.subr.mxu0 0.0
  %866 = vmatpush1.msra.mxu0 0.0
  %867 = vmatprep.subr.mxu0 0.0
  %868 = vmatpush1.msra.mxu0 0.0
  %869 = vmatprep.subr.mxu0 0.0
  %870 = vmatpush1.msra.mxu0 0.0
  %871 = vmatprep.subr.mxu0 0.0
  %872 = vmatpush1.msra.mxu0 0.0
  %873 = vmatprep.subr.mxu0 0.0
  %874 = vmatpush1.msra.mxu0 0.0
  %875 = vmatprep.subr.mxu0 0.0
  %876 = vmatpush1.msra.mxu0 0.0
  %877 = vmatprep.subr.mxu0 0.0
  %878 = vmatpush1.msra.mxu0 0.0
  %879 = vmatprep.subr.mxu0 0.0
  %880 = vmatpush1.msra.mxu0 0.0
  %881 = vmatprep.subr.mxu0 0.0
  %882 = vmatpush1.msra.mxu0 0.0
  %883 = vmatprep.subr.mxu0 0.0
  %884 = vmatpush1.msra.mxu0 0.0
  %885 = vmatprep.subr.mxu0 0.0
  %886 = vmatpush1.msra.mxu0 0.0
  %887 = vmatprep.mubr.f32.mxu0 0.0
  %888 = vmatmul.mubr.f32.gmra.mrb[0].mxu0 %v747
  %v889 = vpop.f32.mrb[0].mxu0
  %v890 = vadd.f32 0.0, %v889
  %v891 = vpop.f32.mrb[0].mxu0
  %892 = vdwg.mxu0
  %v893 = vadd.f32 %v749, %v819
  %v894 = vxor.u32 %v893, 2147483648
  %v895 = vmul.f32 %v894, 1.442695
  %v896 = vpow.pop %v895
  %v897 = vadd.f32 %v896, 1.0
  %v898 = vrcp.pop %v897
  %v899 = vmul.f32 1.0, %v898
  %v900 = vadd.f32 %v750, %v821
  %v901 = vxor.u32 %v900, 2147483648
  %v902 = vmul.f32 %v901, 1.442695
  %v903 = vpow.pop %v902
  %v904 = vadd.f32 %v903, 1.0
  %v905 = vrcp.pop %v904
  %v906 = vmul.f32 1.0, %v905
  %v907 = vadd.f32 %v890, %v237
  %v908 = vmul.f32 %v899, %v907
  %v909 = vadd.f32 %v751, %v908
  %v910 = vtanh.pop %v909
  %v911 = vsub.f32 1.0, %v906
  %v912 = vmul.f32 %v911, %v910
  %v913 = vmul.f32 %v906, %v747
  %v914 = vadd.f32 %v912, %v913
  %s915 = scalar_lea.vmem %s0, 120
  %v916 = vld [vmem:[%s915] sm:$0xff]
  %v917 = vld [vmem:[%s915 + $0x8] sm:$0xff]
  %v918 = vld [vmem:[%s915 + $0x10] sm:$0xff]
  %919 = vmatprep.subr.mxu0 %v26
  %920 = vmatpush1.msra.mxu0 %v25
  %921 = vmatprep.subr.mxu0 %v29
  %922 = vmatpush1.msra.mxu0 %v28
  %923 = vmatprep.subr.mxu0 %v32
  %924 = vmatpush1.msra.mxu0 %v31
  %925 = vmatprep.subr.mxu0 %v35
  %926 = vmatpush1.msra.mxu0 %v34
  %927 = vmatprep.subr.mxu0 %v38
  %928 = vmatpush1.msra.mxu0 %v37
  %929 = vmatprep.subr.mxu0 %v41
  %930 = vmatpush1.msra.mxu0 %v40
  %931 = vmatprep.subr.mxu0 %v44
  %932 = vmatpush1.msra.mxu0 %v43
  %933 = vmatprep.subr.mxu0 %v47
  %934 = vmatpush1.msra.mxu0 %v46
  %935 = vmatprep.subr.mxu0 %v50
  %936 = vmatpush1.msra.mxu0 %v49
  %937 = vmatprep.subr.mxu0 %v53
  %938 = vmatpush1.msra.mxu0 %v52
  %939 = vmatprep.subr.mxu0 %v56
  %940 = vmatpush1.msra.mxu0 %v55
  %941 = vmatprep.subr.mxu0 %v59
  %942 = vmatpush1.msra.mxu0 %v58
  %943 = vmatprep.subr.mxu0 %v62
  %944 = vmatpush1.msra.mxu0 %v61
  %945 = vmatprep.subr.mxu0 %v65
  %946 = vmatpush1.msra.mxu0 %v64
  %947 = vmatprep.subr.mxu0 %v68
  %948 = vmatpush1.msra.mxu0 %v67
  %949 = vmatprep.subr.mxu0 %v71
  %950 = vmatpush1.msra.mxu0 %v70
  %951 = vmatprep.subr.mxu0 0.0
  %952 = vmatpush1.msra.mxu0 0.0
  %953 = vmatprep.subr.mxu0 0.0
  %954 = vmatpush1.msra.mxu0 0.0
  %955 = vmatprep.subr.mxu0 0.0
  %956 = vmatpush1.msra.mxu0 0.0
  %957 = vmatprep.subr.mxu0 0.0
  %958 = vmatpush1.msra.mxu0 0.0
  %959 = vmatprep.subr.mxu0 0.0
  %960 = vmatpush1.msra.mxu0 0.0
  %961 = vmatprep.subr.mxu0 0.0
  %962 = vmatpush1.msra.mxu0 0.0
  %963 = vmatprep.subr.mxu0 0.0
  %964 = vmatpush1.msra.mxu0 0.0
  %965 = vmatprep.subr.mxu0 0.0
  %966 = vmatpush1.msra.mxu0 0.0
  %967 = vmatprep.subr.mxu0 0.0
  %968 = vmatpush1.msra.mxu0 0.0
  %969 = vmatprep.subr.mxu0 0.0
  %970 = vmatpush1.msra.mxu0 0.0
  %971 = vmatprep.subr.mxu0 0.0
  %972 = vmatpush1.msra.mxu0 0.0
  %973 = vmatprep.subr.mxu0 0.0
  %974 = vmatpush1.msra.mxu0 0.0
  %975 = vmatprep.subr.mxu0 0.0
  %976 = vmatpush1.msra.mxu0 0.0
  %977 = vmatprep.subr.mxu0 0.0
  %978 = vmatpush1.msra.mxu0 0.0
  %979 = vmatprep.subr.mxu0 0.0
  %980 = vmatpush1.msra.mxu0 0.0
  %981 = vmatprep.subr.mxu0 0.0
  %982 = vmatpush1.msra.mxu0 0.0
  %983 = vmatprep.mubr.f32.mxu0 0.0
  %984 = vmatmul.mubr.f32.gmra.mrb[0].mxu0 %v914
  %v985 = vpop.f32.mrb[0].mxu0
  %v986 = vadd.f32 0.0, %v985
  %v987 = vpop.f32.mrb[0].mxu0
  %v988 = vadd.f32 0.0, %v987
  %989 = vdwg.mxu0
  %990 = vmatprep.subr.mxu0 0.0
  %991 = vmatpush1.msra.mxu0 %v27
  %992 = vmatprep.subr.mxu0 0.0
  %993 = vmatpush1.msra.mxu0 %v30
  %994 = vmatprep.subr.mxu0 0.0
  %995 = vmatpush1.msra.mxu0 %v33
  %996 = vmatprep.subr.mxu0 0.0
  %997 = vmatpush1.msra.mxu0 %v36
  %998 = vmatprep.subr.mxu0 0.0
  %999 = vmatpush1.msra.mxu0 %v39
  %1000 = vmatprep.subr.mxu0 0.0
  %1001 = vmatpush1.msra.mxu0 %v42
  %1002 = vmatprep.subr.mxu0 0.0
  %1003 = vmatpush1.msra.mxu0 %v45
  %1004 = vmatprep.subr.mxu0 0.0
  %1005 = vmatpush1.msra.mxu0 %v48
  %1006 = vmatprep.subr.mxu0 0.0
  %1007 = vmatpush1.msra.mxu0 %v51
  %1008 = vmatprep.subr.mxu0 0.0
  %1009 = vmatpush1.msra.mxu0 %v54
  %1010 = vmatprep.subr.mxu0 0.0
  %1011 = vmatpush1.msra.mxu0 %v57
  %1012 = vmatprep.subr.mxu0 0.0
  %1013 = vmatpush1.msra.mxu0 %v60
  %1014 = vmatprep.subr.mxu0 0.0
  %1015 = vmatpush1.msra.mxu0 %v63
  %1016 = vmatprep.subr.mxu0 0.0
  %1017 = vmatpush1.msra.mxu0 %v66
  %1018 = vmatprep.subr.mxu0 0.0
  %1019 = vmatpush1.msra.mxu0 %v69
  %1020 = vmatprep.subr.mxu0 0.0
  %1021 = vmatpush1.msra.mxu0 %v72
  %1022 = vmatprep.subr.mxu0 0.0
  %1023 = vmatpush1.msra.mxu0 0.0
  %1024 = vmatprep.subr.mxu0 0.0
  %1025 = vmatpush1.msra.mxu0 0.0
  %1026 = vmatprep.subr.mxu0 0.0
  %1027 = vmatpush1.msra.mxu0 0.0
  %1028 = vmatprep.subr.mxu0 0.0
  %1029 = vmatpush1.msra.mxu0 0.0
  %1030 = vmatprep.subr.mxu0 0.0
  %1031 = vmatpush1.msra.mxu0 0.0
  %1032 = vmatprep.subr.mxu0 0.0
  %1033 = vmatpush1.msra.mxu0 0.0
  %1034 = vmatprep.subr.mxu0 0.0
  %1035 = vmatpush1.msra.mxu0 0.0
  %1036 = vmatprep.subr.mxu0 0.0
  %1037 = vmatpush1.msra.mxu0 0.0
  %1038 = vmatprep.subr.mxu0 0.0
  %1039 = vmatpush1.msra.mxu0 0.0
  %1040 = vmatprep.subr.mxu0 0.0
  %1041 = vmatpush1.msra.mxu0 0.0
  %1042 = vmatprep.subr.mxu0 0.0
  %1043 = vmatpush1.msra.mxu0 0.0
  %1044 = vmatprep.subr.mxu0 0.0
  %1045 = vmatpush1.msra.mxu0 0.0
  %1046 = vmatprep.subr.mxu0 0.0
  %1047 = vmatpush1.msra.mxu0 0.0
  %1048 = vmatprep.subr.mxu0 0.0
  %1049 = vmatpush1.msra.mxu0 0.0
  %1050 = vmatprep.subr.mxu0 0.0
  %1051 = vmatpush1.msra.mxu0 0.0
  %1052 = vmatprep.subr.mxu0 0.0
  %1053 = vmatpush1.msra.mxu0 0.0
  %1054 = vmatprep.mubr.f32.mxu0 0.0
  %1055 = vmatmul.mubr.f32.gmra.mrb[0].mxu0 %v914
  %v1056 = vpop.f32.mrb[0].mxu0
  %v1057 = vadd.f32 0.0, %v1056
  %v1058 = vpop.f32.mrb[0].mxu0
  %1059 = vdwg.mxu0
  %v1060 = vadd.f32 %v916, %v986
  %v1061 = vxor.u32 %v1060, 2147483648
  %v1062 = vmul.f32 %v1061, 1.442695
  %v1063 = vpow.pop %v1062
  %v1064 = vadd.f32 %v1063, 1.0
  %v1065 = vrcp.pop %v1064
  %v1066 = vmul.f32 1.0, %v1065
  %v1067 = vadd.f32 %v917, %v988
  %v1068 = vxor.u32 %v1067, 2147483648
  %v1069 = vmul.f32 %v1068, 1.442695
  %v1070 = vpow.pop %v1069
  %v1071 = vadd.f32 %v1070, 1.0
  %v1072 = vrcp.pop %v1071
  %v1073 = vmul.f32 1.0, %v1072
  %v1074 = vadd.f32 %v1057, %v237
  %v1075 = vmul.f32 %v1066, %v1074
  %v1076 = vadd.f32 %v918, %v1075
  %v1077 = vtanh.pop %v1076
  %v1078 = vsub.f32 1.0, %v1073
  %v1079 = vmul.f32 %v1078, %v1077
  %v1080 = vmul.f32 %v1073, %v914
  %v1081 = vadd.f32 %v1079, %v1080
  %s1082 = scalar_lea.vmem %s0, 144
  %v1083 = vld [vmem:[%s1082] sm:$0xff]
  %v1084 = vld [vmem:[%s1082 + $0x8] sm:$0xff]
  %v1085 = vld [vmem:[%s1082 + $0x10] sm:$0xff]
  %1086 = vmatprep.subr.mxu0 %v26
  %1087 = vmatpush1.msra.mxu0 %v25
  %1088 = vmatprep.subr.mxu0 %v29
  %1089 = vmatpush1.msra.mxu0 %v28
  %1090 = vmatprep.subr.mxu0 %v32
  %1091 = vmatpush1.msra.mxu0 %v31
  %1092 = vmatprep.subr.mxu0 %v35
  %1093 = vmatpush1.msra.mxu0 %v34
  %1094 = vmatprep.subr.mxu0 %v38
  %1095 = vmatpush1.msra.mxu0 %v37
  %1096 = vmatprep.subr.mxu0 %v41
  %1097 = vmatpush1.msra.mxu0 %v40
  %1098 = vmatprep.subr.mxu0 %v44
  %1099 = vmatpush1.msra.mxu0 %v43
  %1100 = vmatprep.subr.mxu0 %v47
  %1101 = vmatpush1.msra.mxu0 %v46
  %1102 = vmatprep.subr.mxu0 %v50
  %1103 = vmatpush1.msra.mxu0 %v49
  %1104 = vmatprep.subr.mxu0 %v53
  %1105 = vmatpush1.msra.mxu0 %v52
  %1106 = vmatprep.subr.mxu0 %v56
  %1107 = vmatpush1.msra.mxu0 %v55
  %1108 = vmatprep.subr.mxu0 %v59
  %1109 = vmatpush1.msra.mxu0 %v58
  %1110 = vmatprep.subr.mxu0 %v62
  %1111 = vmatpush1.msra.mxu0 %v61
  %1112 = vmatprep.subr.mxu0 %v65
  %1113 = vmatpush1.msra.mxu0 %v64
  %1114 = vmatprep.subr.mxu0 %v68
  %1115 = vmatpush1.msra.mxu0 %v67
  %1116 = vmatprep.subr.mxu0 %v71
  %1117 = vmatpush1.msra.mxu0 %v70
  %1118 = vmatprep.subr.mxu0 0.0
  %1119 = vmatpush1.msra.mxu0 0.0
  %1120 = vmatprep.subr.mxu0 0.0
  %1121 = vmatpush1.msra.mxu0 0.0
  %1122 = vmatprep.subr.mxu0 0.0
  %1123 = vmatpush1.msra.mxu0 0.0
  %1124 = vmatprep.subr.mxu0 0.0
  %1125 = vmatpush1.msra.mxu0 0.0
  %1126 = vmatprep.subr.mxu0 0.0
  %1127 = vmatpush1.msra.mxu0 0.0
  %1128 = vmatprep.subr.mxu0 0.0
  %1129 = vmatpush1.msra.mxu0 0.0
  %1130 = vmatprep.subr.mxu0 0.0
  %1131 = vmatpush1.msra.mxu0 0.0
  %1132 = vmatprep.subr.mxu0 0.0
  %1133 = vmatpush1.msra.mxu0 0.0
  %1134 = vmatprep.subr.mxu0 0.0
  %1135 = vmatpush1.msra.mxu0 0.0
  %1136 = vmatprep.subr.mxu0 0.0
  %1137 = vmatpush1.msra.mxu0 0.0
  %1138 = vmatprep.subr.mxu0 0.0
  %1139 = vmatpush1.msra.mxu0 0.0
  %1140 = vmatprep.subr.mxu0 0.0
  %1141 = vmatpush1.msra.mxu0 0.0
  %1142 = vmatprep.subr.mxu0 0.0
  %1143 = vmatpush1.msra.mxu0 0.0
  %1144 = vmatprep.subr.mxu0 0.0
  %1145 = vmatpush1.msra.mxu0 0.0
  %1146 = vmatprep.subr.mxu0 0.0
  %1147 = vmatpush1.msra.mxu0 0.0
  %1148 = vmatprep.subr.mxu0 0.0
  %1149 = vmatpush1.msra.mxu0 0.0
  %1150 = vmatprep.mubr.f32.mxu0 0.0
  %1151 = vmatmul.mubr.f32.gmra.mrb[0].mxu0 %v1081
  %v1152 = vpop.f32.mrb[0].mxu0
  %v1153 = vadd.f32 0.0, %v1152
  %v1154 = vpop.f32.mrb[0].mxu0
  %v1155 = vadd.f32 0.0, %v1154
  %1156 = vdwg.mxu0
  %1157 = vmatprep.subr.mxu0 0.0
  %1158 = vmatpush1.msra.mxu0 %v27
  %1159 = vmatprep.subr.mxu0 0.0
  %1160 = vmatpush1.msra.mxu0 %v30
  %1161 = vmatprep.subr.mxu0 0.0
  %1162 = vmatpush1.msra.mxu0 %v33
  %1163 = vmatprep.subr.mxu0 0.0
  %1164 = vmatpush1.msra.mxu0 %v36
  %1165 = vmatprep.subr.mxu0 0.0
  %1166 = vmatpush1.msra.mxu0 %v39
  %1167 = vmatprep.subr.mxu0 0.0
  %1168 = vmatpush1.msra.mxu0 %v42
  %1169 = vmatprep.subr.mxu0 0.0
  %1170 = vmatpush1.msra.mxu0 %v45
  %1171 = vmatprep.subr.mxu0 0.0
  %1172 = vmatpush1.msra.mxu0 %v48
  %1173 = vmatprep.subr.mxu0 0.0
  %1174 = vmatpush1.msra.mxu0 %v51
  %1175 = vmatprep.subr.mxu0 0.0
  %1176 = vmatpush1.msra.mxu0 %v54
  %1177 = vmatprep.subr.mxu0 0.0
  %1178 = vmatpush1.msra.mxu0 %v57
  %1179 = vmatprep.subr.mxu0 0.0
  %1180 = vmatpush1.msra.mxu0 %v60
  %1181 = vmatprep.subr.mxu0 0.0
  %1182 = vmatpush1.msra.mxu0 %v63
  %1183 = vmatprep.subr.mxu0 0.0
  %1184 = vmatpush1.msra.mxu0 %v66
  %1185 = vmatprep.subr.mxu0 0.0
  %1186 = vmatpush1.msra.mxu0 %v69
  %1187 = vmatprep.subr.mxu0 0.0
  %1188 = vmatpush1.msra.mxu0 %v72
  %1189 = vmatprep.subr.mxu0 0.0
  %1190 = vmatpush1.msra.mxu0 0.0
  %1191 = vmatprep.subr.mxu0 0.0
  %1192 = vmatpush1.msra.mxu0 0.0
  %1193 = vmatprep.subr.mxu0 0.0
  %1194 = vmatpush1.msra.mxu0 0.0
  %1195 = vmatprep.subr.mxu0 0.0
  %1196 = vmatpush1.msra.mxu0 0.0
  %1197 = vmatprep.subr.mxu0 0.0
  %1198 = vmatpush1.msra.mxu0 0.0
  %1199 = vmatprep.subr.mxu0 0.0
  %1200 = vmatpush1.msra.mxu0 0.0
  %1201 = vmatprep.subr.mxu0 0.0
  %1202 = vmatpush1.msra.mxu0 0.0
  %1203 = vmatprep.subr.mxu0 0.0
  %1204 = vmatpush1.msra.mxu0 0.0
  %1205 = vmatprep.subr.mxu0 0.0
  %1206 = vmatpush1.msra.mxu0 0.0
  %1207 = vmatprep.subr.mxu0 0.0
  %1208 = vmatpush1.msra.mxu0 0.0
  %1209 = vmatprep.subr.mxu0 0.0
  %1210 = vmatpush1.msra.mxu0 0.0
  %1211 = vmatprep.subr.mxu0 0.0
  %1212 = vmatpush1.msra.mxu0 0.0
  %1213 = vmatprep.subr.mxu0 0.0
  %1214 = vmatpush1.msra.mxu0 0.0
  %1215 = vmatprep.subr.mxu0 0.0
  %1216 = vmatpush1.msra.mxu0 0.0
  %1217 = vmatprep.subr.mxu0 0.0
  %1218 = vmatpush1.msra.mxu0 0.0
  %1219 = vmatprep.subr.mxu0 0.0
  %1220 = vmatpush1.msra.mxu0 0.0
  %1221 = vmatprep.mubr.f32.mxu0 0.0
  %1222 = vmatmul.mubr.f32.gmra.mrb[0].mxu0 %v1081
  %v1223 = vpop.f32.mrb[0].mxu0
  %v1224 = vadd.f32 0.0, %v1223
  %v1225 = vpop.f32.mrb[0].mxu0
  %1226 = vdwg.mxu0
  %v1227 = vadd.f32 %v1083, %v1153
  %v1228 = vxor.u32 %v1227, 2147483648
  %v1229 = vmul.f32 %v1228, 1.442695
  %v1230 = vpow.pop %v1229
  %v1231 = vadd.f32 %v1230, 1.0
  %v1232 = vrcp.pop %v1231
  %v1233 = vmul.f32 1.0, %v1232
  %v1234 = vadd.f32 %v1084, %v1155
  %v1235 = vxor.u32 %v1234, 2147483648
  %v1236 = vmul.f32 %v1235, 1.442695
  %v1237 = vpow.pop %v1236
  %v1238 = vadd.f32 %v1237, 1.0
  %v1239 = vrcp.pop %v1238
  %v1240 = vmul.f32 1.0, %v1239
  %v1241 = vadd.f32 %v1224, %v237
  %v1242 = vmul.f32 %v1233, %v1241
  %v1243 = vadd.f32 %v1085, %v1242
  %v1244 = vtanh.pop %v1243
  %v1245 = vsub.f32 1.0, %v1240
  %v1246 = vmul.f32 %v1245, %v1244
  %v1247 = vmul.f32 %v1240, %v1081
  %v1248 = vadd.f32 %v1246, %v1247
  %s1249 = scalar_lea.vmem %s0, 168
  %v1250 = vld [vmem:[%s1249] sm:$0xff]
  %v1251 = vld [vmem:[%s1249 + $0x8] sm:$0xff]
  %v1252 = vld [vmem:[%s1249 + $0x10] sm:$0xff]
  %1253 = vmatprep.subr.mxu0 %v26
  %1254 = vmatpush1.msra.mxu0 %v25
  %1255 = vmatprep.subr.mxu0 %v29
  %1256 = vmatpush1.msra.mxu0 %v28
  %1257 = vmatprep.subr.mxu0 %v32
  %1258 = vmatpush1.msra.mxu0 %v31
  %1259 = vmatprep.subr.mxu0 %v35
  %1260 = vmatpush1.msra.mxu0 %v34
  %1261 = vmatprep.subr.mxu0 %v38
  %1262 = vmatpush1.msra.mxu0 %v37
  %1263 = vmatprep.subr.mxu0 %v41
  %1264 = vmatpush1.msra.mxu0 %v40
  %1265 = vmatprep.subr.mxu0 %v44
  %1266 = vmatpush1.msra.mxu0 %v43
  %1267 = vmatprep.subr.mxu0 %v47
  %1268 = vmatpush1.msra.mxu0 %v46
  %1269 = vmatprep.subr.mxu0 %v50
  %1270 = vmatpush1.msra.mxu0 %v49
  %1271 = vmatprep.subr.mxu0 %v53
  %1272 = vmatpush1.msra.mxu0 %v52
  %1273 = vmatprep.subr.mxu0 %v56
  %1274 = vmatpush1.msra.mxu0 %v55
  %1275 = vmatprep.subr.mxu0 %v59
  %1276 = vmatpush1.msra.mxu0 %v58
  %1277 = vmatprep.subr.mxu0 %v62
  %1278 = vmatpush1.msra.mxu0 %v61
  %1279 = vmatprep.subr.mxu0 %v65
  %1280 = vmatpush1.msra.mxu0 %v64
  %1281 = vmatprep.subr.mxu0 %v68
  %1282 = vmatpush1.msra.mxu0 %v67
  %1283 = vmatprep.subr.mxu0 %v71
  %1284 = vmatpush1.msra.mxu0 %v70
  %1285 = vmatprep.subr.mxu0 0.0
  %1286 = vmatpush1.msra.mxu0 0.0
  %1287 = vmatprep.subr.mxu0 0.0
  %1288 = vmatpush1.msra.mxu0 0.0
  %1289 = vmatprep.subr.mxu0 0.0
  %1290 = vmatpush1.msra.mxu0 0.0
  %1291 = vmatprep.subr.mxu0 0.0
  %1292 = vmatpush1.msra.mxu0 0.0
  %1293 = vmatprep.subr.mxu0 0.0
  %1294 = vmatpush1.msra.mxu0 0.0
  %1295 = vmatprep.subr.mxu0 0.0
  %1296 = vmatpush1.msra.mxu0 0.0
  %1297 = vmatprep.subr.mxu0 0.0
  %1298 = vmatpush1.msra.mxu0 0.0
  %1299 = vmatprep.subr.mxu0 0.0
  %1300 = vmatpush1.msra.mxu0 0.0
  %1301 = vmatprep.subr.mxu0 0.0
  %1302 = vmatpush1.msra.mxu0 0.0
  %1303 = vmatprep.subr.mxu0 0.0
  %1304 = vmatpush1.msra.mxu0 0.0
  %1305 = vmatprep.subr.mxu0 0.0
  %1306 = vmatpush1.msra.mxu0 0.0
  %1307 = vmatprep.subr.mxu0 0.0
  %1308 = vmatpush1.msra.mxu0 0.0
  %1309 = vmatprep.subr.mxu0 0.0
  %1310 = vmatpush1.msra.mxu0 0.0
  %1311 = vmatprep.subr.mxu0 0.0
  %1312 = vmatpush1.msra.mxu0 0.0
  %1313 = vmatprep.subr.mxu0 0.0
  %1314 = vmatpush1.msra.mxu0 0.0
  %1315 = vmatprep.subr.mxu0 0.0
  %1316 = vmatpush1.msra.mxu0 0.0
  %1317 = vmatprep.mubr.f32.mxu0 0.0
  %1318 = vmatmul.mubr.f32.gmra.mrb[0].mxu0 %v1248
  %v1319 = vpop.f32.mrb[0].mxu0
  %v1320 = vadd.f32 0.0, %v1319
  %v1321 = vpop.f32.mrb[0].mxu0
  %v1322 = vadd.f32 0.0, %v1321
  %1323 = vdwg.mxu0
  %1324 = vmatprep.subr.mxu0 0.0
  %1325 = vmatpush1.msra.mxu0 %v27
  %1326 = vmatprep.subr.mxu0 0.0
  %1327 = vmatpush1.msra.mxu0 %v30
  %1328 = vmatprep.subr.mxu0 0.0
  %1329 = vmatpush1.msra.mxu0 %v33
  %1330 = vmatprep.subr.mxu0 0.0
  %1331 = vmatpush1.msra.mxu0 %v36
  %1332 = vmatprep.subr.mxu0 0.0
  %1333 = vmatpush1.msra.mxu0 %v39
  %1334 = vmatprep.subr.mxu0 0.0
  %1335 = vmatpush1.msra.mxu0 %v42
  %1336 = vmatprep.subr.mxu0 0.0
  %1337 = vmatpush1.msra.mxu0 %v45
  %1338 = vmatprep.subr.mxu0 0.0
  %1339 = vmatpush1.msra.mxu0 %v48
  %1340 = vmatprep.subr.mxu0 0.0
  %1341 = vmatpush1.msra.mxu0 %v51
  %1342 = vmatprep.subr.mxu0 0.0
  %1343 = vmatpush1.msra.mxu0 %v54
  %1344 = vmatprep.subr.mxu0 0.0
  %1345 = vmatpush1.msra.mxu0 %v57
  %1346 = vmatprep.subr.mxu0 0.0
  %1347 = vmatpush1.msra.mxu0 %v60
  %1348 = vmatprep.subr.mxu0 0.0
  %1349 = vmatpush1.msra.mxu0 %v63
  %1350 = vmatprep.subr.mxu0 0.0
  %1351 = vmatpush1.msra.mxu0 %v66
  %1352 = vmatprep.subr.mxu0 0.0
  %1353 = vmatpush1.msra.mxu0 %v69
  %1354 = vmatprep.subr.mxu0 0.0
  %1355 = vmatpush1.msra.mxu0 %v72
  %1356 = vmatprep.subr.mxu0 0.0
  %1357 = vmatpush1.msra.mxu0 0.0
  %1358 = vmatprep.subr.mxu0 0.0
  %1359 = vmatpush1.msra.mxu0 0.0
  %1360 = vmatprep.subr.mxu0 0.0
  %1361 = vmatpush1.msra.mxu0 0.0
  %1362 = vmatprep.subr.mxu0 0.0
  %1363 = vmatpush1.msra.mxu0 0.0
  %1364 = vmatprep.subr.mxu0 0.0
  %1365 = vmatpush1.msra.mxu0 0.0
  %1366 = vmatprep.subr.mxu0 0.0
  %1367 = vmatpush1.msra.mxu0 0.0
  %1368 = vmatprep.subr.mxu0 0.0
  %1369 = vmatpush1.msra.mxu0 0.0
  %1370 = vmatprep.subr.mxu0 0.0
  %1371 = vmatpush1.msra.mxu0 0.0
  %1372 = vmatprep.subr.mxu0 0.0
  %1373 = vmatpush1.msra.mxu0 0.0
  %1374 = vmatprep.subr.mxu0 0.0
  %1375 = vmatpush1.msra.mxu0 0.0
  %1376 = vmatprep.subr.mxu0 0.0
  %1377 = vmatpush1.msra.mxu0 0.0
  %1378 = vmatprep.subr.mxu0 0.0
  %1379 = vmatpush1.msra.mxu0 0.0
  %1380 = vmatprep.subr.mxu0 0.0
  %1381 = vmatpush1.msra.mxu0 0.0
  %1382 = vmatprep.subr.mxu0 0.0
  %1383 = vmatpush1.msra.mxu0 0.0
  %1384 = vmatprep.subr.mxu0 0.0
  %1385 = vmatpush1.msra.mxu0 0.0
  %1386 = vmatprep.subr.mxu0 0.0
  %1387 = vmatpush1.msra.mxu0 0.0
  %1388 = vmatprep.mubr.f32.mxu0 0.0
  %1389 = vmatmul.mubr.f32.gmra.mrb[0].mxu0 %v1248
  %v1390 = vpop.f32.mrb[0].mxu0
  %v1391 = vadd.f32 0.0, %v1390
  %v1392 = vpop.f32.mrb[0].mxu0
  %1393 = vdwg.mxu0
  %v1394 = vadd.f32 %v1250, %v1320
  %v1395 = vxor.u32 %v1394, 2147483648
  %v1396 = vmul.f32 %v1395, 1.442695
  %v1397 = vpow.pop %v1396
  %v1398 = vadd.f32 %v1397, 1.0
  %v1399 = vrcp.pop %v1398
  %v1400 = vmul.f32 1.0, %v1399
  %v1401 = vadd.f32 %v1251, %v1322
  %v1402 = vxor.u32 %v1401, 2147483648
  %v1403 = vmul.f32 %v1402, 1.442695
  %v1404 = vpow.pop %v1403
  %v1405 = vadd.f32 %v1404, 1.0
  %v1406 = vrcp.pop %v1405
  %v1407 = vmul.f32 1.0, %v1406
  %v1408 = vadd.f32 %v1391, %v237
  %v1409 = vmul.f32 %v1400, %v1408
  %v1410 = vadd.f32 %v1252, %v1409
  %v1411 = vtanh.pop %v1410
  %v1412 = vsub.f32 1.0, %v1407
  %v1413 = vmul.f32 %v1412, %v1411
  %v1414 = vmul.f32 %v1407, %v1248
  %v1415 = vadd.f32 %v1413, %v1414
  %1416 = vst [vmem:[#allocation2] sm:$0xff] %v1415
  // Predicated region
  $region26: #{gru_model_forward.11} parent=0 // pred_check
    %p1417 = pneg %p20
  $region27: #{gru_model_forward.11} parent=0 // pred_check_branch
    %1419 = sbr.rel (%p1417) target = $region29
  $region28: #{gru_model_forward.11} parent=0 // pred_region
    %v1420 = vld [vmem:[#allocation2] sm:$0xff]
    %v1421 = vld [vmem:[%s3] sm:$0xff]
    %v1422 = vld [vmem:[%s3 + $0x8] sm:$0xff]
    %v1423 = vld [vmem:[%s3 + $0x10] sm:$0xff]
    %v1424 = vld [vmem:[%s3 + $0x18] sm:$0xff]
    %v1425 = vld [vmem:[%s3 + $0x20] sm:$0xff]
    %v1426 = vld [vmem:[%s3 + $0x28] sm:$0xff]
    %v1427 = vld [vmem:[%s3 + $0x30] sm:$0xff]
    %v1428 = vld [vmem:[%s3 + $0x38] sm:$0xff]
    %v1429 = vld [vmem:[%s3 + $0x40] sm:$0xff]
    %v1430 = vld [vmem:[%s3 + $0x48] sm:$0xff]
    %v1431 = vld [vmem:[%s3 + $0x50] sm:$0xff]
    %v1432 = vld [vmem:[%s3 + $0x58] sm:$0xff]
    %v1433 = vld [vmem:[%s3 + $0x60] sm:$0xff]
    %v1434 = vld [vmem:[%s3 + $0x68] sm:$0xff]
    %v1435 = vld [vmem:[%s3 + $0x70] sm:$0xff]
    %v1436 = vld [vmem:[%s3 + $0x78] sm:$0xff]
    %v1437 = vld [vmem:[%s4] sm:$0x1]
    %v1439 = vlaneseq
    %v1440 = vshrl.u32 %v1439, 7
    %v1441 = vsub.s32 0, %v1440
    %v1442 = vrot.slane %v1437, %v1441
    %1444 = vmatprep.subr.mxu0 0.0
    %1445 = vmatpush1.msra.mxu0 %v1421
    %1446 = vmatprep.subr.mxu0 0.0
    %1447 = vmatpush1.msra.mxu0 %v1422
    %1448 = vmatprep.subr.mxu0 0.0
    %1449 = vmatpush1.msra.mxu0 %v1423
    %1450 = vmatprep.subr.mxu0 0.0
    %1451 = vmatpush1.msra.mxu0 %v1424
    %1452 = vmatprep.subr.mxu0 0.0
    %1453 = vmatpush1.msra.mxu0 %v1425
    %1454 = vmatprep.subr.mxu0 0.0
    %1455 = vmatpush1.msra.mxu0 %v1426
    %1456 = vmatprep.subr.mxu0 0.0
    %1457 = vmatpush1.msra.mxu0 %v1427
    %1458 = vmatprep.subr.mxu0 0.0
    %1459 = vmatpush1.msra.mxu0 %v1428
    %1460 = vmatprep.subr.mxu0 0.0
    %1461 = vmatpush1.msra.mxu0 %v1429
    %1462 = vmatprep.subr.mxu0 0.0
    %1463 = vmatpush1.msra.mxu0 %v1430
    %1464 = vmatprep.subr.mxu0 0.0
    %1465 = vmatpush1.msra.mxu0 %v1431
    %1466 = vmatprep.subr.mxu0 0.0
    %1467 = vmatpush1.msra.mxu0 %v1432
    %1468 = vmatprep.subr.mxu0 0.0
    %1469 = vmatpush1.msra.mxu0 %v1433
    %1470 = vmatprep.subr.mxu0 0.0
    %1471 = vmatpush1.msra.mxu0 %v1434
    %1472 = vmatprep.subr.mxu0 0.0
    %1473 = vmatpush1.msra.mxu0 %v1435
    %1474 = vmatprep.subr.mxu0 0.0
    %1475 = vmatpush1.msra.mxu0 %v1436
    %1476 = vmatprep.subr.mxu0 0.0
    %1477 = vmatpush1.msra.mxu0 0.0
    %1478 = vmatprep.subr.mxu0 0.0
    %1479 = vmatpush1.msra.mxu0 0.0
    %1480 = vmatprep.subr.mxu0 0.0
    %1481 = vmatpush1.msra.mxu0 0.0
    %1482 = vmatprep.subr.mxu0 0.0
    %1483 = vmatpush1.msra.mxu0 0.0
    %1484 = vmatprep.subr.mxu0 0.0
    %1485 = vmatpush1.msra.mxu0 0.0
    %1486 = vmatprep.subr.mxu0 0.0
    %1487 = vmatpush1.msra.mxu0 0.0
    %1488 = vmatprep.subr.mxu0 0.0
    %1489 = vmatpush1.msra.mxu0 0.0
    %1490 = vmatprep.subr.mxu0 0.0
    %1491 = vmatpush1.msra.mxu0 0.0
    %1492 = vmatprep.subr.mxu0 0.0
    %1493 = vmatpush1.msra.mxu0 0.0
    %1494 = vmatprep.subr.mxu0 0.0
    %1495 = vmatpush1.msra.mxu0 0.0
    %1496 = vmatprep.subr.mxu0 0.0
    %1497 = vmatpush1.msra.mxu0 0.0
    %1498 = vmatprep.subr.mxu0 0.0
    %1499 = vmatpush1.msra.mxu0 0.0
    %1500 = vmatprep.subr.mxu0 0.0
    %1501 = vmatpush1.msra.mxu0 0.0
    %1502 = vmatprep.subr.mxu0 0.0
    %1503 = vmatpush1.msra.mxu0 0.0
    %1504 = vmatprep.subr.mxu0 0.0
    %1505 = vmatpush1.msra.mxu0 0.0
    %1506 = vmatprep.subr.mxu0 0.0
    %1507 = vmatpush1.msra.mxu0 0.0
    %1508 = vmatprep.mubr.f32.mxu0 0.0
    %1509 = vmatmul.mubr.f32.gmra.mrb[0].mxu0 %v1420
    %v1510 = vpop.f32.mrb[0].mxu0
    %v1511 = vadd.f32 %v1442, %v1510
    %v1512 = vpop.f32.mrb[0].mxu0
    %1513 = vdwg.mxu0
    %vm1514 = vcmask 31744
    %1515 = vst.msk [vmem:[%s5] sm:$0xff] %vm1514, %v1511
  $region29: #{gru_model_forward.11} parent=0 // pred_fallthru
    _
  // Predicated region
  $region30: #{gru_model_forward.11} parent=0 // pred_check
    _
  $region31: #{gru_model_forward.11} parent=0 // pred_check_branch
    %1517 = sbr.rel (0) target = $region33
  $region32: #{gru_model_forward.11} parent=0 // pred_region
    _
  $region33: #{gru_model_forward.11} parent=0 // pred_fallthru
    _
  // Predicated region
  $region34: #{gru_model_forward.11} parent=0 // pred_check
    _
  $region35: #{gru_model_forward.11} parent=0 // pred_check_branch
    %1519 = sbr.rel (0) target = $region37
  $region36: #{gru_model_forward.11} parent=0 // pred_region
    _
  $region37: #{gru_model_forward.11} parent=0 // pred_fallthru
    _

// kernel: gru_model_forward.7
$region0: #{gru_model_forward.7}
  #allocation0 [shape = 'u32[]', space=smem, size = 0x4, offset = 0x4, fixed_abs, tag = 'smem constant byte address 0x4 - core index']
  #allocation1 [shape = 'u32[144,128]{1,0:T(1,128)}', space=vmem, size = 0x12000, scoped, tag = 'internal scratch']
  #allocation2 [shape = 'f32[8,128]{1,0:T(8,128)}', space=vmem, size = 0x1000, scoped, tag = 'scratch operand']
  %s0 = inlined_call_operand.vmem [shape: f32[8,8,384], index: 0, kind: input, shape index: {}]
  %s1 = inlined_call_operand.vmem [shape: f32[128,384], index: 1, kind: input, shape index: {}]
  %s2 = inlined_call_operand.vmem [shape: f32[1,128], index: 2, kind: input, shape index: {}]
  %s3 = inlined_call_operand.vmem [shape: f32[8,8,128], index: 3, kind: output, shape index: {}]
  %s4 = sld [smem:[#allocation0]]
  $region26: #{gru_model_forward.7} parent=0
    _
  %s6 = ssub.s32 1, %s4
  %s7 = scalar_select 0, %s6, %s4
  // Predicated region
  $region2: #{gru_model_forward.7} parent=0 // pred_check
    _
  $region3: #{gru_model_forward.7} parent=0 // pred_check_branch
    %9 = sbr.rel (0) target = $region5
  $region4: #{gru_model_forward.7} parent=0 // pred_region
    _
  $region5: #{gru_model_forward.7} parent=0 // pred_fallthru
    _
  // Predicated region
  $region6: #{gru_model_forward.7} parent=0 // pred_check
    _
  $region7: #{gru_model_forward.7} parent=0 // pred_check_branch
    %11 = sbr.rel (0) target = $region9
  $region8: #{gru_model_forward.7} parent=0 // pred_region
    _
  $region9: #{gru_model_forward.7} parent=0 // pred_fallthru
    _
  // Predicated region
  $region10: #{gru_model_forward.7} parent=0 // pred_check
    _
  $region11: #{gru_model_forward.7} parent=0 // pred_check_branch
    %13 = sbr.rel (0) target = $region13
  $region12: #{gru_model_forward.7} parent=0 // pred_region
    _
  $region13: #{gru_model_forward.7} parent=0 // pred_fallthru
    _
  %p14 = scmp.eq.s32.totalorder 0, 0
  // Predicated region
  $region14: #{gru_model_forward.7} parent=0 // pred_check
    %p15 = pneg %p14
  $region15: #{gru_model_forward.7} parent=0 // pred_check_branch
    %17 = sbr.rel (%p15) target = $region17
  $region16: #{gru_model_forward.7} parent=0 // pred_region
    %18 = vst [vmem:[#allocation2] sm:$0xff] 0.0
  $region17: #{gru_model_forward.7} parent=0 // pred_fallthru
    _
  %v19 = vld [vmem:[%s1] sm:$0xff]
  %v20 = vld [vmem:[%s1 + $0x8] sm:$0xff]
  %v21 = vld [vmem:[%s1 + $0x10] sm:$0xff]
  %v22 = vld [vmem:[%s1 + $0x18] sm:$0xff]
  %v23 = vld [vmem:[%s1 + $0x20] sm:$0xff]
  %v24 = vld [vmem:[%s1 + $0x28] sm:$0xff]
  %v25 = vld [vmem:[%s1 + $0x30] sm:$0xff]
  %v26 = vld [vmem:[%s1 + $0x38] sm:$0xff]
  %v27 = vld [vmem:[%s1 + $0x40] sm:$0xff]
  %v28 = vld [vmem:[%s1 + $0x48] sm:$0xff]
  %v29 = vld [vmem:[%s1 + $0x50] sm:$0xff]
  %v30 = vld [vmem:[%s1 + $0x58] sm:$0xff]
  %v31 = vld [vmem:[%s1 + $0x60] sm:$0xff]
  %v32 = vld [vmem:[%s1 + $0x68] sm:$0xff]
  %v33 = vld [vmem:[%s1 + $0x70] sm:$0xff]
  %v34 = vld [vmem:[%s1 + $0x78] sm:$0xff]
  %v35 = vld [vmem:[%s1 + $0x80] sm:$0xff]
  %v36 = vld [vmem:[%s1 + $0x88] sm:$0xff]
  %v37 = vld [vmem:[%s1 + $0x90] sm:$0xff]
  %v38 = vld [vmem:[%s1 + $0x98] sm:$0xff]
  %v39 = vld [vmem:[%s1 + $0xa0] sm:$0xff]
  %v40 = vld [vmem:[%s1 + $0xa8] sm:$0xff]
  %v41 = vld [vmem:[%s1 + $0xb0] sm:$0xff]
  %v42 = vld [vmem:[%s1 + $0xb8] sm:$0xff]
  %v43 = vld [vmem:[%s1 + $0xc0] sm:$0xff]
  %v44 = vld [vmem:[%s1 + $0xc8] sm:$0xff]
  %v45 = vld [vmem:[%s1 + $0xd0] sm:$0xff]
  %v46 = vld [vmem:[%s1 + $0xd8] sm:$0xff]
  %v47 = vld [vmem:[%s1 + $0xe0] sm:$0xff]
  %v48 = vld [vmem:[%s1 + $0xe8] sm:$0xff]
  %v49 = vld [vmem:[%s1 + $0xf0] sm:$0xff]
  %v50 = vld [vmem:[%s1 + $0xf8] sm:$0xff]
  %v51 = vld [vmem:[%s1 + $0x100] sm:$0xff]
  %v52 = vld [vmem:[%s1 + $0x108] sm:$0xff]
  %v53 = vld [vmem:[%s1 + $0x110] sm:$0xff]
  %v54 = vld [vmem:[%s1 + $0x118] sm:$0xff]
  %v55 = vld [vmem:[%s1 + $0x120] sm:$0xff]
  %v56 = vld [vmem:[%s1 + $0x128] sm:$0xff]
  %v57 = vld [vmem:[%s1 + $0x130] sm:$0xff]
  %v58 = vld [vmem:[%s1 + $0x138] sm:$0xff]
  %v59 = vld [vmem:[%s1 + $0x140] sm:$0xff]
  %v60 = vld [vmem:[%s1 + $0x148] sm:$0xff]
  %v61 = vld [vmem:[%s1 + $0x150] sm:$0xff]
  %v62 = vld [vmem:[%s1 + $0x158] sm:$0xff]
  %v63 = vld [vmem:[%s1 + $0x160] sm:$0xff]
  %v64 = vld [vmem:[%s1 + $0x168] sm:$0xff]
  %v65 = vld [vmem:[%s1 + $0x170] sm:$0xff]
  %v66 = vld [vmem:[%s1 + $0x178] sm:$0xff]
  %v67 = vld [vmem:[%s2] sm:$0x1]
  %v68 = vld [vmem:[#allocation2] sm:$0xff]
  %v69 = vld [vmem:[%s0] sm:$0xff]
  %v70 = vld [vmem:[%s0 + $0x8] sm:$0xff]
  %v71 = vld [vmem:[%s0 + $0x10] sm:$0xff]
  %72 = vmatprep.subr.mxu0 %v20
  %73 = vmatpush1.msra.mxu0 %v19
  %74 = vmatprep.subr.mxu0 %v23
  %75 = vmatpush1.msra.mxu0 %v22
  %76 = vmatprep.subr.mxu0 %v26
  %77 = vmatpush1.msra.mxu0 %v25
  %78 = vmatprep.subr.mxu0 %v29
  %79 = vmatpush1.msra.mxu0 %v28
  %80 = vmatprep.subr.mxu0 %v32
  %81 = vmatpush1.msra.mxu0 %v31
  %82 = vmatprep.subr.mxu0 %v35
  %83 = vmatpush1.msra.mxu0 %v34
  %84 = vmatprep.subr.mxu0 %v38
  %85 = vmatpush1.msra.mxu0 %v37
  %86 = vmatprep.subr.mxu0 %v41
  %87 = vmatpush1.msra.mxu0 %v40
  %88 = vmatprep.subr.mxu0 %v44
  %89 = vmatpush1.msra.mxu0 %v43
  %90 = vmatprep.subr.mxu0 %v47
  %91 = vmatpush1.msra.mxu0 %v46
  %92 = vmatprep.subr.mxu0 %v50
  %93 = vmatpush1.msra.mxu0 %v49
  %94 = vmatprep.subr.mxu0 %v53
  %95 = vmatpush1.msra.mxu0 %v52
  %96 = vmatprep.subr.mxu0 %v56
  %97 = vmatpush1.msra.mxu0 %v55
  %98 = vmatprep.subr.mxu0 %v59
  %99 = vmatpush1.msra.mxu0 %v58
  %100 = vmatprep.subr.mxu0 %v62
  %101 = vmatpush1.msra.mxu0 %v61
  %102 = vmatprep.subr.mxu0 %v65
  %103 = vmatpush1.msra.mxu0 %v64
  %104 = vmatprep.subr.mxu0 0.0
  %105 = vmatpush1.msra.mxu0 0.0
  %106 = vmatprep.subr.mxu0 0.0
  %107 = vmatpush1.msra.mxu0 0.0
  %108 = vmatprep.subr.mxu0 0.0
  %109 = vmatpush1.msra.mxu0 0.0
  %110 = vmatprep.subr.mxu0 0.0
  %111 = vmatpush1.msra.mxu0 0.0
  %112 = vmatprep.subr.mxu0 0.0
  %113 = vmatpush1.msra.mxu0 0.0
  %114 = vmatprep.subr.mxu0 0.0
  %115 = vmatpush1.msra.mxu0 0.0
  %116 = vmatprep.subr.mxu0 0.0
  %117 = vmatpush1.msra.mxu0 0.0
  %118 = vmatprep.subr.mxu0 0.0
  %119 = vmatpush1.msra.mxu0 0.0
  %120 = vmatprep.subr.mxu0 0.0
  %121 = vmatpush1.msra.mxu0 0.0
  %122 = vmatprep.subr.mxu0 0.0
  %123 = vmatpush1.msra.mxu0 0.0
  %124 = vmatprep.subr.mxu0 0.0
  %125 = vmatpush1.msra.mxu0 0.0
  %126 = vmatprep.subr.mxu0 0.0
  %127 = vmatpush1.msra.mxu0 0.0
  %128 = vmatprep.subr.mxu0 0.0
  %129 = vmatpush1.msra.mxu0 0.0
  %130 = vmatprep.subr.mxu0 0.0
  %131 = vmatpush1.msra.mxu0 0.0
  %132 = vmatprep.subr.mxu0 0.0
  %133 = vmatpush1.msra.mxu0 0.0
  %134 = vmatprep.subr.mxu0 0.0
  %135 = vmatpush1.msra.mxu0 0.0
  %136 = vmatprep.mubr.f32.mxu0 0.0
  %137 = vmatmul.mubr.f32.gmra.mrb[0].mxu0 %v68
  %v138 = vpop.f32.mrb[0].mxu0
  %v139 = vadd.f32 0.0, %v138
  %v140 = vpop.f32.mrb[0].mxu0
  %v141 = vadd.f32 0.0, %v140
  %142 = vdwg.mxu0
  %143 = vmatprep.subr.mxu0 0.0
  %144 = vmatpush1.msra.mxu0 %v21
  %145 = vmatprep.subr.mxu0 0.0
  %146 = vmatpush1.msra.mxu0 %v24
  %147 = vmatprep.subr.mxu0 0.0
  %148 = vmatpush1.msra.mxu0 %v27
  %149 = vmatprep.subr.mxu0 0.0
  %150 = vmatpush1.msra.mxu0 %v30
  %151 = vmatprep.subr.mxu0 0.0
  %152 = vmatpush1.msra.mxu0 %v33
  %153 = vmatprep.subr.mxu0 0.0
  %154 = vmatpush1.msra.mxu0 %v36
  %155 = vmatprep.subr.mxu0 0.0
  %156 = vmatpush1.msra.mxu0 %v39
  %157 = vmatprep.subr.mxu0 0.0
  %158 = vmatpush1.msra.mxu0 %v42
  %159 = vmatprep.subr.mxu0 0.0
  %160 = vmatpush1.msra.mxu0 %v45
  %161 = vmatprep.subr.mxu0 0.0
  %162 = vmatpush1.msra.mxu0 %v48
  %163 = vmatprep.subr.mxu0 0.0
  %164 = vmatpush1.msra.mxu0 %v51
  %165 = vmatprep.subr.mxu0 0.0
  %166 = vmatpush1.msra.mxu0 %v54
  %167 = vmatprep.subr.mxu0 0.0
  %168 = vmatpush1.msra.mxu0 %v57
  %169 = vmatprep.subr.mxu0 0.0
  %170 = vmatpush1.msra.mxu0 %v60
  %171 = vmatprep.subr.mxu0 0.0
  %172 = vmatpush1.msra.mxu0 %v63
  %173 = vmatprep.subr.mxu0 0.0
  %174 = vmatpush1.msra.mxu0 %v66
  %175 = vmatprep.subr.mxu0 0.0
  %176 = vmatpush1.msra.mxu0 0.0
  %177 = vmatprep.subr.mxu0 0.0
  %178 = vmatpush1.msra.mxu0 0.0
  %179 = vmatprep.subr.mxu0 0.0
  %180 = vmatpush1.msra.mxu0 0.0
  %181 = vmatprep.subr.mxu0 0.0
  %182 = vmatpush1.msra.mxu0 0.0
  %183 = vmatprep.subr.mxu0 0.0
  %184 = vmatpush1.msra.mxu0 0.0
  %185 = vmatprep.subr.mxu0 0.0
  %186 = vmatpush1.msra.mxu0 0.0
  %187 = vmatprep.subr.mxu0 0.0
  %188 = vmatpush1.msra.mxu0 0.0
  %189 = vmatprep.subr.mxu0 0.0
  %190 = vmatpush1.msra.mxu0 0.0
  %191 = vmatprep.subr.mxu0 0.0
  %192 = vmatpush1.msra.mxu0 0.0
  %193 = vmatprep.subr.mxu0 0.0
  %194 = vmatpush1.msra.mxu0 0.0
  %195 = vmatprep.subr.mxu0 0.0
  %196 = vmatpush1.msra.mxu0 0.0
  %197 = vmatprep.subr.mxu0 0.0
  %198 = vmatpush1.msra.mxu0 0.0
  %199 = vmatprep.subr.mxu0 0.0
  %200 = vmatpush1.msra.mxu0 0.0
  %201 = vmatprep.subr.mxu0 0.0
  %202 = vmatpush1.msra.mxu0 0.0
  %203 = vmatprep.subr.mxu0 0.0
  %204 = vmatpush1.msra.mxu0 0.0
  %205 = vmatprep.subr.mxu0 0.0
  %206 = vmatpush1.msra.mxu0 0.0
  %207 = vmatprep.mubr.f32.mxu0 0.0
  %208 = vmatmul.mubr.f32.gmra.mrb[0].mxu0 %v68
  %v209 = vpop.f32.mrb[0].mxu0
  %v210 = vadd.f32 0.0, %v209
  %v211 = vpop.f32.mrb[0].mxu0
  %212 = vdwg.mxu0
  %v213 = vadd.f32 %v69, %v139
  %v214 = vxor.u32 %v213, 2147483648
  %v215 = vmul.f32 %v214, 1.442695
  %v216 = vpow.pop %v215
  %v217 = vadd.f32 %v216, 1.0
  %v218 = vrcp.pop %v217
  %v219 = vmul.f32 1.0, %v218
  %v220 = vadd.f32 %v70, %v141
  %v221 = vxor.u32 %v220, 2147483648
  %v222 = vmul.f32 %v221, 1.442695
  %v223 = vpow.pop %v222
  %v224 = vadd.f32 %v223, 1.0
  %v225 = vrcp.pop %v224
  %v226 = vmul.f32 1.0, %v225
  %v228 = vlaneseq
  %v229 = vshrl.u32 %v228, 7
  %v230 = vsub.s32 0, %v229
  %v231 = vrot.slane %v67, %v230
  %v233 = vadd.f32 %v210, %v231
  %v234 = vmul.f32 %v219, %v233
  %v235 = vadd.f32 %v71, %v234
  %v236 = vtanh.pop %v235
  %v237 = vsub.f32 1.0, %v226
  %v238 = vmul.f32 %v237, %v236
  %v239 = vmul.f32 %v226, %v68
  %v240 = vadd.f32 %v238, %v239
  %241 = vst [vmem:[%s3] sm:$0xff] %v240
  %s242 = scalar_lea.vmem %s0, 24
  %v243 = vld [vmem:[%s242] sm:$0xff]
  %v244 = vld [vmem:[%s242 + $0x8] sm:$0xff]
  %v245 = vld [vmem:[%s242 + $0x10] sm:$0xff]
  %246 = vmatprep.subr.mxu0 %v20
  %247 = vmatpush1.msra.mxu0 %v19
  %248 = vmatprep.subr.mxu0 %v23
  %249 = vmatpush1.msra.mxu0 %v22
  %250 = vmatprep.subr.mxu0 %v26
  %251 = vmatpush1.msra.mxu0 %v25
  %252 = vmatprep.subr.mxu0 %v29
  %253 = vmatpush1.msra.mxu0 %v28
  %254 = vmatprep.subr.mxu0 %v32
  %255 = vmatpush1.msra.mxu0 %v31
  %256 = vmatprep.subr.mxu0 %v35
  %257 = vmatpush1.msra.mxu0 %v34
  %258 = vmatprep.subr.mxu0 %v38
  %259 = vmatpush1.msra.mxu0 %v37
  %260 = vmatprep.subr.mxu0 %v41
  %261 = vmatpush1.msra.mxu0 %v40
  %262 = vmatprep.subr.mxu0 %v44
  %263 = vmatpush1.msra.mxu0 %v43
  %264 = vmatprep.subr.mxu0 %v47
  %265 = vmatpush1.msra.mxu0 %v46
  %266 = vmatprep.subr.mxu0 %v50
  %267 = vmatpush1.msra.mxu0 %v49
  %268 = vmatprep.subr.mxu0 %v53
  %269 = vmatpush1.msra.mxu0 %v52
  %270 = vmatprep.subr.mxu0 %v56
  %271 = vmatpush1.msra.mxu0 %v55
  %272 = vmatprep.subr.mxu0 %v59
  %273 = vmatpush1.msra.mxu0 %v58
  %274 = vmatprep.subr.mxu0 %v62
  %275 = vmatpush1.msra.mxu0 %v61
  %276 = vmatprep.subr.mxu0 %v65
  %277 = vmatpush1.msra.mxu0 %v64
  %278 = vmatprep.subr.mxu0 0.0
  %279 = vmatpush1.msra.mxu0 0.0
  %280 = vmatprep.subr.mxu0 0.0
  %281 = vmatpush1.msra.mxu0 0.0
  %282 = vmatprep.subr.mxu0 0.0
  %283 = vmatpush1.msra.mxu0 0.0
  %284 = vmatprep.subr.mxu0 0.0
  %285 = vmatpush1.msra.mxu0 0.0
  %286 = vmatprep.subr.mxu0 0.0
  %287 = vmatpush1.msra.mxu0 0.0
  %288 = vmatprep.subr.mxu0 0.0
  %289 = vmatpush1.msra.mxu0 0.0
  %290 = vmatprep.subr.mxu0 0.0
  %291 = vmatpush1.msra.mxu0 0.0
  %292 = vmatprep.subr.mxu0 0.0
  %293 = vmatpush1.msra.mxu0 0.0
  %294 = vmatprep.subr.mxu0 0.0
  %295 = vmatpush1.msra.mxu0 0.0
  %296 = vmatprep.subr.mxu0 0.0
  %297 = vmatpush1.msra.mxu0 0.0
  %298 = vmatprep.subr.mxu0 0.0
  %299 = vmatpush1.msra.mxu0 0.0
  %300 = vmatprep.subr.mxu0 0.0
  %301 = vmatpush1.msra.mxu0 0.0
  %302 = vmatprep.subr.mxu0 0.0
  %303 = vmatpush1.msra.mxu0 0.0
  %304 = vmatprep.subr.mxu0 0.0
  %305 = vmatpush1.msra.mxu0 0.0
  %306 = vmatprep.subr.mxu0 0.0
  %307 = vmatpush1.msra.mxu0 0.0
  %308 = vmatprep.subr.mxu0 0.0
  %309 = vmatpush1.msra.mxu0 0.0
  %310 = vmatprep.mubr.f32.mxu0 0.0
  %311 = vmatmul.mubr.f32.gmra.mrb[0].mxu0 %v240
  %v312 = vpop.f32.mrb[0].mxu0
  %v313 = vadd.f32 0.0, %v312
  %v314 = vpop.f32.mrb[0].mxu0
  %v315 = vadd.f32 0.0, %v314
  %316 = vdwg.mxu0
  %317 = vmatprep.subr.mxu0 0.0
  %318 = vmatpush1.msra.mxu0 %v21
  %319 = vmatprep.subr.mxu0 0.0
  %320 = vmatpush1.msra.mxu0 %v24
  %321 = vmatprep.subr.mxu0 0.0
  %322 = vmatpush1.msra.mxu0 %v27
  %323 = vmatprep.subr.mxu0 0.0
  %324 = vmatpush1.msra.mxu0 %v30
  %325 = vmatprep.subr.mxu0 0.0
  %326 = vmatpush1.msra.mxu0 %v33
  %327 = vmatprep.subr.mxu0 0.0
  %328 = vmatpush1.msra.mxu0 %v36
  %329 = vmatprep.subr.mxu0 0.0
  %330 = vmatpush1.msra.mxu0 %v39
  %331 = vmatprep.subr.mxu0 0.0
  %332 = vmatpush1.msra.mxu0 %v42
  %333 = vmatprep.subr.mxu0 0.0
  %334 = vmatpush1.msra.mxu0 %v45
  %335 = vmatprep.subr.mxu0 0.0
  %336 = vmatpush1.msra.mxu0 %v48
  %337 = vmatprep.subr.mxu0 0.0
  %338 = vmatpush1.msra.mxu0 %v51
  %339 = vmatprep.subr.mxu0 0.0
  %340 = vmatpush1.msra.mxu0 %v54
  %341 = vmatprep.subr.mxu0 0.0
  %342 = vmatpush1.msra.mxu0 %v57
  %343 = vmatprep.subr.mxu0 0.0
  %344 = vmatpush1.msra.mxu0 %v60
  %345 = vmatprep.subr.mxu0 0.0
  %346 = vmatpush1.msra.mxu0 %v63
  %347 = vmatprep.subr.mxu0 0.0
  %348 = vmatpush1.msra.mxu0 %v66
  %349 = vmatprep.subr.mxu0 0.0
  %350 = vmatpush1.msra.mxu0 0.0
  %351 = vmatprep.subr.mxu0 0.0
  %352 = vmatpush1.msra.mxu0 0.0
  %353 = vmatprep.subr.mxu0 0.0
  %354 = vmatpush1.msra.mxu0 0.0
  %355 = vmatprep.subr.mxu0 0.0
  %356 = vmatpush1.msra.mxu0 0.0
  %357 = vmatprep.subr.mxu0 0.0
  %358 = vmatpush1.msra.mxu0 0.0
  %359 = vmatprep.subr.mxu0 0.0
  %360 = vmatpush1.msra.mxu0 0.0
  %361 = vmatprep.subr.mxu0 0.0
  %362 = vmatpush1.msra.mxu0 0.0
  %363 = vmatprep.subr.mxu0 0.0
  %364 = vmatpush1.msra.mxu0 0.0
  %365 = vmatprep.subr.mxu0 0.0
  %366 = vmatpush1.msra.mxu0 0.0
  %367 = vmatprep.subr.mxu0 0.0
  %368 = vmatpush1.msra.mxu0 0.0
  %369 = vmatprep.subr.mxu0 0.0
  %370 = vmatpush1.msra.mxu0 0.0
  %371 = vmatprep.subr.mxu0 0.0
  %372 = vmatpush1.msra.mxu0 0.0
  %373 = vmatprep.subr.mxu0 0.0
  %374 = vmatpush1.msra.mxu0 0.0
  %375 = vmatprep.subr.mxu0 0.0
  %376 = vmatpush1.msra.mxu0 0.0
  %377 = vmatprep.subr.mxu0 0.0
  %378 = vmatpush1.msra.mxu0 0.0
  %379 = vmatprep.subr.mxu0 0.0
  %380 = vmatpush1.msra.mxu0 0.0
  %381 = vmatprep.mubr.f32.mxu0 0.0
  %382 = vmatmul.mubr.f32.gmra.mrb[0].mxu0 %v240
  %v383 = vpop.f32.mrb[0].mxu0
  %v384 = vadd.f32 0.0, %v383
  %v385 = vpop.f32.mrb[0].mxu0
  %386 = vdwg.mxu0
  %v387 = vadd.f32 %v243, %v313
  %v388 = vxor.u32 %v387, 2147483648
  %v389 = vmul.f32 %v388, 1.442695
  %v390 = vpow.pop %v389
  %v391 = vadd.f32 %v390, 1.0
  %v392 = vrcp.pop %v391
  %v393 = vmul.f32 1.0, %v392
  %v394 = vadd.f32 %v244, %v315
  %v395 = vxor.u32 %v394, 2147483648
  %v396 = vmul.f32 %v395, 1.442695
  %v397 = vpow.pop %v396
  %v398 = vadd.f32 %v397, 1.0
  %v399 = vrcp.pop %v398
  %v400 = vmul.f32 1.0, %v399
  %v401 = vadd.f32 %v384, %v231
  %v402 = vmul.f32 %v393, %v401
  %v403 = vadd.f32 %v245, %v402
  %v404 = vtanh.pop %v403
  %v405 = vsub.f32 1.0, %v400
  %v406 = vmul.f32 %v405, %v404
  %v407 = vmul.f32 %v400, %v240
  %v408 = vadd.f32 %v406, %v407
  %s409 = scalar_lea.vmem %s3, 8
  %410 = vst [vmem:[%s409] sm:$0xff] %v408
  %s411 = scalar_lea.vmem %s0, 48
  %v412 = vld [vmem:[%s411] sm:$0xff]
  %v413 = vld [vmem:[%s411 + $0x8] sm:$0xff]
  %v414 = vld [vmem:[%s411 + $0x10] sm:$0xff]
  %415 = vmatprep.subr.mxu0 %v20
  %416 = vmatpush1.msra.mxu0 %v19
  %417 = vmatprep.subr.mxu0 %v23
  %418 = vmatpush1.msra.mxu0 %v22
  %419 = vmatprep.subr.mxu0 %v26
  %420 = vmatpush1.msra.mxu0 %v25
  %421 = vmatprep.subr.mxu0 %v29
  %422 = vmatpush1.msra.mxu0 %v28
  %423 = vmatprep.subr.mxu0 %v32
  %424 = vmatpush1.msra.mxu0 %v31
  %425 = vmatprep.subr.mxu0 %v35
  %426 = vmatpush1.msra.mxu0 %v34
  %427 = vmatprep.subr.mxu0 %v38
  %428 = vmatpush1.msra.mxu0 %v37
  %429 = vmatprep.subr.mxu0 %v41
  %430 = vmatpush1.msra.mxu0 %v40
  %431 = vmatprep.subr.mxu0 %v44
  %432 = vmatpush1.msra.mxu0 %v43
  %433 = vmatprep.subr.mxu0 %v47
  %434 = vmatpush1.msra.mxu0 %v46
  %435 = vmatprep.subr.mxu0 %v50
  %436 = vmatpush1.msra.mxu0 %v49
  %437 = vmatprep.subr.mxu0 %v53
  %438 = vmatpush1.msra.mxu0 %v52
  %439 = vmatprep.subr.mxu0 %v56
  %440 = vmatpush1.msra.mxu0 %v55
  %441 = vmatprep.subr.mxu0 %v59
  %442 = vmatpush1.msra.mxu0 %v58
  %443 = vmatprep.subr.mxu0 %v62
  %444 = vmatpush1.msra.mxu0 %v61
  %445 = vmatprep.subr.mxu0 %v65
  %446 = vmatpush1.msra.mxu0 %v64
  %447 = vmatprep.subr.mxu0 0.0
  %448 = vmatpush1.msra.mxu0 0.0
  %449 = vmatprep.subr.mxu0 0.0
  %450 = vmatpush1.msra.mxu0 0.0
  %451 = vmatprep.subr.mxu0 0.0
  %452 = vmatpush1.msra.mxu0 0.0
  %453 = vmatprep.subr.mxu0 0.0
  %454 = vmatpush1.msra.mxu0 0.0
  %455 = vmatprep.subr.mxu0 0.0
  %456 = vmatpush1.msra.mxu0 0.0
  %457 = vmatprep.subr.mxu0 0.0
  %458 = vmatpush1.msra.mxu0 0.0
  %459 = vmatprep.subr.mxu0 0.0
  %460 = vmatpush1.msra.mxu0 0.0
  %461 = vmatprep.subr.mxu0 0.0
  %462 = vmatpush1.msra.mxu0 0.0
  %463 = vmatprep.subr.mxu0 0.0
  %464 = vmatpush1.msra.mxu0 0.0
  %465 = vmatprep.subr.mxu0 0.0
  %466 = vmatpush1.msra.mxu0 0.0
  %467 = vmatprep.subr.mxu0 0.0
  %468 = vmatpush1.msra.mxu0 0.0
  %469 = vmatprep.subr.mxu0 0.0
  %470 = vmatpush1.msra.mxu0 0.0
  %471 = vmatprep.subr.mxu0 0.0
  %472 = vmatpush1.msra.mxu0 0.0
  %473 = vmatprep.subr.mxu0 0.0
  %474 = vmatpush1.msra.mxu0 0.0
  %475 = vmatprep.subr.mxu0 0.0
  %476 = vmatpush1.msra.mxu0 0.0
  %477 = vmatprep.subr.mxu0 0.0
  %478 = vmatpush1.msra.mxu0 0.0
  %479 = vmatprep.mubr.f32.mxu0 0.0
  %480 = vmatmul.mubr.f32.gmra.mrb[0].mxu0 %v408
  %v481 = vpop.f32.mrb[0].mxu0
  %v482 = vadd.f32 0.0, %v481
  %v483 = vpop.f32.mrb[0].mxu0
  %v484 = vadd.f32 0.0, %v483
  %485 = vdwg.mxu0
  %486 = vmatprep.subr.mxu0 0.0
  %487 = vmatpush1.msra.mxu0 %v21
  %488 = vmatprep.subr.mxu0 0.0
  %489 = vmatpush1.msra.mxu0 %v24
  %490 = vmatprep.subr.mxu0 0.0
  %491 = vmatpush1.msra.mxu0 %v27
  %492 = vmatprep.subr.mxu0 0.0
  %493 = vmatpush1.msra.mxu0 %v30
  %494 = vmatprep.subr.mxu0 0.0
  %495 = vmatpush1.msra.mxu0 %v33
  %496 = vmatprep.subr.mxu0 0.0
  %497 = vmatpush1.msra.mxu0 %v36
  %498 = vmatprep.subr.mxu0 0.0
  %499 = vmatpush1.msra.mxu0 %v39
  %500 = vmatprep.subr.mxu0 0.0
  %501 = vmatpush1.msra.mxu0 %v42
  %502 = vmatprep.subr.mxu0 0.0
  %503 = vmatpush1.msra.mxu0 %v45
  %504 = vmatprep.subr.mxu0 0.0
  %505 = vmatpush1.msra.mxu0 %v48
  %506 = vmatprep.subr.mxu0 0.0
  %507 = vmatpush1.msra.mxu0 %v51
  %508 = vmatprep.subr.mxu0 0.0
  %509 = vmatpush1.msra.mxu0 %v54
  %510 = vmatprep.subr.mxu0 0.0
  %511 = vmatpush1.msra.mxu0 %v57
  %512 = vmatprep.subr.mxu0 0.0
  %513 = vmatpush1.msra.mxu0 %v60
  %514 = vmatprep.subr.mxu0 0.0
  %515 = vmatpush1.msra.mxu0 %v63
  %516 = vmatprep.subr.mxu0 0.0
  %517 = vmatpush1.msra.mxu0 %v66
  %518 = vmatprep.subr.mxu0 0.0
  %519 = vmatpush1.msra.mxu0 0.0
  %520 = vmatprep.subr.mxu0 0.0
  %521 = vmatpush1.msra.mxu0 0.0
  %522 = vmatprep.subr.mxu0 0.0
  %523 = vmatpush1.msra.mxu0 0.0
  %524 = vmatprep.subr.mxu0 0.0
  %525 = vmatpush1.msra.mxu0 0.0
  %526 = vmatprep.subr.mxu0 0.0
  %527 = vmatpush1.msra.mxu0 0.0
  %528 = vmatprep.subr.mxu0 0.0
  %529 = vmatpush1.msra.mxu0 0.0
  %530 = vmatprep.subr.mxu0 0.0
  %531 = vmatpush1.msra.mxu0 0.0
  %532 = vmatprep.subr.mxu0 0.0
  %533 = vmatpush1.msra.mxu0 0.0
  %534 = vmatprep.subr.mxu0 0.0
  %535 = vmatpush1.msra.mxu0 0.0
  %536 = vmatprep.subr.mxu0 0.0
  %537 = vmatpush1.msra.mxu0 0.0
  %538 = vmatprep.subr.mxu0 0.0
  %539 = vmatpush1.msra.mxu0 0.0
  %540 = vmatprep.subr.mxu0 0.0
  %541 = vmatpush1.msra.mxu0 0.0
  %542 = vmatprep.subr.mxu0 0.0
  %543 = vmatpush1.msra.mxu0 0.0
  %544 = vmatprep.subr.mxu0 0.0
  %545 = vmatpush1.msra.mxu0 0.0
  %546 = vmatprep.subr.mxu0 0.0
  %547 = vmatpush1.msra.mxu0 0.0
  %548 = vmatprep.subr.mxu0 0.0
  %549 = vmatpush1.msra.mxu0 0.0
  %550 = vmatprep.mubr.f32.mxu0 0.0
  %551 = vmatmul.mubr.f32.gmra.mrb[0].mxu0 %v408
  %v552 = vpop.f32.mrb[0].mxu0
  %v553 = vadd.f32 0.0, %v552
  %v554 = vpop.f32.mrb[0].mxu0
  %555 = vdwg.mxu0
  %v556 = vadd.f32 %v412, %v482
  %v557 = vxor.u32 %v556, 2147483648
  %v558 = vmul.f32 %v557, 1.442695
  %v559 = vpow.pop %v558
  %v560 = vadd.f32 %v559, 1.0
  %v561 = vrcp.pop %v560
  %v562 = vmul.f32 1.0, %v561
  %v563 = vadd.f32 %v413, %v484
  %v564 = vxor.u32 %v563, 2147483648
  %v565 = vmul.f32 %v564, 1.442695
  %v566 = vpow.pop %v565
  %v567 = vadd.f32 %v566, 1.0
  %v568 = vrcp.pop %v567
  %v569 = vmul.f32 1.0, %v568
  %v570 = vadd.f32 %v553, %v231
  %v571 = vmul.f32 %v562, %v570
  %v572 = vadd.f32 %v414, %v571
  %v573 = vtanh.pop %v572
  %v574 = vsub.f32 1.0, %v569
  %v575 = vmul.f32 %v574, %v573
  %v576 = vmul.f32 %v569, %v408
  %v577 = vadd.f32 %v575, %v576
  %s578 = scalar_lea.vmem %s3, 16
  %579 = vst [vmem:[%s578] sm:$0xff] %v577
  %s580 = scalar_lea.vmem %s0, 72
  %v581 = vld [vmem:[%s580] sm:$0xff]
  %v582 = vld [vmem:[%s580 + $0x8] sm:$0xff]
  %v583 = vld [vmem:[%s580 + $0x10] sm:$0xff]
  %584 = vmatprep.subr.mxu0 %v20
  %585 = vmatpush1.msra.mxu0 %v19
  %586 = vmatprep.subr.mxu0 %v23
  %587 = vmatpush1.msra.mxu0 %v22
  %588 = vmatprep.subr.mxu0 %v26
  %589 = vmatpush1.msra.mxu0 %v25
  %590 = vmatprep.subr.mxu0 %v29
  %591 = vmatpush1.msra.mxu0 %v28
  %592 = vmatprep.subr.mxu0 %v32
  %593 = vmatpush1.msra.mxu0 %v31
  %594 = vmatprep.subr.mxu0 %v35
  %595 = vmatpush1.msra.mxu0 %v34
  %596 = vmatprep.subr.mxu0 %v38
  %597 = vmatpush1.msra.mxu0 %v37
  %598 = vmatprep.subr.mxu0 %v41
  %599 = vmatpush1.msra.mxu0 %v40
  %600 = vmatprep.subr.mxu0 %v44
  %601 = vmatpush1.msra.mxu0 %v43
  %602 = vmatprep.subr.mxu0 %v47
  %603 = vmatpush1.msra.mxu0 %v46
  %604 = vmatprep.subr.mxu0 %v50
  %605 = vmatpush1.msra.mxu0 %v49
  %606 = vmatprep.subr.mxu0 %v53
  %607 = vmatpush1.msra.mxu0 %v52
  %608 = vmatprep.subr.mxu0 %v56
  %609 = vmatpush1.msra.mxu0 %v55
  %610 = vmatprep.subr.mxu0 %v59
  %611 = vmatpush1.msra.mxu0 %v58
  %612 = vmatprep.subr.mxu0 %v62
  %613 = vmatpush1.msra.mxu0 %v61
  %614 = vmatprep.subr.mxu0 %v65
  %615 = vmatpush1.msra.mxu0 %v64
  %616 = vmatprep.subr.mxu0 0.0
  %617 = vmatpush1.msra.mxu0 0.0
  %618 = vmatprep.subr.mxu0 0.0
  %619 = vmatpush1.msra.mxu0 0.0
  %620 = vmatprep.subr.mxu0 0.0
  %621 = vmatpush1.msra.mxu0 0.0
  %622 = vmatprep.subr.mxu0 0.0
  %623 = vmatpush1.msra.mxu0 0.0
  %624 = vmatprep.subr.mxu0 0.0
  %625 = vmatpush1.msra.mxu0 0.0
  %626 = vmatprep.subr.mxu0 0.0
  %627 = vmatpush1.msra.mxu0 0.0
  %628 = vmatprep.subr.mxu0 0.0
  %629 = vmatpush1.msra.mxu0 0.0
  %630 = vmatprep.subr.mxu0 0.0
  %631 = vmatpush1.msra.mxu0 0.0
  %632 = vmatprep.subr.mxu0 0.0
  %633 = vmatpush1.msra.mxu0 0.0
  %634 = vmatprep.subr.mxu0 0.0
  %635 = vmatpush1.msra.mxu0 0.0
  %636 = vmatprep.subr.mxu0 0.0
  %637 = vmatpush1.msra.mxu0 0.0
  %638 = vmatprep.subr.mxu0 0.0
  %639 = vmatpush1.msra.mxu0 0.0
  %640 = vmatprep.subr.mxu0 0.0
  %641 = vmatpush1.msra.mxu0 0.0
  %642 = vmatprep.subr.mxu0 0.0
  %643 = vmatpush1.msra.mxu0 0.0
  %644 = vmatprep.subr.mxu0 0.0
  %645 = vmatpush1.msra.mxu0 0.0
  %646 = vmatprep.subr.mxu0 0.0
  %647 = vmatpush1.msra.mxu0 0.0
  %648 = vmatprep.mubr.f32.mxu0 0.0
  %649 = vmatmul.mubr.f32.gmra.mrb[0].mxu0 %v577
  %v650 = vpop.f32.mrb[0].mxu0
  %v651 = vadd.f32 0.0, %v650
  %v652 = vpop.f32.mrb[0].mxu0
  %v653 = vadd.f32 0.0, %v652
  %654 = vdwg.mxu0
  %655 = vmatprep.subr.mxu0 0.0
  %656 = vmatpush1.msra.mxu0 %v21
  %657 = vmatprep.subr.mxu0 0.0
  %658 = vmatpush1.msra.mxu0 %v24
  %659 = vmatprep.subr.mxu0 0.0
  %660 = vmatpush1.msra.mxu0 %v27
  %661 = vmatprep.subr.mxu0 0.0
  %662 = vmatpush1.msra.mxu0 %v30
  %663 = vmatprep.subr.mxu0 0.0
  %664 = vmatpush1.msra.mxu0 %v33
  %665 = vmatprep.subr.mxu0 0.0
  %666 = vmatpush1.msra.mxu0 %v36
  %667 = vmatprep.subr.mxu0 0.0
  %668 = vmatpush1.msra.mxu0 %v39
  %669 = vmatprep.subr.mxu0 0.0
  %670 = vmatpush1.msra.mxu0 %v42
  %671 = vmatprep.subr.mxu0 0.0
  %672 = vmatpush1.msra.mxu0 %v45
  %673 = vmatprep.subr.mxu0 0.0
  %674 = vmatpush1.msra.mxu0 %v48
  %675 = vmatprep.subr.mxu0 0.0
  %676 = vmatpush1.msra.mxu0 %v51
  %677 = vmatprep.subr.mxu0 0.0
  %678 = vmatpush1.msra.mxu0 %v54
  %679 = vmatprep.subr.mxu0 0.0
  %680 = vmatpush1.msra.mxu0 %v57
  %681 = vmatprep.subr.mxu0 0.0
  %682 = vmatpush1.msra.mxu0 %v60
  %683 = vmatprep.subr.mxu0 0.0
  %684 = vmatpush1.msra.mxu0 %v63
  %685 = vmatprep.subr.mxu0 0.0
  %686 = vmatpush1.msra.mxu0 %v66
  %687 = vmatprep.subr.mxu0 0.0
  %688 = vmatpush1.msra.mxu0 0.0
  %689 = vmatprep.subr.mxu0 0.0
  %690 = vmatpush1.msra.mxu0 0.0
  %691 = vmatprep.subr.mxu0 0.0
  %692 = vmatpush1.msra.mxu0 0.0
  %693 = vmatprep.subr.mxu0 0.0
  %694 = vmatpush1.msra.mxu0 0.0
  %695 = vmatprep.subr.mxu0 0.0
  %696 = vmatpush1.msra.mxu0 0.0
  %697 = vmatprep.subr.mxu0 0.0
  %698 = vmatpush1.msra.mxu0 0.0
  %699 = vmatprep.subr.mxu0 0.0
  %700 = vmatpush1.msra.mxu0 0.0
  %701 = vmatprep.subr.mxu0 0.0
  %702 = vmatpush1.msra.mxu0 0.0
  %703 = vmatprep.subr.mxu0 0.0
  %704 = vmatpush1.msra.mxu0 0.0
  %705 = vmatprep.subr.mxu0 0.0
  %706 = vmatpush1.msra.mxu0 0.0
  %707 = vmatprep.subr.mxu0 0.0
  %708 = vmatpush1.msra.mxu0 0.0
  %709 = vmatprep.subr.mxu0 0.0
  %710 = vmatpush1.msra.mxu0 0.0
  %711 = vmatprep.subr.mxu0 0.0
  %712 = vmatpush1.msra.mxu0 0.0
  %713 = vmatprep.subr.mxu0 0.0
  %714 = vmatpush1.msra.mxu0 0.0
  %715 = vmatprep.subr.mxu0 0.0
  %716 = vmatpush1.msra.mxu0 0.0
  %717 = vmatprep.subr.mxu0 0.0
  %718 = vmatpush1.msra.mxu0 0.0
  %719 = vmatprep.mubr.f32.mxu0 0.0
  %720 = vmatmul.mubr.f32.gmra.mrb[0].mxu0 %v577
  %v721 = vpop.f32.mrb[0].mxu0
  %v722 = vadd.f32 0.0, %v721
  %v723 = vpop.f32.mrb[0].mxu0
  %724 = vdwg.mxu0
  %v725 = vadd.f32 %v581, %v651
  %v726 = vxor.u32 %v725, 2147483648
  %v727 = vmul.f32 %v726, 1.442695
  %v728 = vpow.pop %v727
  %v729 = vadd.f32 %v728, 1.0
  %v730 = vrcp.pop %v729
  %v731 = vmul.f32 1.0, %v730
  %v732 = vadd.f32 %v582, %v653
  %v733 = vxor.u32 %v732, 2147483648
  %v734 = vmul.f32 %v733, 1.442695
  %v735 = vpow.pop %v734
  %v736 = vadd.f32 %v735, 1.0
  %v737 = vrcp.pop %v736
  %v738 = vmul.f32 1.0, %v737
  %v739 = vadd.f32 %v722, %v231
  %v740 = vmul.f32 %v731, %v739
  %v741 = vadd.f32 %v583, %v740
  %v742 = vtanh.pop %v741
  %v743 = vsub.f32 1.0, %v738
  %v744 = vmul.f32 %v743, %v742
  %v745 = vmul.f32 %v738, %v577
  %v746 = vadd.f32 %v744, %v745
  %s747 = scalar_lea.vmem %s3, 24
  %748 = vst [vmem:[%s747] sm:$0xff] %v746
  %s749 = scalar_lea.vmem %s0, 96
  %v750 = vld [vmem:[%s749] sm:$0xff]
  %v751 = vld [vmem:[%s749 + $0x8] sm:$0xff]
  %v752 = vld [vmem:[%s749 + $0x10] sm:$0xff]
  %753 = vmatprep.subr.mxu0 %v20
  %754 = vmatpush1.msra.mxu0 %v19
  %755 = vmatprep.subr.mxu0 %v23
  %756 = vmatpush1.msra.mxu0 %v22
  %757 = vmatprep.subr.mxu0 %v26
  %758 = vmatpush1.msra.mxu0 %v25
  %759 = vmatprep.subr.mxu0 %v29
  %760 = vmatpush1.msra.mxu0 %v28
  %761 = vmatprep.subr.mxu0 %v32
  %762 = vmatpush1.msra.mxu0 %v31
  %763 = vmatprep.subr.mxu0 %v35
  %764 = vmatpush1.msra.mxu0 %v34
  %765 = vmatprep.subr.mxu0 %v38
  %766 = vmatpush1.msra.mxu0 %v37
  %767 = vmatprep.subr.mxu0 %v41
  %768 = vmatpush1.msra.mxu0 %v40
  %769 = vmatprep.subr.mxu0 %v44
  %770 = vmatpush1.msra.mxu0 %v43
  %771 = vmatprep.subr.mxu0 %v47
  %772 = vmatpush1.msra.mxu0 %v46
  %773 = vmatprep.subr.mxu0 %v50
  %774 = vmatpush1.msra.mxu0 %v49
  %775 = vmatprep.subr.mxu0 %v53
  %776 = vmatpush1.msra.mxu0 %v52
  %777 = vmatprep.subr.mxu0 %v56
  %778 = vmatpush1.msra.mxu0 %v55
  %779 = vmatprep.subr.mxu0 %v59
  %780 = vmatpush1.msra.mxu0 %v58
  %781 = vmatprep.subr.mxu0 %v62
  %782 = vmatpush1.msra.mxu0 %v61
  %783 = vmatprep.subr.mxu0 %v65
  %784 = vmatpush1.msra.mxu0 %v64
  %785 = vmatprep.subr.mxu0 0.0
  %786 = vmatpush1.msra.mxu0 0.0
  %787 = vmatprep.subr.mxu0 0.0
  %788 = vmatpush1.msra.mxu0 0.0
  %789 = vmatprep.subr.mxu0 0.0
  %790 = vmatpush1.msra.mxu0 0.0
  %791 = vmatprep.subr.mxu0 0.0
  %792 = vmatpush1.msra.mxu0 0.0
  %793 = vmatprep.subr.mxu0 0.0
  %794 = vmatpush1.msra.mxu0 0.0
  %795 = vmatprep.subr.mxu0 0.0
  %796 = vmatpush1.msra.mxu0 0.0
  %797 = vmatprep.subr.mxu0 0.0
  %798 = vmatpush1.msra.mxu0 0.0
  %799 = vmatprep.subr.mxu0 0.0
  %800 = vmatpush1.msra.mxu0 0.0
  %801 = vmatprep.subr.mxu0 0.0
  %802 = vmatpush1.msra.mxu0 0.0
  %803 = vmatprep.subr.mxu0 0.0
  %804 = vmatpush1.msra.mxu0 0.0
  %805 = vmatprep.subr.mxu0 0.0
  %806 = vmatpush1.msra.mxu0 0.0
  %807 = vmatprep.subr.mxu0 0.0
  %808 = vmatpush1.msra.mxu0 0.0
  %809 = vmatprep.subr.mxu0 0.0
  %810 = vmatpush1.msra.mxu0 0.0
  %811 = vmatprep.subr.mxu0 0.0
  %812 = vmatpush1.msra.mxu0 0.0
  %813 = vmatprep.subr.mxu0 0.0
  %814 = vmatpush1.msra.mxu0 0.0
  %815 = vmatprep.subr.mxu0 0.0
  %816 = vmatpush1.msra.mxu0 0.0
  %817 = vmatprep.mubr.f32.mxu0 0.0
  %818 = vmatmul.mubr.f32.gmra.mrb[0].mxu0 %v746
  %v819 = vpop.f32.mrb[0].mxu0
  %v820 = vadd.f32 0.0, %v819
  %v821 = vpop.f32.mrb[0].mxu0
  %v822 = vadd.f32 0.0, %v821
  %823 = vdwg.mxu0
  %824 = vmatprep.subr.mxu0 0.0
  %825 = vmatpush1.msra.mxu0 %v21
  %826 = vmatprep.subr.mxu0 0.0
  %827 = vmatpush1.msra.mxu0 %v24
  %828 = vmatprep.subr.mxu0 0.0
  %829 = vmatpush1.msra.mxu0 %v27
  %830 = vmatprep.subr.mxu0 0.0
  %831 = vmatpush1.msra.mxu0 %v30
  %832 = vmatprep.subr.mxu0 0.0
  %833 = vmatpush1.msra.mxu0 %v33
  %834 = vmatprep.subr.mxu0 0.0
  %835 = vmatpush1.msra.mxu0 %v36
  %836 = vmatprep.subr.mxu0 0.0
  %837 = vmatpush1.msra.mxu0 %v39
  %838 = vmatprep.subr.mxu0 0.0
  %839 = vmatpush1.msra.mxu0 %v42
  %840 = vmatprep.subr.mxu0 0.0
  %841 = vmatpush1.msra.mxu0 %v45
  %842 = vmatprep.subr.mxu0 0.0
  %843 = vmatpush1.msra.mxu0 %v48
  %844 = vmatprep.subr.mxu0 0.0
  %845 = vmatpush1.msra.mxu0 %v51
  %846 = vmatprep.subr.mxu0 0.0
  %847 = vmatpush1.msra.mxu0 %v54
  %848 = vmatprep.subr.mxu0 0.0
  %849 = vmatpush1.msra.mxu0 %v57
  %850 = vmatprep.subr.mxu0 0.0
  %851 = vmatpush1.msra.mxu0 %v60
  %852 = vmatprep.subr.mxu0 0.0
  %853 = vmatpush1.msra.mxu0 %v63
  %854 = vmatprep.subr.mxu0 0.0
  %855 = vmatpush1.msra.mxu0 %v66
  %856 = vmatprep.subr.mxu0 0.0
  %857 = vmatpush1.msra.mxu0 0.0
  %858 = vmatprep.subr.mxu0 0.0
  %859 = vmatpush1.msra.mxu0 0.0
  %860 = vmatprep.subr.mxu0 0.0
  %861 = vmatpush1.msra.mxu0 0.0
  %862 = vmatprep.subr.mxu0 0.0
  %863 = vmatpush1.msra.mxu0 0.0
  %864 = vmatprep.subr.mxu0 0.0
  %865 = vmatpush1.msra.mxu0 0.0
  %866 = vmatprep.subr.mxu0 0.0
  %867 = vmatpush1.msra.mxu0 0.0
  %868 = vmatprep.subr.mxu0 0.0
  %869 = vmatpush1.msra.mxu0 0.0
  %870 = vmatprep.subr.mxu0 0.0
  %871 = vmatpush1.msra.mxu0 0.0
  %872 = vmatprep.subr.mxu0 0.0
  %873 = vmatpush1.msra.mxu0 0.0
  %874 = vmatprep.subr.mxu0 0.0
  %875 = vmatpush1.msra.mxu0 0.0
  %876 = vmatprep.subr.mxu0 0.0
  %877 = vmatpush1.msra.mxu0 0.0
  %878 = vmatprep.subr.mxu0 0.0
  %879 = vmatpush1.msra.mxu0 0.0
  %880 = vmatprep.subr.mxu0 0.0
  %881 = vmatpush1.msra.mxu0 0.0
  %882 = vmatprep.subr.mxu0 0.0
  %883 = vmatpush1.msra.mxu0 0.0
  %884 = vmatprep.subr.mxu0 0.0
  %885 = vmatpush1.msra.mxu0 0.0
  %886 = vmatprep.subr.mxu0 0.0
  %887 = vmatpush1.msra.mxu0 0.0
  %888 = vmatprep.mubr.f32.mxu0 0.0
  %889 = vmatmul.mubr.f32.gmra.mrb[0].mxu0 %v746
  %v890 = vpop.f32.mrb[0].mxu0
  %v891 = vadd.f32 0.0, %v890
  %v892 = vpop.f32.mrb[0].mxu0
  %893 = vdwg.mxu0
  %v894 = vadd.f32 %v750, %v820
  %v895 = vxor.u32 %v894, 2147483648
  %v896 = vmul.f32 %v895, 1.442695
  %v897 = vpow.pop %v896
  %v898 = vadd.f32 %v897, 1.0
  %v899 = vrcp.pop %v898
  %v900 = vmul.f32 1.0, %v899
  %v901 = vadd.f32 %v751, %v822
  %v902 = vxor.u32 %v901, 2147483648
  %v903 = vmul.f32 %v902, 1.442695
  %v904 = vpow.pop %v903
  %v905 = vadd.f32 %v904, 1.0
  %v906 = vrcp.pop %v905
  %v907 = vmul.f32 1.0, %v906
  %v908 = vadd.f32 %v891, %v231
  %v909 = vmul.f32 %v900, %v908
  %v910 = vadd.f32 %v752, %v909
  %v911 = vtanh.pop %v910
  %v912 = vsub.f32 1.0, %v907
  %v913 = vmul.f32 %v912, %v911
  %v914 = vmul.f32 %v907, %v746
  %v915 = vadd.f32 %v913, %v914
  %s916 = scalar_lea.vmem %s3, 32
  %917 = vst [vmem:[%s916] sm:$0xff] %v915
  %s918 = scalar_lea.vmem %s0, 120
  %v919 = vld [vmem:[%s918] sm:$0xff]
  %v920 = vld [vmem:[%s918 + $0x8] sm:$0xff]
  %v921 = vld [vmem:[%s918 + $0x10] sm:$0xff]
  %922 = vmatprep.subr.mxu0 %v20
  %923 = vmatpush1.msra.mxu0 %v19
  %924 = vmatprep.subr.mxu0 %v23
  %925 = vmatpush1.msra.mxu0 %v22
  %926 = vmatprep.subr.mxu0 %v26
  %927 = vmatpush1.msra.mxu0 %v25
  %928 = vmatprep.subr.mxu0 %v29
  %929 = vmatpush1.msra.mxu0 %v28
  %930 = vmatprep.subr.mxu0 %v32
  %931 = vmatpush1.msra.mxu0 %v31
  %932 = vmatprep.subr.mxu0 %v35
  %933 = vmatpush1.msra.mxu0 %v34
  %934 = vmatprep.subr.mxu0 %v38
  %935 = vmatpush1.msra.mxu0 %v37
  %936 = vmatprep.subr.mxu0 %v41
  %937 = vmatpush1.msra.mxu0 %v40
  %938 = vmatprep.subr.mxu0 %v44
  %939 = vmatpush1.msra.mxu0 %v43
  %940 = vmatprep.subr.mxu0 %v47
  %941 = vmatpush1.msra.mxu0 %v46
  %942 = vmatprep.subr.mxu0 %v50
  %943 = vmatpush1.msra.mxu0 %v49
  %944 = vmatprep.subr.mxu0 %v53
  %945 = vmatpush1.msra.mxu0 %v52
  %946 = vmatprep.subr.mxu0 %v56
  %947 = vmatpush1.msra.mxu0 %v55
  %948 = vmatprep.subr.mxu0 %v59
  %949 = vmatpush1.msra.mxu0 %v58
  %950 = vmatprep.subr.mxu0 %v62
  %951 = vmatpush1.msra.mxu0 %v61
  %952 = vmatprep.subr.mxu0 %v65
  %953 = vmatpush1.msra.mxu0 %v64
  %954 = vmatprep.subr.mxu0 0.0
  %955 = vmatpush1.msra.mxu0 0.0
  %956 = vmatprep.subr.mxu0 0.0
  %957 = vmatpush1.msra.mxu0 0.0
  %958 = vmatprep.subr.mxu0 0.0
  %959 = vmatpush1.msra.mxu0 0.0
  %960 = vmatprep.subr.mxu0 0.0
  %961 = vmatpush1.msra.mxu0 0.0
  %962 = vmatprep.subr.mxu0 0.0
  %963 = vmatpush1.msra.mxu0 0.0
  %964 = vmatprep.subr.mxu0 0.0
  %965 = vmatpush1.msra.mxu0 0.0
  %966 = vmatprep.subr.mxu0 0.0
  %967 = vmatpush1.msra.mxu0 0.0
  %968 = vmatprep.subr.mxu0 0.0
  %969 = vmatpush1.msra.mxu0 0.0
  %970 = vmatprep.subr.mxu0 0.0
  %971 = vmatpush1.msra.mxu0 0.0
  %972 = vmatprep.subr.mxu0 0.0
  %973 = vmatpush1.msra.mxu0 0.0
  %974 = vmatprep.subr.mxu0 0.0
  %975 = vmatpush1.msra.mxu0 0.0
  %976 = vmatprep.subr.mxu0 0.0
  %977 = vmatpush1.msra.mxu0 0.0
  %978 = vmatprep.subr.mxu0 0.0
  %979 = vmatpush1.msra.mxu0 0.0
  %980 = vmatprep.subr.mxu0 0.0
  %981 = vmatpush1.msra.mxu0 0.0
  %982 = vmatprep.subr.mxu0 0.0
  %983 = vmatpush1.msra.mxu0 0.0
  %984 = vmatprep.subr.mxu0 0.0
  %985 = vmatpush1.msra.mxu0 0.0
  %986 = vmatprep.mubr.f32.mxu0 0.0
  %987 = vmatmul.mubr.f32.gmra.mrb[0].mxu0 %v915
  %v988 = vpop.f32.mrb[0].mxu0
  %v989 = vadd.f32 0.0, %v988
  %v990 = vpop.f32.mrb[0].mxu0
  %v991 = vadd.f32 0.0, %v990
  %992 = vdwg.mxu0
  %993 = vmatprep.subr.mxu0 0.0
  %994 = vmatpush1.msra.mxu0 %v21
  %995 = vmatprep.subr.mxu0 0.0
  %996 = vmatpush1.msra.mxu0 %v24
  %997 = vmatprep.subr.mxu0 0.0
  %998 = vmatpush1.msra.mxu0 %v27
  %999 = vmatprep.subr.mxu0 0.0
  %1000 = vmatpush1.msra.mxu0 %v30
  %1001 = vmatprep.subr.mxu0 0.0
  %1002 = vmatpush1.msra.mxu0 %v33
  %1003 = vmatprep.subr.mxu0 0.0
  %1004 = vmatpush1.msra.mxu0 %v36
  %1005 = vmatprep.subr.mxu0 0.0
  %1006 = vmatpush1.msra.mxu0 %v39
  %1007 = vmatprep.subr.mxu0 0.0
  %1008 = vmatpush1.msra.mxu0 %v42
  %1009 = vmatprep.subr.mxu0 0.0
  %1010 = vmatpush1.msra.mxu0 %v45
  %1011 = vmatprep.subr.mxu0 0.0
  %1012 = vmatpush1.msra.mxu0 %v48
  %1013 = vmatprep.subr.mxu0 0.0
  %1014 = vmatpush1.msra.mxu0 %v51
  %1015 = vmatprep.subr.mxu0 0.0
  %1016 = vmatpush1.msra.mxu0 %v54
  %1017 = vmatprep.subr.mxu0 0.0
  %1018 = vmatpush1.msra.mxu0 %v57
  %1019 = vmatprep.subr.mxu0 0.0
  %1020 = vmatpush1.msra.mxu0 %v60
  %1021 = vmatprep.subr.mxu0 0.0
  %1022 = vmatpush1.msra.mxu0 %v63
  %1023 = vmatprep.subr.mxu0 0.0
  %1024 = vmatpush1.msra.mxu0 %v66
  %1025 = vmatprep.subr.mxu0 0.0
  %1026 = vmatpush1.msra.mxu0 0.0
  %1027 = vmatprep.subr.mxu0 0.0
  %1028 = vmatpush1.msra.mxu0 0.0
  %1029 = vmatprep.subr.mxu0 0.0
  %1030 = vmatpush1.msra.mxu0 0.0
  %1031 = vmatprep.subr.mxu0 0.0
  %1032 = vmatpush1.msra.mxu0 0.0
  %1033 = vmatprep.subr.mxu0 0.0
  %1034 = vmatpush1.msra.mxu0 0.0
  %1035 = vmatprep.subr.mxu0 0.0
  %1036 = vmatpush1.msra.mxu0 0.0
  %1037 = vmatprep.subr.mxu0 0.0
  %1038 = vmatpush1.msra.mxu0 0.0
  %1039 = vmatprep.subr.mxu0 0.0
  %1040 = vmatpush1.msra.mxu0 0.0
  %1041 = vmatprep.subr.mxu0 0.0
  %1042 = vmatpush1.msra.mxu0 0.0
  %1043 = vmatprep.subr.mxu0 0.0
  %1044 = vmatpush1.msra.mxu0 0.0
  %1045 = vmatprep.subr.mxu0 0.0
  %1046 = vmatpush1.msra.mxu0 0.0
  %1047 = vmatprep.subr.mxu0 0.0
  %1048 = vmatpush1.msra.mxu0 0.0
  %1049 = vmatprep.subr.mxu0 0.0
  %1050 = vmatpush1.msra.mxu0 0.0
  %1051 = vmatprep.subr.mxu0 0.0
  %1052 = vmatpush1.msra.mxu0 0.0
  %1053 = vmatprep.subr.mxu0 0.0
  %1054 = vmatpush1.msra.mxu0 0.0
  %1055 = vmatprep.subr.mxu0 0.0
  %1056 = vmatpush1.msra.mxu0 0.0
  %1057 = vmatprep.mubr.f32.mxu0 0.0
  %1058 = vmatmul.mubr.f32.gmra.mrb[0].mxu0 %v915
  %v1059 = vpop.f32.mrb[0].mxu0
  %v1060 = vadd.f32 0.0, %v1059
  %v1061 = vpop.f32.mrb[0].mxu0
  %1062 = vdwg.mxu0
  %v1063 = vadd.f32 %v919, %v989
  %v1064 = vxor.u32 %v1063, 2147483648
  %v1065 = vmul.f32 %v1064, 1.442695
  %v1066 = vpow.pop %v1065
  %v1067 = vadd.f32 %v1066, 1.0
  %v1068 = vrcp.pop %v1067
  %v1069 = vmul.f32 1.0, %v1068
  %v1070 = vadd.f32 %v920, %v991
  %v1071 = vxor.u32 %v1070, 2147483648
  %v1072 = vmul.f32 %v1071, 1.442695
  %v1073 = vpow.pop %v1072
  %v1074 = vadd.f32 %v1073, 1.0
  %v1075 = vrcp.pop %v1074
  %v1076 = vmul.f32 1.0, %v1075
  %v1077 = vadd.f32 %v1060, %v231
  %v1078 = vmul.f32 %v1069, %v1077
  %v1079 = vadd.f32 %v921, %v1078
  %v1080 = vtanh.pop %v1079
  %v1081 = vsub.f32 1.0, %v1076
  %v1082 = vmul.f32 %v1081, %v1080
  %v1083 = vmul.f32 %v1076, %v915
  %v1084 = vadd.f32 %v1082, %v1083
  %s1085 = scalar_lea.vmem %s3, 40
  %1086 = vst [vmem:[%s1085] sm:$0xff] %v1084
  %s1087 = scalar_lea.vmem %s0, 144
  %v1088 = vld [vmem:[%s1087] sm:$0xff]
  %v1089 = vld [vmem:[%s1087 + $0x8] sm:$0xff]
  %v1090 = vld [vmem:[%s1087 + $0x10] sm:$0xff]
  %1091 = vmatprep.subr.mxu0 %v20
  %1092 = vmatpush1.msra.mxu0 %v19
  %1093 = vmatprep.subr.mxu0 %v23
  %1094 = vmatpush1.msra.mxu0 %v22
  %1095 = vmatprep.subr.mxu0 %v26
  %1096 = vmatpush1.msra.mxu0 %v25
  %1097 = vmatprep.subr.mxu0 %v29
  %1098 = vmatpush1.msra.mxu0 %v28
  %1099 = vmatprep.subr.mxu0 %v32
  %1100 = vmatpush1.msra.mxu0 %v31
  %1101 = vmatprep.subr.mxu0 %v35
  %1102 = vmatpush1.msra.mxu0 %v34
  %1103 = vmatprep.subr.mxu0 %v38
  %1104 = vmatpush1.msra.mxu0 %v37
  %1105 = vmatprep.subr.mxu0 %v41
  %1106 = vmatpush1.msra.mxu0 %v40
  %1107 = vmatprep.subr.mxu0 %v44
  %1108 = vmatpush1.msra.mxu0 %v43
  %1109 = vmatprep.subr.mxu0 %v47
  %1110 = vmatpush1.msra.mxu0 %v46
  %1111 = vmatprep.subr.mxu0 %v50
  %1112 = vmatpush1.msra.mxu0 %v49
  %1113 = vmatprep.subr.mxu0 %v53
  %1114 = vmatpush1.msra.mxu0 %v52
  %1115 = vmatprep.subr.mxu0 %v56
  %1116 = vmatpush1.msra.mxu0 %v55
  %1117 = vmatprep.subr.mxu0 %v59
  %1118 = vmatpush1.msra.mxu0 %v58
  %1119 = vmatprep.subr.mxu0 %v62
  %1120 = vmatpush1.msra.mxu0 %v61
  %1121 = vmatprep.subr.mxu0 %v65
  %1122 = vmatpush1.msra.mxu0 %v64
  %1123 = vmatprep.subr.mxu0 0.0
  %1124 = vmatpush1.msra.mxu0 0.0
  %1125 = vmatprep.subr.mxu0 0.0
  %1126 = vmatpush1.msra.mxu0 0.0
  %1127 = vmatprep.subr.mxu0 0.0
  %1128 = vmatpush1.msra.mxu0 0.0
  %1129 = vmatprep.subr.mxu0 0.0
  %1130 = vmatpush1.msra.mxu0 0.0
  %1131 = vmatprep.subr.mxu0 0.0
  %1132 = vmatpush1.msra.mxu0 0.0
  %1133 = vmatprep.subr.mxu0 0.0
  %1134 = vmatpush1.msra.mxu0 0.0
  %1135 = vmatprep.subr.mxu0 0.0
  %1136 = vmatpush1.msra.mxu0 0.0
  %1137 = vmatprep.subr.mxu0 0.0
  %1138 = vmatpush1.msra.mxu0 0.0
  %1139 = vmatprep.subr.mxu0 0.0
  %1140 = vmatpush1.msra.mxu0 0.0
  %1141 = vmatprep.subr.mxu0 0.0
  %1142 = vmatpush1.msra.mxu0 0.0
  %1143 = vmatprep.subr.mxu0 0.0
  %1144 = vmatpush1.msra.mxu0 0.0
  %1145 = vmatprep.subr.mxu0 0.0
  %1146 = vmatpush1.msra.mxu0 0.0
  %1147 = vmatprep.subr.mxu0 0.0
  %1148 = vmatpush1.msra.mxu0 0.0
  %1149 = vmatprep.subr.mxu0 0.0
  %1150 = vmatpush1.msra.mxu0 0.0
  %1151 = vmatprep.subr.mxu0 0.0
  %1152 = vmatpush1.msra.mxu0 0.0
  %1153 = vmatprep.subr.mxu0 0.0
  %1154 = vmatpush1.msra.mxu0 0.0
  %1155 = vmatprep.mubr.f32.mxu0 0.0
  %1156 = vmatmul.mubr.f32.gmra.mrb[0].mxu0 %v1084
  %v1157 = vpop.f32.mrb[0].mxu0
  %v1158 = vadd.f32 0.0, %v1157
  %v1159 = vpop.f32.mrb[0].mxu0
  %v1160 = vadd.f32 0.0, %v1159
  %1161 = vdwg.mxu0
  %1162 = vmatprep.subr.mxu0 0.0
  %1163 = vmatpush1.msra.mxu0 %v21
  %1164 = vmatprep.subr.mxu0 0.0
  %1165 = vmatpush1.msra.mxu0 %v24
  %1166 = vmatprep.subr.mxu0 0.0
  %1167 = vmatpush1.msra.mxu0 %v27
  %1168 = vmatprep.subr.mxu0 0.0
  %1169 = vmatpush1.msra.mxu0 %v30
  %1170 = vmatprep.subr.mxu0 0.0
  %1171 = vmatpush1.msra.mxu0 %v33
  %1172 = vmatprep.subr.mxu0 0.0
  %1173 = vmatpush1.msra.mxu0 %v36
  %1174 = vmatprep.subr.mxu0 0.0
  %1175 = vmatpush1.msra.mxu0 %v39
  %1176 = vmatprep.subr.mxu0 0.0
  %1177 = vmatpush1.msra.mxu0 %v42
  %1178 = vmatprep.subr.mxu0 0.0
  %1179 = vmatpush1.msra.mxu0 %v45
  %1180 = vmatprep.subr.mxu0 0.0
  %1181 = vmatpush1.msra.mxu0 %v48
  %1182 = vmatprep.subr.mxu0 0.0
  %1183 = vmatpush1.msra.mxu0 %v51
  %1184 = vmatprep.subr.mxu0 0.0
  %1185 = vmatpush1.msra.mxu0 %v54
  %1186 = vmatprep.subr.mxu0 0.0
  %1187 = vmatpush1.msra.mxu0 %v57
  %1188 = vmatprep.subr.mxu0 0.0
  %1189 = vmatpush1.msra.mxu0 %v60
  %1190 = vmatprep.subr.mxu0 0.0
  %1191 = vmatpush1.msra.mxu0 %v63
  %1192 = vmatprep.subr.mxu0 0.0
  %1193 = vmatpush1.msra.mxu0 %v66
  %1194 = vmatprep.subr.mxu0 0.0
  %1195 = vmatpush1.msra.mxu0 0.0
  %1196 = vmatprep.subr.mxu0 0.0
  %1197 = vmatpush1.msra.mxu0 0.0
  %1198 = vmatprep.subr.mxu0 0.0
  %1199 = vmatpush1.msra.mxu0 0.0
  %1200 = vmatprep.subr.mxu0 0.0
  %1201 = vmatpush1.msra.mxu0 0.0
  %1202 = vmatprep.subr.mxu0 0.0
  %1203 = vmatpush1.msra.mxu0 0.0
  %1204 = vmatprep.subr.mxu0 0.0
  %1205 = vmatpush1.msra.mxu0 0.0
  %1206 = vmatprep.subr.mxu0 0.0
  %1207 = vmatpush1.msra.mxu0 0.0
  %1208 = vmatprep.subr.mxu0 0.0
  %1209 = vmatpush1.msra.mxu0 0.0
  %1210 = vmatprep.subr.mxu0 0.0
  %1211 = vmatpush1.msra.mxu0 0.0
  %1212 = vmatprep.subr.mxu0 0.0
  %1213 = vmatpush1.msra.mxu0 0.0
  %1214 = vmatprep.subr.mxu0 0.0
  %1215 = vmatpush1.msra.mxu0 0.0
  %1216 = vmatprep.subr.mxu0 0.0
  %1217 = vmatpush1.msra.mxu0 0.0
  %1218 = vmatprep.subr.mxu0 0.0
  %1219 = vmatpush1.msra.mxu0 0.0
  %1220 = vmatprep.subr.mxu0 0.0
  %1221 = vmatpush1.msra.mxu0 0.0
  %1222 = vmatprep.subr.mxu0 0.0
  %1223 = vmatpush1.msra.mxu0 0.0
  %1224 = vmatprep.subr.mxu0 0.0
  %1225 = vmatpush1.msra.mxu0 0.0
  %1226 = vmatprep.mubr.f32.mxu0 0.0
  %1227 = vmatmul.mubr.f32.gmra.mrb[0].mxu0 %v1084
  %v1228 = vpop.f32.mrb[0].mxu0
  %v1229 = vadd.f32 0.0, %v1228
  %v1230 = vpop.f32.mrb[0].mxu0
  %1231 = vdwg.mxu0
  %v1232 = vadd.f32 %v1088, %v1158
  %v1233 = vxor.u32 %v1232, 2147483648
  %v1234 = vmul.f32 %v1233, 1.442695
  %v1235 = vpow.pop %v1234
  %v1236 = vadd.f32 %v1235, 1.0
  %v1237 = vrcp.pop %v1236
  %v1238 = vmul.f32 1.0, %v1237
  %v1239 = vadd.f32 %v1089, %v1160
  %v1240 = vxor.u32 %v1239, 2147483648
  %v1241 = vmul.f32 %v1240, 1.442695
  %v1242 = vpow.pop %v1241
  %v1243 = vadd.f32 %v1242, 1.0
  %v1244 = vrcp.pop %v1243
  %v1245 = vmul.f32 1.0, %v1244
  %v1246 = vadd.f32 %v1229, %v231
  %v1247 = vmul.f32 %v1238, %v1246
  %v1248 = vadd.f32 %v1090, %v1247
  %v1249 = vtanh.pop %v1248
  %v1250 = vsub.f32 1.0, %v1245
  %v1251 = vmul.f32 %v1250, %v1249
  %v1252 = vmul.f32 %v1245, %v1084
  %v1253 = vadd.f32 %v1251, %v1252
  %s1254 = scalar_lea.vmem %s3, 48
  %1255 = vst [vmem:[%s1254] sm:$0xff] %v1253
  %s1256 = scalar_lea.vmem %s0, 168
  %v1257 = vld [vmem:[%s1256] sm:$0xff]
  %v1258 = vld [vmem:[%s1256 + $0x8] sm:$0xff]
  %v1259 = vld [vmem:[%s1256 + $0x10] sm:$0xff]
  %1260 = vmatprep.subr.mxu0 %v20
  %1261 = vmatpush1.msra.mxu0 %v19
  %1262 = vmatprep.subr.mxu0 %v23
  %1263 = vmatpush1.msra.mxu0 %v22
  %1264 = vmatprep.subr.mxu0 %v26
  %1265 = vmatpush1.msra.mxu0 %v25
  %1266 = vmatprep.subr.mxu0 %v29
  %1267 = vmatpush1.msra.mxu0 %v28
  %1268 = vmatprep.subr.mxu0 %v32
  %1269 = vmatpush1.msra.mxu0 %v31
  %1270 = vmatprep.subr.mxu0 %v35
  %1271 = vmatpush1.msra.mxu0 %v34
  %1272 = vmatprep.subr.mxu0 %v38
  %1273 = vmatpush1.msra.mxu0 %v37
  %1274 = vmatprep.subr.mxu0 %v41
  %1275 = vmatpush1.msra.mxu0 %v40
  %1276 = vmatprep.subr.mxu0 %v44
  %1277 = vmatpush1.msra.mxu0 %v43
  %1278 = vmatprep.subr.mxu0 %v47
  %1279 = vmatpush1.msra.mxu0 %v46
  %1280 = vmatprep.subr.mxu0 %v50
  %1281 = vmatpush1.msra.mxu0 %v49
  %1282 = vmatprep.subr.mxu0 %v53
  %1283 = vmatpush1.msra.mxu0 %v52
  %1284 = vmatprep.subr.mxu0 %v56
  %1285 = vmatpush1.msra.mxu0 %v55
  %1286 = vmatprep.subr.mxu0 %v59
  %1287 = vmatpush1.msra.mxu0 %v58
  %1288 = vmatprep.subr.mxu0 %v62
  %1289 = vmatpush1.msra.mxu0 %v61
  %1290 = vmatprep.subr.mxu0 %v65
  %1291 = vmatpush1.msra.mxu0 %v64
  %1292 = vmatprep.subr.mxu0 0.0
  %1293 = vmatpush1.msra.mxu0 0.0
  %1294 = vmatprep.subr.mxu0 0.0
  %1295 = vmatpush1.msra.mxu0 0.0
  %1296 = vmatprep.subr.mxu0 0.0
  %1297 = vmatpush1.msra.mxu0 0.0
  %1298 = vmatprep.subr.mxu0 0.0
  %1299 = vmatpush1.msra.mxu0 0.0
  %1300 = vmatprep.subr.mxu0 0.0
  %1301 = vmatpush1.msra.mxu0 0.0
  %1302 = vmatprep.subr.mxu0 0.0
  %1303 = vmatpush1.msra.mxu0 0.0
  %1304 = vmatprep.subr.mxu0 0.0
  %1305 = vmatpush1.msra.mxu0 0.0
  %1306 = vmatprep.subr.mxu0 0.0
  %1307 = vmatpush1.msra.mxu0 0.0
  %1308 = vmatprep.subr.mxu0 0.0
  %1309 = vmatpush1.msra.mxu0 0.0
  %1310 = vmatprep.subr.mxu0 0.0
  %1311 = vmatpush1.msra.mxu0 0.0
  %1312 = vmatprep.subr.mxu0 0.0
  %1313 = vmatpush1.msra.mxu0 0.0
  %1314 = vmatprep.subr.mxu0 0.0
  %1315 = vmatpush1.msra.mxu0 0.0
  %1316 = vmatprep.subr.mxu0 0.0
  %1317 = vmatpush1.msra.mxu0 0.0
  %1318 = vmatprep.subr.mxu0 0.0
  %1319 = vmatpush1.msra.mxu0 0.0
  %1320 = vmatprep.subr.mxu0 0.0
  %1321 = vmatpush1.msra.mxu0 0.0
  %1322 = vmatprep.subr.mxu0 0.0
  %1323 = vmatpush1.msra.mxu0 0.0
  %1324 = vmatprep.mubr.f32.mxu0 0.0
  %1325 = vmatmul.mubr.f32.gmra.mrb[0].mxu0 %v1253
  %v1326 = vpop.f32.mrb[0].mxu0
  %v1327 = vadd.f32 0.0, %v1326
  %v1328 = vpop.f32.mrb[0].mxu0
  %v1329 = vadd.f32 0.0, %v1328
  %1330 = vdwg.mxu0
  %1331 = vmatprep.subr.mxu0 0.0
  %1332 = vmatpush1.msra.mxu0 %v21
  %1333 = vmatprep.subr.mxu0 0.0
  %1334 = vmatpush1.msra.mxu0 %v24
  %1335 = vmatprep.subr.mxu0 0.0
  %1336 = vmatpush1.msra.mxu0 %v27
  %1337 = vmatprep.subr.mxu0 0.0
  %1338 = vmatpush1.msra.mxu0 %v30
  %1339 = vmatprep.subr.mxu0 0.0
  %1340 = vmatpush1.msra.mxu0 %v33
  %1341 = vmatprep.subr.mxu0 0.0
  %1342 = vmatpush1.msra.mxu0 %v36
  %1343 = vmatprep.subr.mxu0 0.0
  %1344 = vmatpush1.msra.mxu0 %v39
  %1345 = vmatprep.subr.mxu0 0.0
  %1346 = vmatpush1.msra.mxu0 %v42
  %1347 = vmatprep.subr.mxu0 0.0
  %1348 = vmatpush1.msra.mxu0 %v45
  %1349 = vmatprep.subr.mxu0 0.0
  %1350 = vmatpush1.msra.mxu0 %v48
  %1351 = vmatprep.subr.mxu0 0.0
  %1352 = vmatpush1.msra.mxu0 %v51
  %1353 = vmatprep.subr.mxu0 0.0
  %1354 = vmatpush1.msra.mxu0 %v54
  %1355 = vmatprep.subr.mxu0 0.0
  %1356 = vmatpush1.msra.mxu0 %v57
  %1357 = vmatprep.subr.mxu0 0.0
  %1358 = vmatpush1.msra.mxu0 %v60
  %1359 = vmatprep.subr.mxu0 0.0
  %1360 = vmatpush1.msra.mxu0 %v63
  %1361 = vmatprep.subr.mxu0 0.0
  %1362 = vmatpush1.msra.mxu0 %v66
  %1363 = vmatprep.subr.mxu0 0.0
  %1364 = vmatpush1.msra.mxu0 0.0
  %1365 = vmatprep.subr.mxu0 0.0
  %1366 = vmatpush1.msra.mxu0 0.0
  %1367 = vmatprep.subr.mxu0 0.0
  %1368 = vmatpush1.msra.mxu0 0.0
  %1369 = vmatprep.subr.mxu0 0.0
  %1370 = vmatpush1.msra.mxu0 0.0
  %1371 = vmatprep.subr.mxu0 0.0
  %1372 = vmatpush1.msra.mxu0 0.0
  %1373 = vmatprep.subr.mxu0 0.0
  %1374 = vmatpush1.msra.mxu0 0.0
  %1375 = vmatprep.subr.mxu0 0.0
  %1376 = vmatpush1.msra.mxu0 0.0
  %1377 = vmatprep.subr.mxu0 0.0
  %1378 = vmatpush1.msra.mxu0 0.0
  %1379 = vmatprep.subr.mxu0 0.0
  %1380 = vmatpush1.msra.mxu0 0.0
  %1381 = vmatprep.subr.mxu0 0.0
  %1382 = vmatpush1.msra.mxu0 0.0
  %1383 = vmatprep.subr.mxu0 0.0
  %1384 = vmatpush1.msra.mxu0 0.0
  %1385 = vmatprep.subr.mxu0 0.0
  %1386 = vmatpush1.msra.mxu0 0.0
  %1387 = vmatprep.subr.mxu0 0.0
  %1388 = vmatpush1.msra.mxu0 0.0
  %1389 = vmatprep.subr.mxu0 0.0
  %1390 = vmatpush1.msra.mxu0 0.0
  %1391 = vmatprep.subr.mxu0 0.0
  %1392 = vmatpush1.msra.mxu0 0.0
  %1393 = vmatprep.subr.mxu0 0.0
  %1394 = vmatpush1.msra.mxu0 0.0
  %1395 = vmatprep.mubr.f32.mxu0 0.0
  %1396 = vmatmul.mubr.f32.gmra.mrb[0].mxu0 %v1253
  %v1397 = vpop.f32.mrb[0].mxu0
  %v1398 = vadd.f32 0.0, %v1397
  %v1399 = vpop.f32.mrb[0].mxu0
  %1400 = vdwg.mxu0
  %v1401 = vadd.f32 %v1257, %v1327
  %v1402 = vxor.u32 %v1401, 2147483648
  %v1403 = vmul.f32 %v1402, 1.442695
  %v1404 = vpow.pop %v1403
  %v1405 = vadd.f32 %v1404, 1.0
  %v1406 = vrcp.pop %v1405
  %v1407 = vmul.f32 1.0, %v1406
  %v1408 = vadd.f32 %v1258, %v1329
  %v1409 = vxor.u32 %v1408, 2147483648
  %v1410 = vmul.f32 %v1409, 1.442695
  %v1411 = vpow.pop %v1410
  %v1412 = vadd.f32 %v1411, 1.0
  %v1413 = vrcp.pop %v1412
  %v1414 = vmul.f32 1.0, %v1413
  %v1415 = vadd.f32 %v1398, %v231
  %v1416 = vmul.f32 %v1407, %v1415
  %v1417 = vadd.f32 %v1259, %v1416
  %v1418 = vtanh.pop %v1417
  %v1419 = vsub.f32 1.0, %v1414
  %v1420 = vmul.f32 %v1419, %v1418
  %v1421 = vmul.f32 %v1414, %v1253
  %v1422 = vadd.f32 %v1420, %v1421
  %s1423 = scalar_lea.vmem %s3, 56
  %1424 = vst [vmem:[%s1423] sm:$0xff] %v1422
  %1425 = vst [vmem:[#allocation2] sm:$0xff] %v1422
  // Predicated region
  $region18: #{gru_model_forward.7} parent=0 // pred_check
    _
  $region19: #{gru_model_forward.7} parent=0 // pred_check_branch
    %1427 = sbr.rel (0) target = $region21
  $region20: #{gru_model_forward.7} parent=0 // pred_region
    _
  $region21: #{gru_model_forward.7} parent=0 // pred_fallthru
    _
  // Predicated region
  $region22: #{gru_model_forward.7} parent=0 // pred_check
    _
  $region23: #{gru_model_forward.7} parent=0 // pred_check_branch
    %1429 = sbr.rel (0) target = $region25
  $region24: #{gru_model_forward.7} parent=0 // pred_region
    _
  $region25: #{gru_model_forward.7} parent=0 // pred_fallthru
    _

</llo_original>
